<compile_context>
chip_gen: v7x
topology: tpu7x:2x2x1
jax: 0.10.0
libtpu: 0.0.40
codegen_flags: <defaults>
</compile_context>

<pallas_src>
import math
import numpy as np
import jax
import jax.numpy as jnp
from jax import lax
from jax.experimental import pallas as pl
from jax.experimental.pallas import tpu as pltpu

# ----- small, module-consistent hyper-parameters -----
IMG_SIZE = 16
PATCH_SIZE = 4
NUM_PATCHES = (IMG_SIZE // PATCH_SIZE) ** 2        # 16
N_TOKENS = NUM_PATCHES + 1                         # cls token + patches = 17
ENC_DIM = 64                                       # encoder embed dim (ViT-small=384; small here)
NUM_OBJECTS = 8
TEMPERATURE = 0.1
NUM_WAYS = 5
NUM_SHOTS = 5
QUERIES_PER_CLASS = 2
BATCH = NUM_WAYS * (NUM_SHOTS + QUERIES_PER_CLASS)  # 35
LN_EPS = 1e-5
NORM_EPS = 1e-12                                    # F.normalize eps
NORM_EPS2 = NORM_EPS * NORM_EPS


def _num_object_tiles():
    """1 object tile on single-TensorCore chips (v5e/v6e), 2 'parallel' tiles on v7x."""
    try:
        kind = jax.devices()[0].device_kind.lower().replace(" ", "")
    except Exception:
        return 1
    return 2 if ("v7" in kind or "tpu7" in kind) else 1


# ---------------------------------------------------------------------------
# Fused kernel: scores (1 matmul) + softmax + attention@V + LayerNorm +
#               prototype mean + cosine distances, one grid step per object tile
# ---------------------------------------------------------------------------
def _setfsl_fused_kernel(q_ref, kvt_ref, kv_ref, g_ref, beta_ref, wp_ref,
                         dist_ref, s3_ref):
    ot, d = q_ref.shape[1], q_ref.shape[2]
    bsz, n, _ = kv_ref.shape
    w = wp_ref.shape[0]

    # --- scores: ONE MXU matmul over the whole batch of tokens (bf16 in, f32 out) ---
    s_flat = jnp.dot(q_ref[0], kvt_ref[...],
                     preferred_element_type=jnp.float32)           # (OT, B*N)
    s_flat = s_flat * (1.0 / math.sqrt(d))                         # scale on 5-ish vregs

    # --- the single required relayout: flat score lanes -> per-image rows.
    #     This scratch is written once (B contiguous (OT,N) tiles) and read once;
    #     it replaces the old batched-score einsum (35 tiny matmuls). ---
    for bi in range(bsz):
        s3_ref[bi] = s_flat[:, bi * n:(bi + 1) * n]
    s3 = s3_ref[...]                                               # (B, OT, N) f32

    # --- softmax over tokens (exact, f32) ---
    m = jnp.max(s3, axis=-1, keepdims=True)
    e = jnp.exp(s3 - m)
    p = (e * pl.reciprocal(jnp.sum(e, axis=-1, keepdims=True))).astype(jnp.bfloat16)

    # --- attention @ V: per-image contraction (inherently batched over B),
    #     bf16 operands, f32 accumulation ---
    z = lax.dot_general(p, kv_ref[...], (((2,), (1,)), ((0,), (0,))),
                        preferred_element_type=jnp.float32)        # (B, OT, D) f32

    # --- norm2 LayerNorm over D (f32, VPU) ---
    mu = jnp.mean(z, axis=-1, keepdims=True)
    zc = z - mu
    var = jnp.mean(zc * zc, axis=-1, keepdims=True)
    zf = zc * lax.rsqrt(var + LN_EPS) * g_ref[...] + beta_ref[...]  # (B, OT, D) f32

    # --- object-leading layout so the whole tail is two OT-batched MXU dots
    #     (no per-object Python loop, no scratch round trip) ---
    zt32 = pltpu.einshape("bod->obd", zf)                          # (OT, B, D) f32
    inv_x = lax.rsqrt(jnp.maximum(jnp.sum(zt32 * zt32, axis=-1), NORM_EPS2))  # (OT, B)
    zt = zt32.astype(jnp.bfloat16)

    # prototypes: OT x (W,B)@(B,D) in one batched dot (class means of *unnormalized* zf)
    wp_rep = jnp.broadcast_to(wp_ref[...][None], (ot, w, bsz))     # (OT, W, B) bf16
    proto = lax.dot_general(wp_rep, zt, (((2,), (1,)), ((0,), (0,))),
                            preferred_element_type=jnp.float32)    # (OT, W, D) f32
    inv_p = lax.rsqrt(jnp.maximum(jnp.sum(proto * proto, axis=-1), NORM_EPS2))  # (OT, W)

    # cosine distances: OT x (W,D)@(D,B); F.normalize folded into the final scaling,
    # stored lane-dense with B on the lane axis.
    raw = lax.dot_general(proto.astype(jnp.bfloat16), zt,
                          (((2,), (2,)), ((0,), (0,))),
                          preferred_element_type=jnp.float32)       # (OT, W, B) f32
    dist_ref[0] = raw * inv_p[:, :, None] * inv_x[:, None, :]


def setfsl_fused_call(obj_q, z_layer, gamma, beta, wp):
    o, d = obj_q.shape
    bsz, n, _ = z_layer.shape
    w = wp.shape[0]
    nt = _num_object_tiles()
    if o % nt != 0:
        nt = 1
    ot = o // nt

    # Wrapper-side layout prep (cheap XLA ops): bf16 operands, flat + per-image kv.
    q_tiles = obj_q.astype(jnp.bfloat16).reshape(nt, ot, d)
    kv_t = jnp.transpose(z_layer.reshape(bsz * n, d)).astype(jnp.bfloat16)   # (D, B*N)
    kv_3 = z_layer.astype(jnp.bfloat16)                                      # (B, N, D)
    wp_b = wp.astype(jnp.bfloat16)

    flops = 2 * (o * d * bsz * n          # scores
                 + bsz * o * n * d        # attention @ V
                 + o * w * bsz * d        # prototypes
                 + o * w * bsz * d)       # cosine numerators
    transcendentals = o * bsz * n + 2 * o * bsz + o * w
    bytes_accessed = ((q_tiles.size + kv_t.size + kv_3.size + wp_b.size) * 2
                      + (gamma.size + beta.size) * 4 + nt * ot * w * bsz * 4)

    dist = pl.pallas_call(
        _setfsl_fused_kernel,
        out_shape=jax.ShapeDtypeStruct((nt, ot, w, bsz), jnp.float32),
        grid_spec=pltpu.PrefetchScalarGridSpec(
            num_scalar_prefetch=0,
            grid=(nt,),
            in_specs=[
                pl.BlockSpec((1, ot, d), lambda t: (t, 0, 0)),       # object-query tile
                pl.BlockSpec((d, bsz * n), lambda t: (0, 0)),        # kv^T flat (score matmul)
                pl.BlockSpec((bsz, n, d), lambda t: (0, 0, 0)),      # kv per image (attn @ V)
                pl.BlockSpec((1, d), lambda t: (0, 0)),              # LN gamma
                pl.BlockSpec((1, d), lambda t: (0, 0)),              # LN beta
                pl.BlockSpec((w, bsz), lambda t: (0, 0)),            # prototype-averaging matrix
            ],
            out_specs=pl.BlockSpec((1, ot, w, bsz), lambda t: (t, 0, 0, 0)),
            scratch_shapes=[pltpu.VMEM((bsz, ot, n), jnp.float32)],  # flat->per-image relayout buf
        ),
        compiler_params=pltpu.CompilerParams(dimension_semantics=("parallel",)),
        cost_estimate=pl.CostEstimate(flops=flops,
                                      transcendentals=transcendentals,
                                      bytes_accessed=bytes_accessed),
    )(q_tiles, kv_t, kv_3, gamma, beta, wp_b)
    return dist.reshape(o, w, bsz)                                   # (O, W, B), lane-dense


# ---------------------------------------------------------------------------
# Host-side episode split (deterministic class-major, num_shots=5)
# ---------------------------------------------------------------------------
def build_split_arrays(labels_np):
    # TODO(synk): split_support_query_set is an external helper (not provided);
    # reimplemented here as a deterministic class-major 5-shot split.
    sup, qry, yq = [], [], []
    for c in range(NUM_WAYS):
        idx = np.where(labels_np == c)[0]
        sup.append(idx[:NUM_SHOTS])
        qry.extend(idx[NUM_SHOTS:].tolist())
        yq.extend([c] * (len(idx) - NUM_SHOTS))
    wp = np.zeros((NUM_WAYS, labels_np.shape[0]), np.float32)
    for c in range(NUM_WAYS):
        wp[c, sup[c]] = 1.0 / len(sup[c])                            # class-mean weights
    return (np.concatenate(sup).astype(np.int32),
            np.array(qry, np.int32), np.array(yq, np.int32), wp)


# ---------------------------------------------------------------------------
# SETFSL.forward (individual_crossattn path, continual_layers=None)
# ---------------------------------------------------------------------------
@jax.jit
def _setfsl_loss_and_dist(obj_q, z_layer, gamma, beta, wp, qry_idx, y_query):
    dist_owb = setfsl_fused_call(obj_q, z_layer, gamma, beta, wp)    # (O, W, B)
    dist_all = jnp.transpose(dist_owb, (0, 2, 1))                    # (O, B, W)
    dist_q = jnp.transpose(dist_all[:, qry_idx, :], (1, 0, 2))       # (Q, O, W)
    logits = (dist_q / TEMPERATURE).reshape(-1, NUM_WAYS)            # (Q*O, W)
    y = jnp.repeat(y_query, NUM_OBJECTS)                             # (Q*O,)
    lse = jax.nn.logsumexp(logits, axis=-1)
    picked = jnp.take_along_axis(logits, y[:, None], axis=-1)[:, 0]
    return dist_all, jnp.mean(lse - picked)                          # F.cross_entropy


def setfsl_forward(z_layer, labels_np, params):
    # TODO(synk): the frozen ViT-small backbone (vit_encoder.vit_small) is external and not
    # reproduced; z_layer stands in for encoder(inputs, memories=True)[self.layer].
    _, qry_idx, y_query, wp = build_split_arrays(labels_np)
    return _setfsl_loss_and_dist(params["object_queries"], z_layer,
                                 params["ln_gamma"], params["ln_beta"],
                                 jnp.asarray(wp), jnp.asarray(qry_idx),
                                 jnp.asarray(y_query))


# ---------------------------------------------------------------------------
# Pure-JAX f32 reference for validation (distances AND loss)
# ---------------------------------------------------------------------------
def reference_forward(z_layer, labels_np, params):
    q = params["object_queries"]
    d = q.shape[-1]
    s = jnp.einsum("od,bnd->bon", q, z_layer) / math.sqrt(d)
    p = jax.nn.softmax(s, axis=-1)
    z = jnp.einsum("bon,bnd->bod", p, z_layer)
    mu = jnp.mean(z, -1, keepdims=True)
    var = jnp.mean((z - mu) ** 2, -1, keepdims=True)
    zf = (z - mu) / jnp.sqrt(var + LN_EPS) * params["ln_gamma"][0] + params["ln_beta"][0]

    _, qry_idx, y_query, wp = build_split_arrays(labels_np)
    proto = jnp.einsum("wb,bod->owd", jnp.asarray(wp), zf)           # (O, W, D)

    def nrm(a):
        return a / jnp.maximum(jnp.linalg.norm(a, axis=-1, keepdims=True), NORM_EPS)

    dist_all = jnp.einsum("bod,owd->obw", nrm(zf), nrm(proto))       # (O, B, W)

    dist_q = jnp.transpose(dist_all[:, jnp.asarray(qry_idx), :], (1, 0, 2))
    logits = (dist_q / TEMPERATURE).reshape(-1, NUM_WAYS)
    y = jnp.repeat(jnp.asarray(y_query), NUM_OBJECTS)
    lse = jax.nn.logsumexp(logits, -1)
    loss = jnp.mean(lse - jnp.take_along_axis(logits, y[:, None], -1)[:, 0])
    return dist_all, loss


if __name__ == "__main__":
    key = jax.random.PRNGKey(0)
    k_feat, k_obj = jax.random.split(key)

    # class-major labels: 5 classes x (5 support + 2 query)
    labels = np.repeat(np.arange(NUM_WAYS), NUM_SHOTS + QUERIES_PER_CLASS)

    # stand-in for the frozen ViT encoder's layer output (B, N_tokens, D)
    z_layer = jax.random.normal(k_feat, (BATCH, N_TOKENS, ENC_DIM), jnp.float32)

    params = {
        # nn.Embedding default init ~ N(0, 1)
        "object_queries": jax.random.normal(k_obj, (NUM_OBJECTS, ENC_DIM), jnp.float32),
        # nn.LayerNorm default init: weight=1, bias=0
        "ln_gamma": jnp.ones((1, ENC_DIM), jnp.float32),
        "ln_beta": jnp.zeros((1, ENC_DIM), jnp.float32),
    }

    dist_k, loss_k = jax.block_until_ready(setfsl_forward(z_layer, labels, params))
    dist_r, loss_r = reference_forward(z_layer, labels, params)

    # Per-element distance check (catches layout / transpose / indexing mistakes;
    # tolerance sized for bf16 MXU operands), then the scalar loss.
    np.testing.assert_allclose(np.asarray(dist_k), np.asarray(dist_r),
                               rtol=1e-2, atol=3e-2)
    np.testing.assert_allclose(float(loss_k), float(loss_r), rtol=2e-2, atol=2e-2)
    print("KERNEL_OK")
</pallas_src>

<mosaic_0001>
module attributes {stable_mosaic.version = 11 : i64} {
  func.func @_setfsl_fused_kernel(%arg0: i32, %arg1: memref<1x8x64xbf16, #tpu.memory_space<vmem>>, %arg2: memref<64x595xbf16, #tpu.memory_space<vmem>>, %arg3: memref<35x17x64xbf16, #tpu.memory_space<vmem>>, %arg4: memref<1x64xf32, #tpu.memory_space<vmem>>, %arg5: memref<1x64xf32, #tpu.memory_space<vmem>>, %arg6: memref<5x35xbf16, #tpu.memory_space<vmem>>, %arg7: memref<1x8x5x35xf32, #tpu.memory_space<vmem>>, %arg8: memref<35x8x17xf32, #tpu.memory_space<vmem>>) attributes {dimension_semantics = [#tpu.dimension_semantics<parallel>], iteration_bounds = array<i64: 1>, scalar_prefetch = 0 : i64, scratch_operands = 1 : i64, tpu.core_type = #tpu.core_type<tc>, window_params = [{transform_indices = @transform_0, window_bounds = array<i64: 1, 8, 64>}, {pipeline_mode = #tpu.pipeline_mode<synchronous>, transform_indices = @transform_1, window_bounds = array<i64: 64, 595>}, {pipeline_mode = #tpu.pipeline_mode<synchronous>, transform_indices = @transform_2, window_bounds = array<i64: 35, 17, 64>}, {pipeline_mode = #tpu.pipeline_mode<synchronous>, transform_indices = @transform_3, window_bounds = array<i64: 1, 64>}, {pipeline_mode = #tpu.pipeline_mode<synchronous>, transform_indices = @transform_4, window_bounds = array<i64: 1, 64>}, {pipeline_mode = #tpu.pipeline_mode<synchronous>, transform_indices = @transform_5, window_bounds = array<i64: 5, 35>}, {transform_indices = @transform_6, window_bounds = array<i64: 1, 8, 5, 35>}]} {
    %c0 = arith.constant 0 : index
    %c0_0 = arith.constant 0 : index
    %c0_1 = arith.constant 0 : index
    %0 = vector.load %arg1[%c0, %c0_0, %c0_1] : memref<1x8x64xbf16, #tpu.memory_space<vmem>>, vector<1x8x64xbf16>
    %1 = vector.shape_cast %0 : vector<1x8x64xbf16> to vector<8x64xbf16>
    %c0_2 = arith.constant 0 : index
    %c0_3 = arith.constant 0 : index
    %2 = vector.load %arg2[%c0_2, %c0_3] : memref<64x595xbf16, #tpu.memory_space<vmem>>, vector<64x595xbf16>
    %cst = arith.constant dense<0.000000e+00> : vector<8x595xf32>
    %3 = tpu.matmul %1, %2, %cst {dimension_numbers = #tpu.dot_dimension_numbers<[1], [0], [0], [1], [0, 0, 1, 1], [], []>} : vector<8x64xbf16>, vector<64x595xbf16>, vector<8x595xf32> -> vector<8x595xf32>
    %cst_4 = arith.constant 1.250000e-01 : f32
    %4 = vector.broadcast %cst_4 : f32 to vector<8x595xf32>
    %5 = arith.mulf %3, %4 : vector<8x595xf32>
    %6 = vector.extract_strided_slice %5 {offsets = [0, 0], sizes = [8, 17], strides = [1, 1]} : vector<8x595xf32> to vector<8x17xf32>
    %c0_5 = arith.constant 0 : index
    %c0_6 = arith.constant 0 : index
    %c0_7 = arith.constant 0 : index
    %7 = vector.load %arg8[%c0_5, %c0_6, %c0_7] : memref<35x8x17xf32, #tpu.memory_space<vmem>>, vector<1x8x17xf32>
    %8 = vector.shape_cast %7 : vector<1x8x17xf32> to vector<8x17xf32>
    %9 = vector.shape_cast %6 : vector<8x17xf32> to vector<1x8x17xf32>
    tpu.vector_store %arg8[%c0_5, %c0_6, %c0_7], %9 {strides = array<i32>} : memref<35x8x17xf32, #tpu.memory_space<vmem>>, vector<1x8x17xf32>,
    %10 = vector.extract_strided_slice %5 {offsets = [0, 17], sizes = [8, 17], strides = [1, 1]} : vector<8x595xf32> to vector<8x17xf32>
    %c1 = arith.constant 1 : index
    %c0_8 = arith.constant 0 : index
    %c0_9 = arith.constant 0 : index
    %11 = vector.load %arg8[%c1, %c0_8, %c0_9] : memref<35x8x17xf32, #tpu.memory_space<vmem>>, vector<1x8x17xf32>
    %12 = vector.shape_cast %11 : vector<1x8x17xf32> to vector<8x17xf32>
    %13 = vector.shape_cast %10 : vector<8x17xf32> to vector<1x8x17xf32>
    tpu.vector_store %arg8[%c1, %c0_8, %c0_9], %13 {strides = array<i32>} : memref<35x8x17xf32, #tpu.memory_space<vmem>>, vector<1x8x17xf32>,
    %14 = vector.extract_strided_slice %5 {offsets = [0, 34], sizes = [8, 17], strides = [1, 1]} : vector<8x595xf32> to vector<8x17xf32>
    %c2 = arith.constant 2 : index
    %c0_10 = arith.constant 0 : index
    %c0_11 = arith.constant 0 : index
    %15 = vector.load %arg8[%c2, %c0_10, %c0_11] : memref<35x8x17xf32, #tpu.memory_space<vmem>>, vector<1x8x17xf32>
    %16 = vector.shape_cast %15 : vector<1x8x17xf32> to vector<8x17xf32>
    %17 = vector.shape_cast %14 : vector<8x17xf32> to vector<1x8x17xf32>
    tpu.vector_store %arg8[%c2, %c0_10, %c0_11], %17 {strides = array<i32>} : memref<35x8x17xf32, #tpu.memory_space<vmem>>, vector<1x8x17xf32>,
    %18 = vector.extract_strided_slice %5 {offsets = [0, 51], sizes = [8, 17], strides = [1, 1]} : vector<8x595xf32> to vector<8x17xf32>
    %c3 = arith.constant 3 : index
    %c0_12 = arith.constant 0 : index
    %c0_13 = arith.constant 0 : index
    %19 = vector.load %arg8[%c3, %c0_12, %c0_13] : memref<35x8x17xf32, #tpu.memory_space<vmem>>, vector<1x8x17xf32>
    %20 = vector.shape_cast %19 : vector<1x8x17xf32> to vector<8x17xf32>
    %21 = vector.shape_cast %18 : vector<8x17xf32> to vector<1x8x17xf32>
    tpu.vector_store %arg8[%c3, %c0_12, %c0_13], %21 {strides = array<i32>} : memref<35x8x17xf32, #tpu.memory_space<vmem>>, vector<1x8x17xf32>,
    %22 = vector.extract_strided_slice %5 {offsets = [0, 68], sizes = [8, 17], strides = [1, 1]} : vector<8x595xf32> to vector<8x17xf32>
    %c4 = arith.constant 4 : index
    %c0_14 = arith.constant 0 : index
    %c0_15 = arith.constant 0 : index
    %23 = vector.load %arg8[%c4, %c0_14, %c0_15] : memref<35x8x17xf32, #tpu.memory_space<vmem>>, vector<1x8x17xf32>
    %24 = vector.shape_cast %23 : vector<1x8x17xf32> to vector<8x17xf32>
    %25 = vector.shape_cast %22 : vector<8x17xf32> to vector<1x8x17xf32>
    tpu.vector_store %arg8[%c4, %c0_14, %c0_15], %25 {strides = array<i32>} : memref<35x8x17xf32, #tpu.memory_space<vmem>>, vector<1x8x17xf32>,
    %26 = vector.extract_strided_slice %5 {offsets = [0, 85], sizes = [8, 17], strides = [1, 1]} : vector<8x595xf32> to vector<8x17xf32>
    %c5 = arith.constant 5 : index
    %c0_16 = arith.constant 0 : index
    %c0_17 = arith.constant 0 : index
    %27 = vector.load %arg8[%c5, %c0_16, %c0_17] : memref<35x8x17xf32, #tpu.memory_space<vmem>>, vector<1x8x17xf32>
    %28 = vector.shape_cast %27 : vector<1x8x17xf32> to vector<8x17xf32>
    %29 = vector.shape_cast %26 : vector<8x17xf32> to vector<1x8x17xf32>
    tpu.vector_store %arg8[%c5, %c0_16, %c0_17], %29 {strides = array<i32>} : memref<35x8x17xf32, #tpu.memory_space<vmem>>, vector<1x8x17xf32>,
    %30 = vector.extract_strided_slice %5 {offsets = [0, 102], sizes = [8, 17], strides = [1, 1]} : vector<8x595xf32> to vector<8x17xf32>
    %c6 = arith.constant 6 : index
    %c0_18 = arith.constant 0 : index
    %c0_19 = arith.constant 0 : index
    %31 = vector.load %arg8[%c6, %c0_18, %c0_19] : memref<35x8x17xf32, #tpu.memory_space<vmem>>, vector<1x8x17xf32>
    %32 = vector.shape_cast %31 : vector<1x8x17xf32> to vector<8x17xf32>
    %33 = vector.shape_cast %30 : vector<8x17xf32> to vector<1x8x17xf32>
    tpu.vector_store %arg8[%c6, %c0_18, %c0_19], %33 {strides = array<i32>} : memref<35x8x17xf32, #tpu.memory_space<vmem>>, vector<1x8x17xf32>,
    %34 = vector.extract_strided_slice %5 {offsets = [0, 119], sizes = [8, 17], strides = [1, 1]} : vector<8x595xf32> to vector<8x17xf32>
    %c7 = arith.constant 7 : index
    %c0_20 = arith.constant 0 : index
    %c0_21 = arith.constant 0 : index
    %35 = vector.load %arg8[%c7, %c0_20, %c0_21] : memref<35x8x17xf32, #tpu.memory_space<vmem>>, vector<1x8x17xf32>
    %36 = vector.shape_cast %35 : vector<1x8x17xf32> to vector<8x17xf32>
    %37 = vector.shape_cast %34 : vector<8x17xf32> to vector<1x8x17xf32>
    tpu.vector_store %arg8[%c7, %c0_20, %c0_21], %37 {strides = array<i32>} : memref<35x8x17xf32, #tpu.memory_space<vmem>>, vector<1x8x17xf32>,
    %38 = vector.extract_strided_slice %5 {offsets = [0, 136], sizes = [8, 17], strides = [1, 1]} : vector<8x595xf32> to vector<8x17xf32>
    %c8 = arith.constant 8 : index
    %c0_22 = arith.constant 0 : index
    %c0_23 = arith.constant 0 : index
    %39 = vector.load %arg8[%c8, %c0_22, %c0_23] : memref<35x8x17xf32, #tpu.memory_space<vmem>>, vector<1x8x17xf32>
    %40 = vector.shape_cast %39 : vector<1x8x17xf32> to vector<8x17xf32>
    %41 = vector.shape_cast %38 : vector<8x17xf32> to vector<1x8x17xf32>
    tpu.vector_store %arg8[%c8, %c0_22, %c0_23], %41 {strides = array<i32>} : memref<35x8x17xf32, #tpu.memory_space<vmem>>, vector<1x8x17xf32>,
    %42 = vector.extract_strided_slice %5 {offsets = [0, 153], sizes = [8, 17], strides = [1, 1]} : vector<8x595xf32> to vector<8x17xf32>
    %c9 = arith.constant 9 : index
    %c0_24 = arith.constant 0 : index
    %c0_25 = arith.constant 0 : index
    %43 = vector.load %arg8[%c9, %c0_24, %c0_25] : memref<35x8x17xf32, #tpu.memory_space<vmem>>, vector<1x8x17xf32>
    %44 = vector.shape_cast %43 : vector<1x8x17xf32> to vector<8x17xf32>
    %45 = vector.shape_cast %42 : vector<8x17xf32> to vector<1x8x17xf32>
    tpu.vector_store %arg8[%c9, %c0_24, %c0_25], %45 {strides = array<i32>} : memref<35x8x17xf32, #tpu.memory_space<vmem>>, vector<1x8x17xf32>,
    %46 = vector.extract_strided_slice %5 {offsets = [0, 170], sizes = [8, 17], strides = [1, 1]} : vector<8x595xf32> to vector<8x17xf32>
    %c10 = arith.constant 10 : index
    %c0_26 = arith.constant 0 : index
    %c0_27 = arith.constant 0 : index
    %47 = vector.load %arg8[%c10, %c0_26, %c0_27] : memref<35x8x17xf32, #tpu.memory_space<vmem>>, vector<1x8x17xf32>
    %48 = vector.shape_cast %47 : vector<1x8x17xf32> to vector<8x17xf32>
    %49 = vector.shape_cast %46 : vector<8x17xf32> to vector<1x8x17xf32>
    tpu.vector_store %arg8[%c10, %c0_26, %c0_27], %49 {strides = array<i32>} : memref<35x8x17xf32, #tpu.memory_space<vmem>>, vector<1x8x17xf32>,
    %50 = vector.extract_strided_slice %5 {offsets = [0, 187], sizes = [8, 17], strides = [1, 1]} : vector<8x595xf32> to vector<8x17xf32>
    %c11 = arith.constant 11 : index
    %c0_28 = arith.constant 0 : index
    %c0_29 = arith.constant 0 : index
    %51 = vector.load %arg8[%c11, %c0_28, %c0_29] : memref<35x8x17xf32, #tpu.memory_space<vmem>>, vector<1x8x17xf32>
    %52 = vector.shape_cast %51 : vector<1x8x17xf32> to vector<8x17xf32>
    %53 = vector.shape_cast %50 : vector<8x17xf32> to vector<1x8x17xf32>
    tpu.vector_store %arg8[%c11, %c0_28, %c0_29], %53 {strides = array<i32>} : memref<35x8x17xf32, #tpu.memory_space<vmem>>, vector<1x8x17xf32>,
    %54 = vector.extract_strided_slice %5 {offsets = [0, 204], sizes = [8, 17], strides = [1, 1]} : vector<8x595xf32> to vector<8x17xf32>
    %c12 = arith.constant 12 : index
    %c0_30 = arith.constant 0 : index
    %c0_31 = arith.constant 0 : index
    %55 = vector.load %arg8[%c12, %c0_30, %c0_31] : memref<35x8x17xf32, #tpu.memory_space<vmem>>, vector<1x8x17xf32>
    %56 = vector.shape_cast %55 : vector<1x8x17xf32> to vector<8x17xf32>
    %57 = vector.shape_cast %54 : vector<8x17xf32> to vector<1x8x17xf32>
    tpu.vector_store %arg8[%c12, %c0_30, %c0_31], %57 {strides = array<i32>} : memref<35x8x17xf32, #tpu.memory_space<vmem>>, vector<1x8x17xf32>,
    %58 = vector.extract_strided_slice %5 {offsets = [0, 221], sizes = [8, 17], strides = [1, 1]} : vector<8x595xf32> to vector<8x17xf32>
    %c13 = arith.constant 13 : index
    %c0_32 = arith.constant 0 : index
    %c0_33 = arith.constant 0 : index
    %59 = vector.load %arg8[%c13, %c0_32, %c0_33] : memref<35x8x17xf32, #tpu.memory_space<vmem>>, vector<1x8x17xf32>
    %60 = vector.shape_cast %59 : vector<1x8x17xf32> to vector<8x17xf32>
    %61 = vector.shape_cast %58 : vector<8x17xf32> to vector<1x8x17xf32>
    tpu.vector_store %arg8[%c13, %c0_32, %c0_33], %61 {strides = array<i32>} : memref<35x8x17xf32, #tpu.memory_space<vmem>>, vector<1x8x17xf32>,
    %62 = vector.extract_strided_slice %5 {offsets = [0, 238], sizes = [8, 17], strides = [1, 1]} : vector<8x595xf32> to vector<8x17xf32>
    %c14 = arith.constant 14 : index
    %c0_34 = arith.constant 0 : index
    %c0_35 = arith.constant 0 : index
    %63 = vector.load %arg8[%c14, %c0_34, %c0_35] : memref<35x8x17xf32, #tpu.memory_space<vmem>>, vector<1x8x17xf32>
    %64 = vector.shape_cast %63 : vector<1x8x17xf32> to vector<8x17xf32>
    %65 = vector.shape_cast %62 : vector<8x17xf32> to vector<1x8x17xf32>
    tpu.vector_store %arg8[%c14, %c0_34, %c0_35], %65 {strides = array<i32>} : memref<35x8x17xf32, #tpu.memory_space<vmem>>, vector<1x8x17xf32>,
    %66 = vector.extract_strided_slice %5 {offsets = [0, 255], sizes = [8, 17], strides = [1, 1]} : vector<8x595xf32> to vector<8x17xf32>
    %c15 = arith.constant 15 : index
    %c0_36 = arith.constant 0 : index
    %c0_37 = arith.constant 0 : index
    %67 = vector.load %arg8[%c15, %c0_36, %c0_37] : memref<35x8x17xf32, #tpu.memory_space<vmem>>, vector<1x8x17xf32>
    %68 = vector.shape_cast %67 : vector<1x8x17xf32> to vector<8x17xf32>
    %69 = vector.shape_cast %66 : vector<8x17xf32> to vector<1x8x17xf32>
    tpu.vector_store %arg8[%c15, %c0_36, %c0_37], %69 {strides = array<i32>} : memref<35x8x17xf32, #tpu.memory_space<vmem>>, vector<1x8x17xf32>,
    %70 = vector.extract_strided_slice %5 {offsets = [0, 272], sizes = [8, 17], strides = [1, 1]} : vector<8x595xf32> to vector<8x17xf32>
    %c16 = arith.constant 16 : index
    %c0_38 = arith.constant 0 : index
    %c0_39 = arith.constant 0 : index
    %71 = vector.load %arg8[%c16, %c0_38, %c0_39] : memref<35x8x17xf32, #tpu.memory_space<vmem>>, vector<1x8x17xf32>
    %72 = vector.shape_cast %71 : vector<1x8x17xf32> to vector<8x17xf32>
    %73 = vector.shape_cast %70 : vector<8x17xf32> to vector<1x8x17xf32>
    tpu.vector_store %arg8[%c16, %c0_38, %c0_39], %73 {strides = array<i32>} : memref<35x8x17xf32, #tpu.memory_space<vmem>>, vector<1x8x17xf32>,
    %74 = vector.extract_strided_slice %5 {offsets = [0, 289], sizes = [8, 17], strides = [1, 1]} : vector<8x595xf32> to vector<8x17xf32>
    %c17 = arith.constant 17 : index
    %c0_40 = arith.constant 0 : index
    %c0_41 = arith.constant 0 : index
    %75 = vector.load %arg8[%c17, %c0_40, %c0_41] : memref<35x8x17xf32, #tpu.memory_space<vmem>>, vector<1x8x17xf32>
    %76 = vector.shape_cast %75 : vector<1x8x17xf32> to vector<8x17xf32>
    %77 = vector.shape_cast %74 : vector<8x17xf32> to vector<1x8x17xf32>
    tpu.vector_store %arg8[%c17, %c0_40, %c0_41], %77 {strides = array<i32>} : memref<35x8x17xf32, #tpu.memory_space<vmem>>, vector<1x8x17xf32>,
    %78 = vector.extract_strided_slice %5 {offsets = [0, 306], sizes = [8, 17], strides = [1, 1]} : vector<8x595xf32> to vector<8x17xf32>
    %c18 = arith.constant 18 : index
    %c0_42 = arith.constant 0 : index
    %c0_43 = arith.constant 0 : index
    %79 = vector.load %arg8[%c18, %c0_42, %c0_43] : memref<35x8x17xf32, #tpu.memory_space<vmem>>, vector<1x8x17xf32>
    %80 = vector.shape_cast %79 : vector<1x8x17xf32> to vector<8x17xf32>
    %81 = vector.shape_cast %78 : vector<8x17xf32> to vector<1x8x17xf32>
    tpu.vector_store %arg8[%c18, %c0_42, %c0_43], %81 {strides = array<i32>} : memref<35x8x17xf32, #tpu.memory_space<vmem>>, vector<1x8x17xf32>,
    %82 = vector.extract_strided_slice %5 {offsets = [0, 323], sizes = [8, 17], strides = [1, 1]} : vector<8x595xf32> to vector<8x17xf32>
    %c19 = arith.constant 19 : index
    %c0_44 = arith.constant 0 : index
    %c0_45 = arith.constant 0 : index
    %83 = vector.load %arg8[%c19, %c0_44, %c0_45] : memref<35x8x17xf32, #tpu.memory_space<vmem>>, vector<1x8x17xf32>
    %84 = vector.shape_cast %83 : vector<1x8x17xf32> to vector<8x17xf32>
    %85 = vector.shape_cast %82 : vector<8x17xf32> to vector<1x8x17xf32>
    tpu.vector_store %arg8[%c19, %c0_44, %c0_45], %85 {strides = array<i32>} : memref<35x8x17xf32, #tpu.memory_space<vmem>>, vector<1x8x17xf32>,
    %86 = vector.extract_strided_slice %5 {offsets = [0, 340], sizes = [8, 17], strides = [1, 1]} : vector<8x595xf32> to vector<8x17xf32>
    %c20 = arith.constant 20 : index
    %c0_46 = arith.constant 0 : index
    %c0_47 = arith.constant 0 : index
    %87 = vector.load %arg8[%c20, %c0_46, %c0_47] : memref<35x8x17xf32, #tpu.memory_space<vmem>>, vector<1x8x17xf32>
    %88 = vector.shape_cast %87 : vector<1x8x17xf32> to vector<8x17xf32>
    %89 = vector.shape_cast %86 : vector<8x17xf32> to vector<1x8x17xf32>
    tpu.vector_store %arg8[%c20, %c0_46, %c0_47], %89 {strides = array<i32>} : memref<35x8x17xf32, #tpu.memory_space<vmem>>, vector<1x8x17xf32>,
    %90 = vector.extract_strided_slice %5 {offsets = [0, 357], sizes = [8, 17], strides = [1, 1]} : vector<8x595xf32> to vector<8x17xf32>
    %c21 = arith.constant 21 : index
    %c0_48 = arith.constant 0 : index
    %c0_49 = arith.constant 0 : index
    %91 = vector.load %arg8[%c21, %c0_48, %c0_49] : memref<35x8x17xf32, #tpu.memory_space<vmem>>, vector<1x8x17xf32>
    %92 = vector.shape_cast %91 : vector<1x8x17xf32> to vector<8x17xf32>
    %93 = vector.shape_cast %90 : vector<8x17xf32> to vector<1x8x17xf32>
    tpu.vector_store %arg8[%c21, %c0_48, %c0_49], %93 {strides = array<i32>} : memref<35x8x17xf32, #tpu.memory_space<vmem>>, vector<1x8x17xf32>,
    %94 = vector.extract_strided_slice %5 {offsets = [0, 374], sizes = [8, 17], strides = [1, 1]} : vector<8x595xf32> to vector<8x17xf32>
    %c22 = arith.constant 22 : index
    %c0_50 = arith.constant 0 : index
    %c0_51 = arith.constant 0 : index
    %95 = vector.load %arg8[%c22, %c0_50, %c0_51] : memref<35x8x17xf32, #tpu.memory_space<vmem>>, vector<1x8x17xf32>
    %96 = vector.shape_cast %95 : vector<1x8x17xf32> to vector<8x17xf32>
    %97 = vector.shape_cast %94 : vector<8x17xf32> to vector<1x8x17xf32>
    tpu.vector_store %arg8[%c22, %c0_50, %c0_51], %97 {strides = array<i32>} : memref<35x8x17xf32, #tpu.memory_space<vmem>>, vector<1x8x17xf32>,
    %98 = vector.extract_strided_slice %5 {offsets = [0, 391], sizes = [8, 17], strides = [1, 1]} : vector<8x595xf32> to vector<8x17xf32>
    %c23 = arith.constant 23 : index
    %c0_52 = arith.constant 0 : index
    %c0_53 = arith.constant 0 : index
    %99 = vector.load %arg8[%c23, %c0_52, %c0_53] : memref<35x8x17xf32, #tpu.memory_space<vmem>>, vector<1x8x17xf32>
    %100 = vector.shape_cast %99 : vector<1x8x17xf32> to vector<8x17xf32>
    %101 = vector.shape_cast %98 : vector<8x17xf32> to vector<1x8x17xf32>
    tpu.vector_store %arg8[%c23, %c0_52, %c0_53], %101 {strides = array<i32>} : memref<35x8x17xf32, #tpu.memory_space<vmem>>, vector<1x8x17xf32>,
    %102 = vector.extract_strided_slice %5 {offsets = [0, 408], sizes = [8, 17], strides = [1, 1]} : vector<8x595xf32> to vector<8x17xf32>
    %c24 = arith.constant 24 : index
    %c0_54 = arith.constant 0 : index
    %c0_55 = arith.constant 0 : index
    %103 = vector.load %arg8[%c24, %c0_54, %c0_55] : memref<35x8x17xf32, #tpu.memory_space<vmem>>, vector<1x8x17xf32>
    %104 = vector.shape_cast %103 : vector<1x8x17xf32> to vector<8x17xf32>
    %105 = vector.shape_cast %102 : vector<8x17xf32> to vector<1x8x17xf32>
    tpu.vector_store %arg8[%c24, %c0_54, %c0_55], %105 {strides = array<i32>} : memref<35x8x17xf32, #tpu.memory_space<vmem>>, vector<1x8x17xf32>,
    %106 = vector.extract_strided_slice %5 {offsets = [0, 425], sizes = [8, 17], strides = [1, 1]} : vector<8x595xf32> to vector<8x17xf32>
    %c25 = arith.constant 25 : index
    %c0_56 = arith.constant 0 : index
    %c0_57 = arith.constant 0 : index
    %107 = vector.load %arg8[%c25, %c0_56, %c0_57] : memref<35x8x17xf32, #tpu.memory_space<vmem>>, vector<1x8x17xf32>
    %108 = vector.shape_cast %107 : vector<1x8x17xf32> to vector<8x17xf32>
    %109 = vector.shape_cast %106 : vector<8x17xf32> to vector<1x8x17xf32>
    tpu.vector_store %arg8[%c25, %c0_56, %c0_57], %109 {strides = array<i32>} : memref<35x8x17xf32, #tpu.memory_space<vmem>>, vector<1x8x17xf32>,
    %110 = vector.extract_strided_slice %5 {offsets = [0, 442], sizes = [8, 17], strides = [1, 1]} : vector<8x595xf32> to vector<8x17xf32>
    %c26 = arith.constant 26 : index
    %c0_58 = arith.constant 0 : index
    %c0_59 = arith.constant 0 : index
    %111 = vector.load %arg8[%c26, %c0_58, %c0_59] : memref<35x8x17xf32, #tpu.memory_space<vmem>>, vector<1x8x17xf32>
    %112 = vector.shape_cast %111 : vector<1x8x17xf32> to vector<8x17xf32>
    %113 = vector.shape_cast %110 : vector<8x17xf32> to vector<1x8x17xf32>
    tpu.vector_store %arg8[%c26, %c0_58, %c0_59], %113 {strides = array<i32>} : memref<35x8x17xf32, #tpu.memory_space<vmem>>, vector<1x8x17xf32>,
    %114 = vector.extract_strided_slice %5 {offsets = [0, 459], sizes = [8, 17], strides = [1, 1]} : vector<8x595xf32> to vector<8x17xf32>
    %c27 = arith.constant 27 : index
    %c0_60 = arith.constant 0 : index
    %c0_61 = arith.constant 0 : index
    %115 = vector.load %arg8[%c27, %c0_60, %c0_61] : memref<35x8x17xf32, #tpu.memory_space<vmem>>, vector<1x8x17xf32>
    %116 = vector.shape_cast %115 : vector<1x8x17xf32> to vector<8x17xf32>
    %117 = vector.shape_cast %114 : vector<8x17xf32> to vector<1x8x17xf32>
    tpu.vector_store %arg8[%c27, %c0_60, %c0_61], %117 {strides = array<i32>} : memref<35x8x17xf32, #tpu.memory_space<vmem>>, vector<1x8x17xf32>,
    %118 = vector.extract_strided_slice %5 {offsets = [0, 476], sizes = [8, 17], strides = [1, 1]} : vector<8x595xf32> to vector<8x17xf32>
    %c28 = arith.constant 28 : index
    %c0_62 = arith.constant 0 : index
    %c0_63 = arith.constant 0 : index
    %119 = vector.load %arg8[%c28, %c0_62, %c0_63] : memref<35x8x17xf32, #tpu.memory_space<vmem>>, vector<1x8x17xf32>
    %120 = vector.shape_cast %119 : vector<1x8x17xf32> to vector<8x17xf32>
    %121 = vector.shape_cast %118 : vector<8x17xf32> to vector<1x8x17xf32>
    tpu.vector_store %arg8[%c28, %c0_62, %c0_63], %121 {strides = array<i32>} : memref<35x8x17xf32, #tpu.memory_space<vmem>>, vector<1x8x17xf32>,
    %122 = vector.extract_strided_slice %5 {offsets = [0, 493], sizes = [8, 17], strides = [1, 1]} : vector<8x595xf32> to vector<8x17xf32>
    %c29 = arith.constant 29 : index
    %c0_64 = arith.constant 0 : index
    %c0_65 = arith.constant 0 : index
    %123 = vector.load %arg8[%c29, %c0_64, %c0_65] : memref<35x8x17xf32, #tpu.memory_space<vmem>>, vector<1x8x17xf32>
    %124 = vector.shape_cast %123 : vector<1x8x17xf32> to vector<8x17xf32>
    %125 = vector.shape_cast %122 : vector<8x17xf32> to vector<1x8x17xf32>
    tpu.vector_store %arg8[%c29, %c0_64, %c0_65], %125 {strides = array<i32>} : memref<35x8x17xf32, #tpu.memory_space<vmem>>, vector<1x8x17xf32>,
    %126 = vector.extract_strided_slice %5 {offsets = [0, 510], sizes = [8, 17], strides = [1, 1]} : vector<8x595xf32> to vector<8x17xf32>
    %c30 = arith.constant 30 : index
    %c0_66 = arith.constant 0 : index
    %c0_67 = arith.constant 0 : index
    %127 = vector.load %arg8[%c30, %c0_66, %c0_67] : memref<35x8x17xf32, #tpu.memory_space<vmem>>, vector<1x8x17xf32>
    %128 = vector.shape_cast %127 : vector<1x8x17xf32> to vector<8x17xf32>
    %129 = vector.shape_cast %126 : vector<8x17xf32> to vector<1x8x17xf32>
    tpu.vector_store %arg8[%c30, %c0_66, %c0_67], %129 {strides = array<i32>} : memref<35x8x17xf32, #tpu.memory_space<vmem>>, vector<1x8x17xf32>,
    %130 = vector.extract_strided_slice %5 {offsets = [0, 527], sizes = [8, 17], strides = [1, 1]} : vector<8x595xf32> to vector<8x17xf32>
    %c31 = arith.constant 31 : index
    %c0_68 = arith.constant 0 : index
    %c0_69 = arith.constant 0 : index
    %131 = vector.load %arg8[%c31, %c0_68, %c0_69] : memref<35x8x17xf32, #tpu.memory_space<vmem>>, vector<1x8x17xf32>
    %132 = vector.shape_cast %131 : vector<1x8x17xf32> to vector<8x17xf32>
    %133 = vector.shape_cast %130 : vector<8x17xf32> to vector<1x8x17xf32>
    tpu.vector_store %arg8[%c31, %c0_68, %c0_69], %133 {strides = array<i32>} : memref<35x8x17xf32, #tpu.memory_space<vmem>>, vector<1x8x17xf32>,
    %134 = vector.extract_strided_slice %5 {offsets = [0, 544], sizes = [8, 17], strides = [1, 1]} : vector<8x595xf32> to vector<8x17xf32>
    %c32 = arith.constant 32 : index
    %c0_70 = arith.constant 0 : index
    %c0_71 = arith.constant 0 : index
    %135 = vector.load %arg8[%c32, %c0_70, %c0_71] : memref<35x8x17xf32, #tpu.memory_space<vmem>>, vector<1x8x17xf32>
    %136 = vector.shape_cast %135 : vector<1x8x17xf32> to vector<8x17xf32>
    %137 = vector.shape_cast %134 : vector<8x17xf32> to vector<1x8x17xf32>
    tpu.vector_store %arg8[%c32, %c0_70, %c0_71], %137 {strides = array<i32>} : memref<35x8x17xf32, #tpu.memory_space<vmem>>, vector<1x8x17xf32>,
    %138 = vector.extract_strided_slice %5 {offsets = [0, 561], sizes = [8, 17], strides = [1, 1]} : vector<8x595xf32> to vector<8x17xf32>
    %c33 = arith.constant 33 : index
    %c0_72 = arith.constant 0 : index
    %c0_73 = arith.constant 0 : index
    %139 = vector.load %arg8[%c33, %c0_72, %c0_73] : memref<35x8x17xf32, #tpu.memory_space<vmem>>, vector<1x8x17xf32>
    %140 = vector.shape_cast %139 : vector<1x8x17xf32> to vector<8x17xf32>
    %141 = vector.shape_cast %138 : vector<8x17xf32> to vector<1x8x17xf32>
    tpu.vector_store %arg8[%c33, %c0_72, %c0_73], %141 {strides = array<i32>} : memref<35x8x17xf32, #tpu.memory_space<vmem>>, vector<1x8x17xf32>,
    %142 = vector.extract_strided_slice %5 {offsets = [0, 578], sizes = [8, 17], strides = [1, 1]} : vector<8x595xf32> to vector<8x17xf32>
    %c34 = arith.constant 34 : index
    %c0_74 = arith.constant 0 : index
    %c0_75 = arith.constant 0 : index
    %143 = vector.load %arg8[%c34, %c0_74, %c0_75] : memref<35x8x17xf32, #tpu.memory_space<vmem>>, vector<1x8x17xf32>
    %144 = vector.shape_cast %143 : vector<1x8x17xf32> to vector<8x17xf32>
    %145 = vector.shape_cast %142 : vector<8x17xf32> to vector<1x8x17xf32>
    tpu.vector_store %arg8[%c34, %c0_74, %c0_75], %145 {strides = array<i32>} : memref<35x8x17xf32, #tpu.memory_space<vmem>>, vector<1x8x17xf32>,
    %c0_76 = arith.constant 0 : index
    %c0_77 = arith.constant 0 : index
    %c0_78 = arith.constant 0 : index
    %146 = vector.load %arg8[%c0_76, %c0_77, %c0_78] : memref<35x8x17xf32, #tpu.memory_space<vmem>>, vector<35x8x17xf32>
    %cst_79 = arith.constant dense<0xFF800000> : vector<35x8xf32>
    %147 = vector.multi_reduction <maximumf>, %146, %cst_79 [2] : vector<35x8x17xf32> to vector<35x8xf32>
    %148 = vector.shape_cast %147 : vector<35x8xf32> to vector<35x8x1xf32>
    %149 = vector.broadcast %148 : vector<35x8x1xf32> to vector<35x8x17xf32>
    %150 = arith.subf %146, %149 : vector<35x8x17xf32>
    %151 = math.exp %150 : vector<35x8x17xf32>
    %cst_80 = arith.constant dense<0.000000e+00> : vector<35x8xf32>
    %152 = vector.multi_reduction <add>, %151, %cst_80 [2] : vector<35x8x17xf32> to vector<35x8xf32>
    %153 = vector.shape_cast %152 : vector<35x8xf32> to vector<35x8x1xf32>
    %154 = tpu.reciprocal %153 : vector<35x8x1xf32> -> vector<35x8x1xf32>
    %155 = vector.broadcast %154 : vector<35x8x1xf32> to vector<35x8x17xf32>
    %156 = arith.mulf %151, %155 : vector<35x8x17xf32>
    %157 = arith.truncf %156 : vector<35x8x17xf32> to vector<35x8x17xbf16>
    %c0_81 = arith.constant 0 : index
    %c0_82 = arith.constant 0 : index
    %c0_83 = arith.constant 0 : index
    %158 = vector.load %arg3[%c0_81, %c0_82, %c0_83] : memref<35x17x64xbf16, #tpu.memory_space<vmem>>, vector<35x17x64xbf16>
    %cst_84 = arith.constant dense<0.000000e+00> : vector<35x8x64xf32>
    %159 = tpu.matmul %157, %158, %cst_84 {dimension_numbers = #tpu.dot_dimension_numbers<[2], [1], [1], [2], [0, 0, 0, 1, 1, 2], [0], [0]>} : vector<35x8x17xbf16>, vector<35x17x64xbf16>, vector<35x8x64xf32> -> vector<35x8x64xf32>
    %cst_85 = arith.constant dense<0.000000e+00> : vector<35x8xf32>
    %160 = vector.multi_reduction <add>, %159, %cst_85 [2] : vector<35x8x64xf32> to vector<35x8xf32>
    %161 = vector.shape_cast %160 : vector<35x8xf32> to vector<35x8x1xf32>
    %cst_86 = arith.constant 6.400000e+01 : f32
    %162 = vector.broadcast %cst_86 : f32 to vector<35x8x1xf32>
    %163 = arith.divf %161, %162 : vector<35x8x1xf32>
    %164 = vector.broadcast %163 : vector<35x8x1xf32> to vector<35x8x64xf32>
    %165 = arith.subf %159, %164 : vector<35x8x64xf32>
    %166 = arith.mulf %165, %165 : vector<35x8x64xf32>
    %cst_87 = arith.constant dense<0.000000e+00> : vector<35x8xf32>
    %167 = vector.multi_reduction <add>, %166, %cst_87 [2] : vector<35x8x64xf32> to vector<35x8xf32>
    %168 = vector.shape_cast %167 : vector<35x8xf32> to vector<35x8x1xf32>
    %cst_88 = arith.constant 6.400000e+01 : f32
    %169 = vector.broadcast %cst_88 : f32 to vector<35x8x1xf32>
    %170 = arith.divf %168, %169 : vector<35x8x1xf32>
    %cst_89 = arith.constant 9.99999974E-6 : f32
    %171 = vector.broadcast %cst_89 : f32 to vector<35x8x1xf32>
    %172 = arith.addf %170, %171 : vector<35x8x1xf32>
    %173 = math.rsqrt %172 : vector<35x8x1xf32>
    %174 = vector.broadcast %173 : vector<35x8x1xf32> to vector<35x8x64xf32>
    %175 = arith.mulf %165, %174 : vector<35x8x64xf32>
    %c0_90 = arith.constant 0 : index
    %c0_91 = arith.constant 0 : index
    %176 = vector.load %arg4[%c0_90, %c0_91] : memref<1x64xf32, #tpu.memory_space<vmem>>, vector<1x64xf32>
    %177 = vector.shape_cast %176 : vector<1x64xf32> to vector<1x1x64xf32>
    %178 = vector.broadcast %177 : vector<1x1x64xf32> to vector<35x8x64xf32>
    %179 = arith.mulf %175, %178 : vector<35x8x64xf32>
    %c0_92 = arith.constant 0 : index
    %c0_93 = arith.constant 0 : index
    %180 = vector.load %arg5[%c0_92, %c0_93] : memref<1x64xf32, #tpu.memory_space<vmem>>, vector<1x64xf32>
    %181 = vector.shape_cast %180 : vector<1x64xf32> to vector<1x1x64xf32>
    %182 = vector.broadcast %181 : vector<1x1x64xf32> to vector<35x8x64xf32>
    %183 = arith.addf %179, %182 : vector<35x8x64xf32>
    %184 = tpu.transpose %183, [1, 0, 2] : vector<35x8x64xf32> -> vector<8x35x64xf32>
    %185 = arith.mulf %184, %184 : vector<8x35x64xf32>
    %cst_94 = arith.constant dense<0.000000e+00> : vector<8x35xf32>
    %186 = vector.multi_reduction <add>, %185, %cst_94 [2] : vector<8x35x64xf32> to vector<8x35xf32>
    %cst_95 = arith.constant 1.000000e-24 : f32
    %187 = vector.broadcast %cst_95 : f32 to vector<8x35xf32>
    %188 = arith.maximumf %186, %187 : vector<8x35xf32>
    %189 = math.rsqrt %188 : vector<8x35xf32>
    %190 = arith.truncf %184 : vector<8x35x64xf32> to vector<8x35x64xbf16>
    %c0_96 = arith.constant 0 : index
    %c0_97 = arith.constant 0 : index
    %191 = vector.load %arg6[%c0_96, %c0_97] : memref<5x35xbf16, #tpu.memory_space<vmem>>, vector<5x35xbf16>
    %192 = vector.shape_cast %191 : vector<5x35xbf16> to vector<1x5x35xbf16>
    %193 = vector.shape_cast %192 : vector<1x5x35xbf16> to vector<1x5x35xbf16>
    %194 = vector.broadcast %193 : vector<1x5x35xbf16> to vector<8x5x35xbf16>
    %cst_98 = arith.constant dense<0.000000e+00> : vector<8x5x64xf32>
    %195 = tpu.matmul %194, %190, %cst_98 {dimension_numbers = #tpu.dot_dimension_numbers<[2], [1], [1], [2], [0, 0, 0, 1, 1, 2], [0], [0]>} : vector<8x5x35xbf16>, vector<8x35x64xbf16>, vector<8x5x64xf32> -> vector<8x5x64xf32>
    %196 = arith.mulf %195, %195 : vector<8x5x64xf32>
    %cst_99 = arith.constant dense<0.000000e+00> : vector<8x5xf32>
    %197 = vector.multi_reduction <add>, %196, %cst_99 [2] : vector<8x5x64xf32> to vector<8x5xf32>
    %cst_100 = arith.constant 1.000000e-24 : f32
    %198 = vector.broadcast %cst_100 : f32 to vector<8x5xf32>
    %199 = arith.maximumf %197, %198 : vector<8x5xf32>
    %200 = math.rsqrt %199 : vector<8x5xf32>
    %201 = arith.truncf %195 : vector<8x5x64xf32> to vector<8x5x64xbf16>
    %cst_101 = arith.constant dense<0.000000e+00> : vector<8x5x35xf32>
    %202 = tpu.matmul %201, %190, %cst_101 {dimension_numbers = #tpu.dot_dimension_numbers<[2], [2], [1], [1], [0, 0, 0, 1, 1, 1], [0], [0]>} : vector<8x5x64xbf16>, vector<8x35x64xbf16>, vector<8x5x35xf32> -> vector<8x5x35xf32>
    %203 = vector.shape_cast %200 : vector<8x5xf32> to vector<8x5x1xf32>
    %204 = vector.broadcast %203 : vector<8x5x1xf32> to vector<8x5x35xf32>
    %205 = arith.mulf %202, %204 : vector<8x5x35xf32>
    %206 = vector.shape_cast %189 : vector<8x35xf32> to vector<8x1x35xf32>
    %207 = vector.broadcast %206 : vector<8x1x35xf32> to vector<8x5x35xf32>
    %208 = arith.mulf %205, %207 : vector<8x5x35xf32>
    %c0_102 = arith.constant 0 : index
    %c0_103 = arith.constant 0 : index
    %c0_104 = arith.constant 0 : index
    %c0_105 = arith.constant 0 : index
    %209 = vector.load %arg7[%c0_102, %c0_103, %c0_104, %c0_105] : memref<1x8x5x35xf32, #tpu.memory_space<vmem>>, vector<1x8x5x35xf32>
    %210 = vector.shape_cast %209 : vector<1x8x5x35xf32> to vector<8x5x35xf32>
    %211 = vector.shape_cast %208 : vector<8x5x35xf32> to vector<1x8x5x35xf32>
    tpu.vector_store %arg7[%c0_102, %c0_103, %c0_104, %c0_105], %211 {strides = array<i32>} : memref<1x8x5x35xf32, #tpu.memory_space<vmem>>, vector<1x8x5x35xf32>,
    return
  }
  func.func @transform_0(%arg0: i32) -> (i32, i32, i32) {
    %c0_i32 = arith.constant 0 : i32
    %c0_i32_0 = arith.constant 0 : i32
    %c0_i32_1 = arith.constant 0 : i32
    return %arg0, %c0_i32, %c0_i32_0 : i32, i32, i32
  }
  func.func @transform_1(%arg0: i32) -> (i32, i32) {
    %c0_i32 = arith.constant 0 : i32
    %c0_i32_0 = arith.constant 0 : i32
    %c0_i32_1 = arith.constant 0 : i32
    return %c0_i32, %c0_i32_0 : i32, i32
  }
  func.func @transform_2(%arg0: i32) -> (i32, i32, i32) {
    %c0_i32 = arith.constant 0 : i32
    %c0_i32_0 = arith.constant 0 : i32
    %c0_i32_1 = arith.constant 0 : i32
    %c0_i32_2 = arith.constant 0 : i32
    return %c0_i32, %c0_i32_0, %c0_i32_1 : i32, i32, i32
  }
  func.func @transform_3(%arg0: i32) -> (i32, i32) {
    %c0_i32 = arith.constant 0 : i32
    %c0_i32_0 = arith.constant 0 : i32
    %c0_i32_1 = arith.constant 0 : i32
    return %c0_i32, %c0_i32_0 : i32, i32
  }
  func.func @transform_4(%arg0: i32) -> (i32, i32) {
    %c0_i32 = arith.constant 0 : i32
    %c0_i32_0 = arith.constant 0 : i32
    %c0_i32_1 = arith.constant 0 : i32
    return %c0_i32, %c0_i32_0 : i32, i32
  }
  func.func @transform_5(%arg0: i32) -> (i32, i32) {
    %c0_i32 = arith.constant 0 : i32
    %c0_i32_0 = arith.constant 0 : i32
    %c0_i32_1 = arith.constant 0 : i32
    return %c0_i32, %c0_i32_0 : i32, i32
  }
  func.func @transform_6(%arg0: i32) -> (i32, i32, i32, i32) {
    %c0_i32 = arith.constant 0 : i32
    %c0_i32_0 = arith.constant 0 : i32
    %c0_i32_1 = arith.constant 0 : i32
    %c0_i32_2 = arith.constant 0 : i32
    return %arg0, %c0_i32, %c0_i32_0, %c0_i32_1 : i32, i32, i32, i32
  }
}

</mosaic_0001>

<llo_original>
// kernel: _setfsl_loss_and_dist.1
$region0: #{_setfsl_loss_and_dist.1}
  #allocation0 [shape = 'u32[]', space=smem, size = 0x4, offset = 0x4, fixed_abs, tag = 'smem constant byte address 0x4 - core index']
  #allocation1 [shape = 'u32[144,128]{1,0:T(1,128)}', space=vmem, size = 0x12000, scoped, tag = 'internal scratch']
  #allocation2 [shape = 'f32[35,8,17]{2,1,0:T(8,128)}', space=vmem, size = 0x23000, scoped, tag = 'scratch operand']
  %s0 = inlined_call_operand.vmem [shape: bf16[1,8,64], index: 0, kind: input, shape index: {}]
  %s1 = inlined_call_operand.vmem [shape: bf16[64,595], index: 1, kind: input, shape index: {}]
  %s2 = inlined_call_operand.vmem [shape: bf16[35,17,64], index: 2, kind: input, shape index: {}]
  %s3 = inlined_call_operand.vmem [shape: f32[1,64], index: 3, kind: input, shape index: {}]
  %s4 = inlined_call_operand.vmem [shape: f32[1,64], index: 4, kind: input, shape index: {}]
  %s5 = inlined_call_operand.vmem [shape: bf16[5,35], index: 5, kind: input, shape index: {}]
  %s6 = inlined_call_operand.vmem [shape: f32[1,8,5,35], index: 6, kind: output, shape index: {}]
  %s7 = sld [smem:[#allocation0]]
  $region34: #{_setfsl_loss_and_dist.1} parent=0
    _
  %s9 = ssub.s32 1, %s7
  %s10 = scalar_select 0, %s9, %s7
  // Predicated region
  $region2: #{_setfsl_loss_and_dist.1} parent=0 // pred_check
    _
  $region3: #{_setfsl_loss_and_dist.1} parent=0 // pred_check_branch
    %12 = sbr.rel (0) target = $region5
  $region4: #{_setfsl_loss_and_dist.1} parent=0 // pred_region
    _
  $region5: #{_setfsl_loss_and_dist.1} parent=0 // pred_fallthru
    _
  // Predicated region
  $region6: #{_setfsl_loss_and_dist.1} parent=0 // pred_check
    _
  $region7: #{_setfsl_loss_and_dist.1} parent=0 // pred_check_branch
    %14 = sbr.rel (0) target = $region9
  $region8: #{_setfsl_loss_and_dist.1} parent=0 // pred_region
    _
  $region9: #{_setfsl_loss_and_dist.1} parent=0 // pred_fallthru
    _
  // Predicated region
  $region10: #{_setfsl_loss_and_dist.1} parent=0 // pred_check
    _
  $region11: #{_setfsl_loss_and_dist.1} parent=0 // pred_check_branch
    %16 = sbr.rel (0) target = $region13
  $region12: #{_setfsl_loss_and_dist.1} parent=0 // pred_region
    _
  $region13: #{_setfsl_loss_and_dist.1} parent=0 // pred_fallthru
    _
  // Predicated region
  $region14: #{_setfsl_loss_and_dist.1} parent=0 // pred_check
    _
  $region15: #{_setfsl_loss_and_dist.1} parent=0 // pred_check_branch
    %18 = sbr.rel (0) target = $region17
  $region16: #{_setfsl_loss_and_dist.1} parent=0 // pred_region
    _
  $region17: #{_setfsl_loss_and_dist.1} parent=0 // pred_fallthru
    _
  // Predicated region
  $region18: #{_setfsl_loss_and_dist.1} parent=0 // pred_check
    _
  $region19: #{_setfsl_loss_and_dist.1} parent=0 // pred_check_branch
    %20 = sbr.rel (0) target = $region21
  $region20: #{_setfsl_loss_and_dist.1} parent=0 // pred_region
    _
  $region21: #{_setfsl_loss_and_dist.1} parent=0 // pred_fallthru
    _
  // Predicated region
  $region22: #{_setfsl_loss_and_dist.1} parent=0 // pred_check
    _
  $region23: #{_setfsl_loss_and_dist.1} parent=0 // pred_check_branch
    %22 = sbr.rel (0) target = $region25
  $region24: #{_setfsl_loss_and_dist.1} parent=0 // pred_region
    _
  $region25: #{_setfsl_loss_and_dist.1} parent=0 // pred_fallthru
    _
  %v24 = vld [vmem:[%s0] sm:$0xf]
  %v25 = vld [vmem:[%s1] sm:$0xff]
  %v26 = vld [vmem:[%s1 + $0x8] sm:$0xff]
  %v27 = vld [vmem:[%s1 + $0x10] sm:$0xf]
  %v28 = vld [vmem:[%s1 + $0x14] sm:$0xff]
  %v29 = vld [vmem:[%s1 + $0x1c] sm:$0xff]
  %v30 = vld [vmem:[%s1 + $0x24] sm:$0xf]
  %v31 = vld [vmem:[%s1 + $0x28] sm:$0xff]
  %v32 = vld [vmem:[%s1 + $0x30] sm:$0xff]
  %v33 = vld [vmem:[%s1 + $0x38] sm:$0xf]
  %v34 = vld [vmem:[%s1 + $0x3c] sm:$0xff]
  %v35 = vld [vmem:[%s1 + $0x44] sm:$0xff]
  %v36 = vld [vmem:[%s1 + $0x4c] sm:$0xf]
  %v37 = vld [vmem:[%s1 + $0x50] sm:$0xff]
  %v38 = vld [vmem:[%s1 + $0x58] sm:$0xff]
  %v39 = vld [vmem:[%s1 + $0x60] sm:$0xf]
  %v40 = vld [vmem:[%s1 + $0x64] sm:$0xff]
  %v41 = vld [vmem:[%s1 + $0x6c] sm:$0xff]
  %v42 = vld [vmem:[%s1 + $0x74] sm:$0xf]
  %v43 = vld [vmem:[%s1 + $0x78] sm:$0xff]
  %v44 = vld [vmem:[%s1 + $0x80] sm:$0xff]
  %v45 = vld [vmem:[%s1 + $0x88] sm:$0xf]
  %v46 = vld [vmem:[%s1 + $0x8c] sm:$0xff]
  %v47 = vld [vmem:[%s1 + $0x94] sm:$0xff]
  %v48 = vld [vmem:[%s1 + $0x9c] sm:$0xf]
  %v73 = vunpack.c.l.b16 %v25
  %v74 = vunpack.c.h.b16 %v25
  %v75 = vunpack.c.l.b16 %v26
  %v76 = vunpack.c.h.b16 %v26
  %v77 = vunpack.c.l.b16 %v27
  %v78 = vunpack.c.l.b16 %v28
  %v79 = vunpack.c.h.b16 %v28
  %v80 = vunpack.c.l.b16 %v29
  %v81 = vunpack.c.h.b16 %v29
  %v82 = vunpack.c.l.b16 %v30
  %v83 = vunpack.c.l.b16 %v31
  %v84 = vunpack.c.h.b16 %v31
  %v85 = vunpack.c.l.b16 %v32
  %v86 = vunpack.c.h.b16 %v32
  %v87 = vunpack.c.l.b16 %v33
  %v88 = vunpack.c.l.b16 %v34
  %v89 = vunpack.c.h.b16 %v34
  %v90 = vunpack.c.l.b16 %v35
  %v91 = vunpack.c.h.b16 %v35
  %v92 = vunpack.c.l.b16 %v36
  %v93 = vunpack.c.l.b16 %v37
  %v94 = vunpack.c.h.b16 %v37
  %v95 = vunpack.c.l.b16 %v38
  %v96 = vunpack.c.h.b16 %v38
  %v97 = vunpack.c.l.b16 %v39
  %v98 = vunpack.c.l.b16 %v40
  %v99 = vunpack.c.h.b16 %v40
  %v100 = vunpack.c.l.b16 %v41
  %v101 = vunpack.c.h.b16 %v41
  %v102 = vunpack.c.l.b16 %v42
  %v103 = vunpack.c.l.b16 %v43
  %v104 = vunpack.c.h.b16 %v43
  %v105 = vunpack.c.l.b16 %v44
  %v106 = vunpack.c.h.b16 %v44
  %v107 = vunpack.c.l.b16 %v45
  %v108 = vunpack.c.l.b16 %v46
  %v109 = vunpack.c.h.b16 %v46
  %v110 = vunpack.c.l.b16 %v47
  %v111 = vunpack.c.h.b16 %v47
  %v112 = vunpack.c.l.b16 %v48
  %v113 = vpack.c.b16 %v78, %v73
  %v114 = vpack.c.b16 %v79, %v74
  %v115 = vpack.c.b16 %v80, %v75
  %v116 = vpack.c.b16 %v81, %v76
  %v117 = vpack.c.b16 %v82, %v77
  %v118 = vpack.c.b16 %v88, %v83
  %v119 = vpack.c.b16 %v89, %v84
  %v120 = vpack.c.b16 %v90, %v85
  %v121 = vpack.c.b16 %v91, %v86
  %v122 = vpack.c.b16 %v92, %v87
  %v123 = vpack.c.b16 %v98, %v93
  %v124 = vpack.c.b16 %v99, %v94
  %v125 = vpack.c.b16 %v100, %v95
  %v126 = vpack.c.b16 %v101, %v96
  %v127 = vpack.c.b16 %v102, %v97
  %v128 = vpack.c.b16 %v108, %v103
  %v129 = vpack.c.b16 %v109, %v104
  %v130 = vpack.c.b16 %v110, %v105
  %v131 = vpack.c.b16 %v111, %v106
  %v132 = vpack.c.b16 %v112, %v107
  %vm153 = vcmask 523264
  %v155 = vsel %vm153, %v24, 0
  %157 = vmatprep.subr.bf16.mxu0 %v114
  %158 = vmatpush1.bf16.msra.mxu0 %v113
  %159 = vmatprep.subr.bf16.mxu0 %v119
  %160 = vmatpush1.bf16.msra.mxu0 %v118
  %161 = vmatprep.subr.bf16.mxu0 %v124
  %162 = vmatpush1.bf16.msra.mxu0 %v123
  %163 = vmatprep.subr.bf16.mxu0 %v129
  %164 = vmatpush1.bf16.msra.mxu0 %v128
  %165 = vmatprep.subr.bf16.mxu0 0
  %166 = vmatpush1.bf16.msra.mxu0 0
  %167 = vmatprep.subr.bf16.mxu0 0
  %168 = vmatpush1.bf16.msra.mxu0 0
  %169 = vmatprep.subr.bf16.mxu0 0
  %170 = vmatpush1.bf16.msra.mxu0 0
  %171 = vmatprep.subr.bf16.mxu0 0
  %172 = vmatpush1.bf16.msra.mxu0 0
  %173 = vmatprep.subr.bf16.mxu0 0
  %174 = vmatpush1.bf16.msra.mxu0 0
  %175 = vmatprep.subr.bf16.mxu0 0
  %176 = vmatpush1.bf16.msra.mxu0 0
  %177 = vmatprep.subr.bf16.mxu0 0
  %178 = vmatpush1.bf16.msra.mxu0 0
  %179 = vmatprep.subr.bf16.mxu0 0
  %180 = vmatpush1.bf16.msra.mxu0 0
  %181 = vmatprep.subr.bf16.mxu0 0
  %182 = vmatpush1.bf16.msra.mxu0 0
  %183 = vmatprep.subr.bf16.mxu0 0
  %184 = vmatpush1.bf16.msra.mxu0 0
  %185 = vmatprep.subr.bf16.mxu0 0
  %186 = vmatpush1.bf16.msra.mxu0 0
  %187 = vmatprep.subr.bf16.mxu0 0
  %188 = vmatpush1.bf16.msra.mxu0 0
  %189 = vmatprep.mubr.bf16.mxu0 0
  %190 = vmatmul.mubr.bf16.gmra.mrb[0].mxu0 %v155
  %v191 = vpop.f32.mrb[0].mxu0
  %v192 = vadd.f32 0.0, %v191
  %v193 = vpop.f32.mrb[0].mxu0
  %v194 = vadd.f32 0.0, %v193
  %v195 = vpop.f32.mrb[0].mxu0
  %v196 = vpop.f32.mrb[0].mxu0
  %197 = vdwg.mxu0
  %198 = vmatprep.subr.bf16.mxu0 %v116
  %199 = vmatpush1.bf16.msra.mxu0 %v115
  %200 = vmatprep.subr.bf16.mxu0 %v121
  %201 = vmatpush1.bf16.msra.mxu0 %v120
  %202 = vmatprep.subr.bf16.mxu0 %v126
  %203 = vmatpush1.bf16.msra.mxu0 %v125
  %204 = vmatprep.subr.bf16.mxu0 %v131
  %205 = vmatpush1.bf16.msra.mxu0 %v130
  %206 = vmatprep.subr.bf16.mxu0 0
  %207 = vmatpush1.bf16.msra.mxu0 0
  %208 = vmatprep.subr.bf16.mxu0 0
  %209 = vmatpush1.bf16.msra.mxu0 0
  %210 = vmatprep.subr.bf16.mxu0 0
  %211 = vmatpush1.bf16.msra.mxu0 0
  %212 = vmatprep.subr.bf16.mxu0 0
  %213 = vmatpush1.bf16.msra.mxu0 0
  %214 = vmatprep.subr.bf16.mxu0 0
  %215 = vmatpush1.bf16.msra.mxu0 0
  %216 = vmatprep.subr.bf16.mxu0 0
  %217 = vmatpush1.bf16.msra.mxu0 0
  %218 = vmatprep.subr.bf16.mxu0 0
  %219 = vmatpush1.bf16.msra.mxu0 0
  %220 = vmatprep.subr.bf16.mxu0 0
  %221 = vmatpush1.bf16.msra.mxu0 0
  %222 = vmatprep.subr.bf16.mxu0 0
  %223 = vmatpush1.bf16.msra.mxu0 0
  %224 = vmatprep.subr.bf16.mxu0 0
  %225 = vmatpush1.bf16.msra.mxu0 0
  %226 = vmatprep.subr.bf16.mxu0 0
  %227 = vmatpush1.bf16.msra.mxu0 0
  %228 = vmatprep.subr.bf16.mxu0 0
  %229 = vmatpush1.bf16.msra.mxu0 0
  %230 = vmatprep.mubr.bf16.mxu0 0
  %231 = vmatmul.mubr.bf16.gmra.mrb[0].mxu0 %v155
  %v232 = vpop.f32.mrb[0].mxu0
  %v233 = vadd.f32 0.0, %v232
  %v234 = vpop.f32.mrb[0].mxu0
  %v235 = vadd.f32 0.0, %v234
  %v236 = vpop.f32.mrb[0].mxu0
  %v237 = vpop.f32.mrb[0].mxu0
  %238 = vdwg.mxu0
  %239 = vmatprep.subr.bf16.mxu0 0
  %240 = vmatpush1.bf16.msra.mxu0 %v117
  %241 = vmatprep.subr.bf16.mxu0 0
  %242 = vmatpush1.bf16.msra.mxu0 %v122
  %243 = vmatprep.subr.bf16.mxu0 0
  %244 = vmatpush1.bf16.msra.mxu0 %v127
  %245 = vmatprep.subr.bf16.mxu0 0
  %246 = vmatpush1.bf16.msra.mxu0 %v132
  %247 = vmatprep.subr.bf16.mxu0 0
  %248 = vmatpush1.bf16.msra.mxu0 0
  %249 = vmatprep.subr.bf16.mxu0 0
  %250 = vmatpush1.bf16.msra.mxu0 0
  %251 = vmatprep.subr.bf16.mxu0 0
  %252 = vmatpush1.bf16.msra.mxu0 0
  %253 = vmatprep.subr.bf16.mxu0 0
  %254 = vmatpush1.bf16.msra.mxu0 0
  %255 = vmatprep.subr.bf16.mxu0 0
  %256 = vmatpush1.bf16.msra.mxu0 0
  %257 = vmatprep.subr.bf16.mxu0 0
  %258 = vmatpush1.bf16.msra.mxu0 0
  %259 = vmatprep.subr.bf16.mxu0 0
  %260 = vmatpush1.bf16.msra.mxu0 0
  %261 = vmatprep.subr.bf16.mxu0 0
  %262 = vmatpush1.bf16.msra.mxu0 0
  %263 = vmatprep.subr.bf16.mxu0 0
  %264 = vmatpush1.bf16.msra.mxu0 0
  %265 = vmatprep.subr.bf16.mxu0 0
  %266 = vmatpush1.bf16.msra.mxu0 0
  %267 = vmatprep.subr.bf16.mxu0 0
  %268 = vmatpush1.bf16.msra.mxu0 0
  %269 = vmatprep.subr.bf16.mxu0 0
  %270 = vmatpush1.bf16.msra.mxu0 0
  %271 = vmatprep.mubr.bf16.mxu0 0
  %272 = vmatmul.mubr.bf16.gmra.mrb[0].mxu0 %v155
  %v273 = vpop.f32.mrb[0].mxu0
  %v274 = vadd.f32 0.0, %v273
  %v275 = vpop.f32.mrb[0].mxu0
  %v276 = vpop.f32.mrb[0].mxu0
  %v277 = vpop.f32.mrb[0].mxu0
  %278 = vdwg.mxu0
  %v279 = vmul.f32 %v192, 0.125
  %v280 = vmul.f32 %v194, 0.125
  %v281 = vmul.f32 %v233, 0.125
  %v282 = vmul.f32 %v235, 0.125
  %v283 = vmul.f32 %v274, 0.125
  %vm284 = vcmask 138240
  %285 = vst.msk [vmem:[#allocation2] sm:$0xff] %vm284, %v279
  %287 = vrot.lane.b32.xlu0 %v279, 111
  %v288 = vpop.permute.xlu0 %287
  %s290 = scalar_lea.vmem [#allocation2], 8
  %291 = vst.msk [vmem:[%s290] sm:$0xff] %vm284, %v288
  %292 = vrot.lane.b32.xlu0 %v279, 94
  %v293 = vpop.permute.xlu0 %292
  %s295 = scalar_lea.vmem [#allocation2], 16
  %296 = vst.msk [vmem:[%s295] sm:$0xff] %vm284, %v293
  %297 = vrot.lane.b32.xlu0 %v279, 77
  %v298 = vpop.permute.xlu0 %297
  %s300 = scalar_lea.vmem [#allocation2], 24
  %301 = vst.msk [vmem:[%s300] sm:$0xff] %vm284, %v298
  %302 = vrot.lane.b32.xlu0 %v279, 60
  %v303 = vpop.permute.xlu0 %302
  %s305 = scalar_lea.vmem [#allocation2], 32
  %306 = vst.msk [vmem:[%s305] sm:$0xff] %vm284, %v303
  %307 = vrot.lane.b32.xlu0 %v279, 43
  %v308 = vpop.permute.xlu0 %307
  %s310 = scalar_lea.vmem [#allocation2], 40
  %311 = vst.msk [vmem:[%s310] sm:$0xff] %vm284, %v308
  %312 = vrot.lane.b32.xlu0 %v279, 26
  %v313 = vpop.permute.xlu0 %312
  %s315 = scalar_lea.vmem [#allocation2], 48
  %316 = vst.msk [vmem:[%s315] sm:$0xff] %vm284, %v313
  %318 = vrot.lane.b32.xlu0 %v279, 9
  %v319 = vpop.permute.xlu0 %318
  %320 = vrot.lane.b32.xlu0 %v280, 9
  %v321 = vpop.permute.xlu0 %320
  %vm322 = vcmask 72704
  %v323 = vsel %vm322, %v319, %v321
  %s325 = scalar_lea.vmem [#allocation2], 56
  %326 = vst.msk [vmem:[%s325] sm:$0xff] %vm284, %v323
  %327 = vrot.lane.b32.xlu0 %v280, 120
  %v328 = vpop.permute.xlu0 %327
  %s330 = scalar_lea.vmem [#allocation2], 64
  %331 = vst.msk [vmem:[%s330] sm:$0xff] %vm284, %v328
  %332 = vrot.lane.b32.xlu0 %v280, 103
  %v333 = vpop.permute.xlu0 %332
  %s335 = scalar_lea.vmem [#allocation2], 72
  %336 = vst.msk [vmem:[%s335] sm:$0xff] %vm284, %v333
  %337 = vrot.lane.b32.xlu0 %v280, 86
  %v338 = vpop.permute.xlu0 %337
  %s340 = scalar_lea.vmem [#allocation2], 80
  %341 = vst.msk [vmem:[%s340] sm:$0xff] %vm284, %v338
  %342 = vrot.lane.b32.xlu0 %v280, 69
  %v343 = vpop.permute.xlu0 %342
  %s345 = scalar_lea.vmem [#allocation2], 88
  %346 = vst.msk [vmem:[%s345] sm:$0xff] %vm284, %v343
  %347 = vrot.lane.b32.xlu0 %v280, 52
  %v348 = vpop.permute.xlu0 %347
  %s350 = scalar_lea.vmem [#allocation2], 96
  %351 = vst.msk [vmem:[%s350] sm:$0xff] %vm284, %v348
  %352 = vrot.lane.b32.xlu0 %v280, 35
  %v353 = vpop.permute.xlu0 %352
  %s355 = scalar_lea.vmem [#allocation2], 104
  %356 = vst.msk [vmem:[%s355] sm:$0xff] %vm284, %v353
  %357 = vrot.lane.b32.xlu0 %v280, 18
  %v358 = vpop.permute.xlu0 %357
  %s360 = scalar_lea.vmem [#allocation2], 112
  %361 = vst.msk [vmem:[%s360] sm:$0xff] %vm284, %v358
  %363 = vrot.lane.b32.xlu0 %v280, 1
  %v364 = vpop.permute.xlu0 %363
  %365 = vrot.lane.b32.xlu0 %v281, 1
  %v366 = vpop.permute.xlu0 %365
  %vm367 = vcmask 7168
  %v368 = vsel %vm367, %v364, %v366
  %s370 = scalar_lea.vmem [#allocation2], 120
  %371 = vst.msk [vmem:[%s370] sm:$0xff] %vm284, %v368
  %372 = vrot.lane.b32.xlu0 %v281, 112
  %v373 = vpop.permute.xlu0 %372
  %s375 = scalar_lea.vmem [#allocation2], 128
  %376 = vst.msk [vmem:[%s375] sm:$0xff] %vm284, %v373
  %377 = vrot.lane.b32.xlu0 %v281, 95
  %v378 = vpop.permute.xlu0 %377
  %s380 = scalar_lea.vmem [#allocation2], 136
  %381 = vst.msk [vmem:[%s380] sm:$0xff] %vm284, %v378
  %382 = vrot.lane.b32.xlu0 %v281, 78
  %v383 = vpop.permute.xlu0 %382
  %s385 = scalar_lea.vmem [#allocation2], 144
  %386 = vst.msk [vmem:[%s385] sm:$0xff] %vm284, %v383
  %387 = vrot.lane.b32.xlu0 %v281, 61
  %v388 = vpop.permute.xlu0 %387
  %s390 = scalar_lea.vmem [#allocation2], 152
  %391 = vst.msk [vmem:[%s390] sm:$0xff] %vm284, %v388
  %392 = vrot.lane.b32.xlu0 %v281, 44
  %v393 = vpop.permute.xlu0 %392
  %s395 = scalar_lea.vmem [#allocation2], 160
  %396 = vst.msk [vmem:[%s395] sm:$0xff] %vm284, %v393
  %397 = vrot.lane.b32.xlu0 %v281, 27
  %v398 = vpop.permute.xlu0 %397
  %s400 = scalar_lea.vmem [#allocation2], 168
  %401 = vst.msk [vmem:[%s400] sm:$0xff] %vm284, %v398
  %403 = vrot.lane.b32.xlu0 %v281, 10
  %v404 = vpop.permute.xlu0 %403
  %405 = vrot.lane.b32.xlu0 %v282, 10
  %v406 = vpop.permute.xlu0 %405
  %vm407 = vcmask 80896
  %v408 = vsel %vm407, %v404, %v406
  %s410 = scalar_lea.vmem [#allocation2], 176
  %411 = vst.msk [vmem:[%s410] sm:$0xff] %vm284, %v408
  %412 = vrot.lane.b32.xlu0 %v282, 121
  %v413 = vpop.permute.xlu0 %412
  %s415 = scalar_lea.vmem [#allocation2], 184
  %416 = vst.msk [vmem:[%s415] sm:$0xff] %vm284, %v413
  %417 = vrot.lane.b32.xlu0 %v282, 104
  %v418 = vpop.permute.xlu0 %417
  %s420 = scalar_lea.vmem [#allocation2], 192
  %421 = vst.msk [vmem:[%s420] sm:$0xff] %vm284, %v418
  %422 = vrot.lane.b32.xlu0 %v282, 87
  %v423 = vpop.permute.xlu0 %422
  %s425 = scalar_lea.vmem [#allocation2], 200
  %426 = vst.msk [vmem:[%s425] sm:$0xff] %vm284, %v423
  %427 = vrot.lane.b32.xlu0 %v282, 70
  %v428 = vpop.permute.xlu0 %427
  %s430 = scalar_lea.vmem [#allocation2], 208
  %431 = vst.msk [vmem:[%s430] sm:$0xff] %vm284, %v428
  %432 = vrot.lane.b32.xlu0 %v282, 53
  %v433 = vpop.permute.xlu0 %432
  %s435 = scalar_lea.vmem [#allocation2], 216
  %436 = vst.msk [vmem:[%s435] sm:$0xff] %vm284, %v433
  %437 = vrot.lane.b32.xlu0 %v282, 36
  %v438 = vpop.permute.xlu0 %437
  %s440 = scalar_lea.vmem [#allocation2], 224
  %441 = vst.msk [vmem:[%s440] sm:$0xff] %vm284, %v438
  %442 = vrot.lane.b32.xlu0 %v282, 19
  %v443 = vpop.permute.xlu0 %442
  %s445 = scalar_lea.vmem [#allocation2], 232
  %446 = vst.msk [vmem:[%s445] sm:$0xff] %vm284, %v443
  %448 = vrot.lane.b32.xlu0 %v282, 2
  %v449 = vpop.permute.xlu0 %448
  %450 = vrot.lane.b32.xlu0 %v283, 2
  %v451 = vpop.permute.xlu0 %450
  %vm452 = vcmask 15360
  %v453 = vsel %vm452, %v449, %v451
  %s455 = scalar_lea.vmem [#allocation2], 240
  %456 = vst.msk [vmem:[%s455] sm:$0xff] %vm284, %v453
  %457 = vrot.lane.b32.xlu0 %v283, 113
  %v458 = vpop.permute.xlu0 %457
  %s460 = scalar_lea.vmem [#allocation2], 248
  %461 = vst.msk [vmem:[%s460] sm:$0xff] %vm284, %v458
  %462 = vrot.lane.b32.xlu0 %v283, 96
  %v463 = vpop.permute.xlu0 %462
  %s465 = scalar_lea.vmem [#allocation2], 256
  %466 = vst.msk [vmem:[%s465] sm:$0xff] %vm284, %v463
  %467 = vrot.lane.b32.xlu0 %v283, 79
  %v468 = vpop.permute.xlu0 %467
  %s470 = scalar_lea.vmem [#allocation2], 264
  %471 = vst.msk [vmem:[%s470] sm:$0xff] %vm284, %v468
  %472 = vrot.lane.b32.xlu0 %v283, 62
  %v473 = vpop.permute.xlu0 %472
  %s475 = scalar_lea.vmem [#allocation2], 272
  %476 = vst.msk [vmem:[%s475] sm:$0xff] %vm284, %v473
  %v477 = vld [vmem:[#allocation2] sm:$0xff]
  %v478 = vld [vmem:[#allocation2 + $0x8] sm:$0xff]
  %v479 = vld [vmem:[#allocation2 + $0x10] sm:$0xff]
  %v480 = vld [vmem:[#allocation2 + $0x18] sm:$0xff]
  %v481 = vld [vmem:[#allocation2 + $0x20] sm:$0xff]
  %v482 = vld [vmem:[#allocation2 + $0x28] sm:$0xff]
  %v483 = vld [vmem:[#allocation2 + $0x30] sm:$0xff]
  %v484 = vld [vmem:[#allocation2 + $0x38] sm:$0xff]
  %v485 = vld [vmem:[#allocation2 + $0x40] sm:$0xff]
  %v486 = vld [vmem:[#allocation2 + $0x48] sm:$0xff]
  %v487 = vld [vmem:[#allocation2 + $0x50] sm:$0xff]
  %v488 = vld [vmem:[#allocation2 + $0x58] sm:$0xff]
  %v489 = vld [vmem:[#allocation2 + $0x60] sm:$0xff]
  %v490 = vld [vmem:[#allocation2 + $0x68] sm:$0xff]
  %v491 = vld [vmem:[#allocation2 + $0x70] sm:$0xff]
  %v492 = vld [vmem:[#allocation2 + $0x78] sm:$0xff]
  %v493 = vld [vmem:[#allocation2 + $0x80] sm:$0xff]
  %v494 = vld [vmem:[#allocation2 + $0x88] sm:$0xff]
  %v495 = vld [vmem:[#allocation2 + $0x90] sm:$0xff]
  %v496 = vld [vmem:[#allocation2 + $0x98] sm:$0xff]
  %v497 = vld [vmem:[#allocation2 + $0xa0] sm:$0xff]
  %v498 = vld [vmem:[#allocation2 + $0xa8] sm:$0xff]
  %v499 = vld [vmem:[#allocation2 + $0xb0] sm:$0xff]
  %v500 = vld [vmem:[#allocation2 + $0xb8] sm:$0xff]
  %v501 = vld [vmem:[#allocation2 + $0xc0] sm:$0xff]
  %v502 = vld [vmem:[#allocation2 + $0xc8] sm:$0xff]
  %v503 = vld [vmem:[#allocation2 + $0xd0] sm:$0xff]
  %v504 = vld [vmem:[#allocation2 + $0xd8] sm:$0xff]
  %v505 = vld [vmem:[#allocation2 + $0xe0] sm:$0xff]
  %v506 = vld [vmem:[#allocation2 + $0xe8] sm:$0xff]
  %v507 = vld [vmem:[#allocation2 + $0xf0] sm:$0xff]
  %v508 = vld [vmem:[#allocation2 + $0xf8] sm:$0xff]
  %v509 = vld [vmem:[#allocation2 + $0x100] sm:$0xff]
  %v510 = vld [vmem:[#allocation2 + $0x108] sm:$0xff]
  %v511 = vld [vmem:[#allocation2 + $0x110] sm:$0xff]
  %v512 = vsel %vm284, %v477, -inf
  %513 = vmax.xlane.f32.xlu0 %v512
  %v514 = vpop.xlane.xlu0 %513
  %v515 = vsel %vm284, %v478, -inf
  %516 = vmax.xlane.f32.xlu0 %v515
  %v517 = vpop.xlane.xlu0 %516
  %v518 = vsel %vm284, %v479, -inf
  %519 = vmax.xlane.f32.xlu0 %v518
  %v520 = vpop.xlane.xlu0 %519
  %v521 = vsel %vm284, %v480, -inf
  %522 = vmax.xlane.f32.xlu0 %v521
  %v523 = vpop.xlane.xlu0 %522
  %v524 = vsel %vm284, %v481, -inf
  %525 = vmax.xlane.f32.xlu0 %v524
  %v526 = vpop.xlane.xlu0 %525
  %v527 = vsel %vm284, %v482, -inf
  %528 = vmax.xlane.f32.xlu0 %v527
  %v529 = vpop.xlane.xlu0 %528
  %v530 = vsel %vm284, %v483, -inf
  %531 = vmax.xlane.f32.xlu0 %v530
  %v532 = vpop.xlane.xlu0 %531
  %v533 = vsel %vm284, %v484, -inf
  %534 = vmax.xlane.f32.xlu0 %v533
  %v535 = vpop.xlane.xlu0 %534
  %v536 = vsel %vm284, %v485, -inf
  %537 = vmax.xlane.f32.xlu0 %v536
  %v538 = vpop.xlane.xlu0 %537
  %v539 = vsel %vm284, %v486, -inf
  %540 = vmax.xlane.f32.xlu0 %v539
  %v541 = vpop.xlane.xlu0 %540
  %v542 = vsel %vm284, %v487, -inf
  %543 = vmax.xlane.f32.xlu0 %v542
  %v544 = vpop.xlane.xlu0 %543
  %v545 = vsel %vm284, %v488, -inf
  %546 = vmax.xlane.f32.xlu0 %v545
  %v547 = vpop.xlane.xlu0 %546
  %v548 = vsel %vm284, %v489, -inf
  %549 = vmax.xlane.f32.xlu0 %v548
  %v550 = vpop.xlane.xlu0 %549
  %v551 = vsel %vm284, %v490, -inf
  %552 = vmax.xlane.f32.xlu0 %v551
  %v553 = vpop.xlane.xlu0 %552
  %v554 = vsel %vm284, %v491, -inf
  %555 = vmax.xlane.f32.xlu0 %v554
  %v556 = vpop.xlane.xlu0 %555
  %v557 = vsel %vm284, %v492, -inf
  %558 = vmax.xlane.f32.xlu0 %v557
  %v559 = vpop.xlane.xlu0 %558
  %v560 = vsel %vm284, %v493, -inf
  %561 = vmax.xlane.f32.xlu0 %v560
  %v562 = vpop.xlane.xlu0 %561
  %v563 = vsel %vm284, %v494, -inf
  %564 = vmax.xlane.f32.xlu0 %v563
  %v565 = vpop.xlane.xlu0 %564
  %v566 = vsel %vm284, %v495, -inf
  %567 = vmax.xlane.f32.xlu0 %v566
  %v568 = vpop.xlane.xlu0 %567
  %v569 = vsel %vm284, %v496, -inf
  %570 = vmax.xlane.f32.xlu0 %v569
  %v571 = vpop.xlane.xlu0 %570
  %v572 = vsel %vm284, %v497, -inf
  %573 = vmax.xlane.f32.xlu0 %v572
  %v574 = vpop.xlane.xlu0 %573
  %v575 = vsel %vm284, %v498, -inf
  %576 = vmax.xlane.f32.xlu0 %v575
  %v577 = vpop.xlane.xlu0 %576
  %v578 = vsel %vm284, %v499, -inf
  %579 = vmax.xlane.f32.xlu0 %v578
  %v580 = vpop.xlane.xlu0 %579
  %v581 = vsel %vm284, %v500, -inf
  %582 = vmax.xlane.f32.xlu0 %v581
  %v583 = vpop.xlane.xlu0 %582
  %v584 = vsel %vm284, %v501, -inf
  %585 = vmax.xlane.f32.xlu0 %v584
  %v586 = vpop.xlane.xlu0 %585
  %v587 = vsel %vm284, %v502, -inf
  %588 = vmax.xlane.f32.xlu0 %v587
  %v589 = vpop.xlane.xlu0 %588
  %v590 = vsel %vm284, %v503, -inf
  %591 = vmax.xlane.f32.xlu0 %v590
  %v592 = vpop.xlane.xlu0 %591
  %v593 = vsel %vm284, %v504, -inf
  %594 = vmax.xlane.f32.xlu0 %v593
  %v595 = vpop.xlane.xlu0 %594
  %v596 = vsel %vm284, %v505, -inf
  %597 = vmax.xlane.f32.xlu0 %v596
  %v598 = vpop.xlane.xlu0 %597
  %v599 = vsel %vm284, %v506, -inf
  %600 = vmax.xlane.f32.xlu0 %v599
  %v601 = vpop.xlane.xlu0 %600
  %v602 = vsel %vm284, %v507, -inf
  %603 = vmax.xlane.f32.xlu0 %v602
  %v604 = vpop.xlane.xlu0 %603
  %v605 = vsel %vm284, %v508, -inf
  %606 = vmax.xlane.f32.xlu0 %v605
  %v607 = vpop.xlane.xlu0 %606
  %v608 = vsel %vm284, %v509, -inf
  %609 = vmax.xlane.f32.xlu0 %v608
  %v610 = vpop.xlane.xlu0 %609
  %v611 = vsel %vm284, %v510, -inf
  %612 = vmax.xlane.f32.xlu0 %v611
  %v613 = vpop.xlane.xlu0 %612
  %v614 = vsel %vm284, %v511, -inf
  %615 = vmax.xlane.f32.xlu0 %v614
  %v616 = vpop.xlane.xlu0 %615
  %v617 = vsub.f32 %v477, %v514
  %v618 = vsub.f32 %v478, %v517
  %v619 = vsub.f32 %v479, %v520
  %v620 = vsub.f32 %v480, %v523
  %v621 = vsub.f32 %v481, %v526
  %v622 = vsub.f32 %v482, %v529
  %v623 = vsub.f32 %v483, %v532
  %v624 = vsub.f32 %v484, %v535
  %v625 = vsub.f32 %v485, %v538
  %v626 = vsub.f32 %v486, %v541
  %v627 = vsub.f32 %v487, %v544
  %v628 = vsub.f32 %v488, %v547
  %v629 = vsub.f32 %v489, %v550
  %v630 = vsub.f32 %v490, %v553
  %v631 = vsub.f32 %v491, %v556
  %v632 = vsub.f32 %v492, %v559
  %v633 = vsub.f32 %v493, %v562
  %v634 = vsub.f32 %v494, %v565
  %v635 = vsub.f32 %v495, %v568
  %v636 = vsub.f32 %v496, %v571
  %v637 = vsub.f32 %v497, %v574
  %v638 = vsub.f32 %v498, %v577
  %v639 = vsub.f32 %v499, %v580
  %v640 = vsub.f32 %v500, %v583
  %v641 = vsub.f32 %v501, %v586
  %v642 = vsub.f32 %v502, %v589
  %v643 = vsub.f32 %v503, %v592
  %v644 = vsub.f32 %v504, %v595
  %v645 = vsub.f32 %v505, %v598
  %v646 = vsub.f32 %v506, %v601
  %v647 = vsub.f32 %v507, %v604
  %v648 = vsub.f32 %v508, %v607
  %v649 = vsub.f32 %v509, %v610
  %v650 = vsub.f32 %v510, %v613
  %v651 = vsub.f32 %v511, %v616
  %v652 = vmul.f32 %v617, 1.442695
  %v653 = vpow.pop %v652
  %v654 = vmul.f32 %v618, 1.442695
  %v655 = vpow.pop %v654
  %v656 = vmul.f32 %v619, 1.442695
  %v657 = vpow.pop %v656
  %v658 = vmul.f32 %v620, 1.442695
  %v659 = vpow.pop %v658
  %v660 = vmul.f32 %v621, 1.442695
  %v661 = vpow.pop %v660
  %v662 = vmul.f32 %v622, 1.442695
  %v663 = vpow.pop %v662
  %v664 = vmul.f32 %v623, 1.442695
  %v665 = vpow.pop %v664
  %v666 = vmul.f32 %v624, 1.442695
  %v667 = vpow.pop %v666
  %v668 = vmul.f32 %v625, 1.442695
  %v669 = vpow.pop %v668
  %v670 = vmul.f32 %v626, 1.442695
  %v671 = vpow.pop %v670
  %v672 = vmul.f32 %v627, 1.442695
  %v673 = vpow.pop %v672
  %v674 = vmul.f32 %v628, 1.442695
  %v675 = vpow.pop %v674
  %v676 = vmul.f32 %v629, 1.442695
  %v677 = vpow.pop %v676
  %v678 = vmul.f32 %v630, 1.442695
  %v679 = vpow.pop %v678
  %v680 = vmul.f32 %v631, 1.442695
  %v681 = vpow.pop %v680
  %v682 = vmul.f32 %v632, 1.442695
  %v683 = vpow.pop %v682
  %v684 = vmul.f32 %v633, 1.442695
  %v685 = vpow.pop %v684
  %v686 = vmul.f32 %v634, 1.442695
  %v687 = vpow.pop %v686
  %v688 = vmul.f32 %v635, 1.442695
  %v689 = vpow.pop %v688
  %v690 = vmul.f32 %v636, 1.442695
  %v691 = vpow.pop %v690
  %v692 = vmul.f32 %v637, 1.442695
  %v693 = vpow.pop %v692
  %v694 = vmul.f32 %v638, 1.442695
  %v695 = vpow.pop %v694
  %v696 = vmul.f32 %v639, 1.442695
  %v697 = vpow.pop %v696
  %v698 = vmul.f32 %v640, 1.442695
  %v699 = vpow.pop %v698
  %v700 = vmul.f32 %v641, 1.442695
  %v701 = vpow.pop %v700
  %v702 = vmul.f32 %v642, 1.442695
  %v703 = vpow.pop %v702
  %v704 = vmul.f32 %v643, 1.442695
  %v705 = vpow.pop %v704
  %v706 = vmul.f32 %v644, 1.442695
  %v707 = vpow.pop %v706
  %v708 = vmul.f32 %v645, 1.442695
  %v709 = vpow.pop %v708
  %v710 = vmul.f32 %v646, 1.442695
  %v711 = vpow.pop %v710
  %v712 = vmul.f32 %v647, 1.442695
  %v713 = vpow.pop %v712
  %v714 = vmul.f32 %v648, 1.442695
  %v715 = vpow.pop %v714
  %v716 = vmul.f32 %v649, 1.442695
  %v717 = vpow.pop %v716
  %v718 = vmul.f32 %v650, 1.442695
  %v719 = vpow.pop %v718
  %v720 = vmul.f32 %v651, 1.442695
  %v721 = vpow.pop %v720
  %v722 = vsel %vm284, %v653, 0.0
  %723 = vadd.xlane.f32.xlu0 %v722
  %v724 = vpop.xlane.xlu0 %723
  %v725 = vsel %vm284, %v655, 0.0
  %726 = vadd.xlane.f32.xlu0 %v725
  %v727 = vpop.xlane.xlu0 %726
  %v728 = vsel %vm284, %v657, 0.0
  %729 = vadd.xlane.f32.xlu0 %v728
  %v730 = vpop.xlane.xlu0 %729
  %v731 = vsel %vm284, %v659, 0.0
  %732 = vadd.xlane.f32.xlu0 %v731
  %v733 = vpop.xlane.xlu0 %732
  %v734 = vsel %vm284, %v661, 0.0
  %735 = vadd.xlane.f32.xlu0 %v734
  %v736 = vpop.xlane.xlu0 %735
  %v737 = vsel %vm284, %v663, 0.0
  %738 = vadd.xlane.f32.xlu0 %v737
  %v739 = vpop.xlane.xlu0 %738
  %v740 = vsel %vm284, %v665, 0.0
  %741 = vadd.xlane.f32.xlu0 %v740
  %v742 = vpop.xlane.xlu0 %741
  %v743 = vsel %vm284, %v667, 0.0
  %744 = vadd.xlane.f32.xlu0 %v743
  %v745 = vpop.xlane.xlu0 %744
  %v746 = vsel %vm284, %v669, 0.0
  %747 = vadd.xlane.f32.xlu0 %v746
  %v748 = vpop.xlane.xlu0 %747
  %v749 = vsel %vm284, %v671, 0.0
  %750 = vadd.xlane.f32.xlu0 %v749
  %v751 = vpop.xlane.xlu0 %750
  %v752 = vsel %vm284, %v673, 0.0
  %753 = vadd.xlane.f32.xlu0 %v752
  %v754 = vpop.xlane.xlu0 %753
  %v755 = vsel %vm284, %v675, 0.0
  %756 = vadd.xlane.f32.xlu0 %v755
  %v757 = vpop.xlane.xlu0 %756
  %v758 = vsel %vm284, %v677, 0.0
  %759 = vadd.xlane.f32.xlu0 %v758
  %v760 = vpop.xlane.xlu0 %759
  %v761 = vsel %vm284, %v679, 0.0
  %762 = vadd.xlane.f32.xlu0 %v761
  %v763 = vpop.xlane.xlu0 %762
  %v764 = vsel %vm284, %v681, 0.0
  %765 = vadd.xlane.f32.xlu0 %v764
  %v766 = vpop.xlane.xlu0 %765
  %v767 = vsel %vm284, %v683, 0.0
  %768 = vadd.xlane.f32.xlu0 %v767
  %v769 = vpop.xlane.xlu0 %768
  %v770 = vsel %vm284, %v685, 0.0
  %771 = vadd.xlane.f32.xlu0 %v770
  %v772 = vpop.xlane.xlu0 %771
  %v773 = vsel %vm284, %v687, 0.0
  %774 = vadd.xlane.f32.xlu0 %v773
  %v775 = vpop.xlane.xlu0 %774
  %v776 = vsel %vm284, %v689, 0.0
  %777 = vadd.xlane.f32.xlu0 %v776
  %v778 = vpop.xlane.xlu0 %777
  %v779 = vsel %vm284, %v691, 0.0
  %780 = vadd.xlane.f32.xlu0 %v779
  %v781 = vpop.xlane.xlu0 %780
  %v782 = vsel %vm284, %v693, 0.0
  %783 = vadd.xlane.f32.xlu0 %v782
  %v784 = vpop.xlane.xlu0 %783
  %v785 = vsel %vm284, %v695, 0.0
  %786 = vadd.xlane.f32.xlu0 %v785
  %v787 = vpop.xlane.xlu0 %786
  %v788 = vsel %vm284, %v697, 0.0
  %789 = vadd.xlane.f32.xlu0 %v788
  %v790 = vpop.xlane.xlu0 %789
  %v791 = vsel %vm284, %v699, 0.0
  %792 = vadd.xlane.f32.xlu0 %v791
  %v793 = vpop.xlane.xlu0 %792
  %v794 = vsel %vm284, %v701, 0.0
  %795 = vadd.xlane.f32.xlu0 %v794
  %v796 = vpop.xlane.xlu0 %795
  %v797 = vsel %vm284, %v703, 0.0
  %798 = vadd.xlane.f32.xlu0 %v797
  %v799 = vpop.xlane.xlu0 %798
  %v800 = vsel %vm284, %v705, 0.0
  %801 = vadd.xlane.f32.xlu0 %v800
  %v802 = vpop.xlane.xlu0 %801
  %v803 = vsel %vm284, %v707, 0.0
  %804 = vadd.xlane.f32.xlu0 %v803
  %v805 = vpop.xlane.xlu0 %804
  %v806 = vsel %vm284, %v709, 0.0
  %807 = vadd.xlane.f32.xlu0 %v806
  %v808 = vpop.xlane.xlu0 %807
  %v809 = vsel %vm284, %v711, 0.0
  %810 = vadd.xlane.f32.xlu0 %v809
  %v811 = vpop.xlane.xlu0 %810
  %v812 = vsel %vm284, %v713, 0.0
  %813 = vadd.xlane.f32.xlu0 %v812
  %v814 = vpop.xlane.xlu0 %813
  %v815 = vsel %vm284, %v715, 0.0
  %816 = vadd.xlane.f32.xlu0 %v815
  %v817 = vpop.xlane.xlu0 %816
  %v818 = vsel %vm284, %v717, 0.0
  %819 = vadd.xlane.f32.xlu0 %v818
  %v820 = vpop.xlane.xlu0 %819
  %v821 = vsel %vm284, %v719, 0.0
  %822 = vadd.xlane.f32.xlu0 %v821
  %v823 = vpop.xlane.xlu0 %822
  %v824 = vsel %vm284, %v721, 0.0
  %825 = vadd.xlane.f32.xlu0 %v824
  %v826 = vpop.xlane.xlu0 %825
  %v827 = vrcp.pop %v724
  %v828 = vrcp.pop %v727
  %v829 = vrcp.pop %v730
  %v830 = vrcp.pop %v733
  %v831 = vrcp.pop %v736
  %v832 = vrcp.pop %v739
  %v833 = vrcp.pop %v742
  %v834 = vrcp.pop %v745
  %v835 = vrcp.pop %v748
  %v836 = vrcp.pop %v751
  %v837 = vrcp.pop %v754
  %v838 = vrcp.pop %v757
  %v839 = vrcp.pop %v760
  %v840 = vrcp.pop %v763
  %v841 = vrcp.pop %v766
  %v842 = vrcp.pop %v769
  %v843 = vrcp.pop %v772
  %v844 = vrcp.pop %v775
  %v845 = vrcp.pop %v778
  %v846 = vrcp.pop %v781
  %v847 = vrcp.pop %v784
  %v848 = vrcp.pop %v787
  %v849 = vrcp.pop %v790
  %v850 = vrcp.pop %v793
  %v851 = vrcp.pop %v796
  %v852 = vrcp.pop %v799
  %v853 = vrcp.pop %v802
  %v854 = vrcp.pop %v805
  %v855 = vrcp.pop %v808
  %v856 = vrcp.pop %v811
  %v857 = vrcp.pop %v814
  %v858 = vrcp.pop %v817
  %v859 = vrcp.pop %v820
  %v860 = vrcp.pop %v823
  %v861 = vrcp.pop %v826
  %v862 = vmul.f32 %v653, %v827
  %v863 = vmul.f32 %v655, %v828
  %v864 = vmul.f32 %v657, %v829
  %v865 = vmul.f32 %v659, %v830
  %v866 = vmul.f32 %v661, %v831
  %v867 = vmul.f32 %v663, %v832
  %v868 = vmul.f32 %v665, %v833
  %v869 = vmul.f32 %v667, %v834
  %v870 = vmul.f32 %v669, %v835
  %v871 = vmul.f32 %v671, %v836
  %v872 = vmul.f32 %v673, %v837
  %v873 = vmul.f32 %v675, %v838
  %v874 = vmul.f32 %v677, %v839
  %v875 = vmul.f32 %v679, %v840
  %v876 = vmul.f32 %v681, %v841
  %v877 = vmul.f32 %v683, %v842
  %v878 = vmul.f32 %v685, %v843
  %v879 = vmul.f32 %v687, %v844
  %v880 = vmul.f32 %v689, %v845
  %v881 = vmul.f32 %v691, %v846
  %v882 = vmul.f32 %v693, %v847
  %v883 = vmul.f32 %v695, %v848
  %v884 = vmul.f32 %v697, %v849
  %v885 = vmul.f32 %v699, %v850
  %v886 = vmul.f32 %v701, %v851
  %v887 = vmul.f32 %v703, %v852
  %v888 = vmul.f32 %v705, %v853
  %v889 = vmul.f32 %v707, %v854
  %v890 = vmul.f32 %v709, %v855
  %v891 = vmul.f32 %v711, %v856
  %v892 = vmul.f32 %v713, %v857
  %v893 = vmul.f32 %v715, %v858
  %v894 = vmul.f32 %v717, %v859
  %v895 = vmul.f32 %v719, %v860
  %v896 = vmul.f32 %v721, %v861
  %v897 = vpack.c.bf16 %v862, %v862
  %v898 = vpack.c.bf16 %v863, %v863
  %v899 = vpack.c.bf16 %v864, %v864
  %v900 = vpack.c.bf16 %v865, %v865
  %v901 = vpack.c.bf16 %v866, %v866
  %v902 = vpack.c.bf16 %v867, %v867
  %v903 = vpack.c.bf16 %v868, %v868
  %v904 = vpack.c.bf16 %v869, %v869
  %v905 = vpack.c.bf16 %v870, %v870
  %v906 = vpack.c.bf16 %v871, %v871
  %v907 = vpack.c.bf16 %v872, %v872
  %v908 = vpack.c.bf16 %v873, %v873
  %v909 = vpack.c.bf16 %v874, %v874
  %v910 = vpack.c.bf16 %v875, %v875
  %v911 = vpack.c.bf16 %v876, %v876
  %v912 = vpack.c.bf16 %v877, %v877
  %v913 = vpack.c.bf16 %v878, %v878
  %v914 = vpack.c.bf16 %v879, %v879
  %v915 = vpack.c.bf16 %v880, %v880
  %v916 = vpack.c.bf16 %v881, %v881
  %v917 = vpack.c.bf16 %v882, %v882
  %v918 = vpack.c.bf16 %v883, %v883
  %v919 = vpack.c.bf16 %v884, %v884
  %v920 = vpack.c.bf16 %v885, %v885
  %v921 = vpack.c.bf16 %v886, %v886
  %v922 = vpack.c.bf16 %v887, %v887
  %v923 = vpack.c.bf16 %v888, %v888
  %v924 = vpack.c.bf16 %v889, %v889
  %v925 = vpack.c.bf16 %v890, %v890
  %v926 = vpack.c.bf16 %v891, %v891
  %v927 = vpack.c.bf16 %v892, %v892
  %v928 = vpack.c.bf16 %v893, %v893
  %v929 = vpack.c.bf16 %v894, %v894
  %v930 = vpack.c.bf16 %v895, %v895
  %v931 = vpack.c.bf16 %v896, %v896
  %v932 = vld [vmem:[%s2] sm:$0xf]
  %v933 = vld [vmem:[%s2 + $0x4] sm:$0xf]
  %v934 = vld [vmem:[%s2 + $0x8] sm:$0x1]
  %v935 = vld [vmem:[%s2 + $0xc] sm:$0xf]
  %v936 = vld [vmem:[%s2 + $0x10] sm:$0xf]
  %v937 = vld [vmem:[%s2 + $0x14] sm:$0x1]
  %v938 = vld [vmem:[%s2 + $0x18] sm:$0xf]
  %v939 = vld [vmem:[%s2 + $0x1c] sm:$0xf]
  %v940 = vld [vmem:[%s2 + $0x20] sm:$0x1]
  %v941 = vld [vmem:[%s2 + $0x24] sm:$0xf]
  %v942 = vld [vmem:[%s2 + $0x28] sm:$0xf]
  %v943 = vld [vmem:[%s2 + $0x2c] sm:$0x1]
  %v944 = vld [vmem:[%s2 + $0x30] sm:$0xf]
  %v945 = vld [vmem:[%s2 + $0x34] sm:$0xf]
  %v946 = vld [vmem:[%s2 + $0x38] sm:$0x1]
  %v947 = vld [vmem:[%s2 + $0x3c] sm:$0xf]
  %v948 = vld [vmem:[%s2 + $0x40] sm:$0xf]
  %v949 = vld [vmem:[%s2 + $0x44] sm:$0x1]
  %v950 = vld [vmem:[%s2 + $0x48] sm:$0xf]
  %v951 = vld [vmem:[%s2 + $0x4c] sm:$0xf]
  %v952 = vld [vmem:[%s2 + $0x50] sm:$0x1]
  %v953 = vld [vmem:[%s2 + $0x54] sm:$0xf]
  %v954 = vld [vmem:[%s2 + $0x58] sm:$0xf]
  %v955 = vld [vmem:[%s2 + $0x5c] sm:$0x1]
  %v956 = vld [vmem:[%s2 + $0x60] sm:$0xf]
  %v957 = vld [vmem:[%s2 + $0x64] sm:$0xf]
  %v958 = vld [vmem:[%s2 + $0x68] sm:$0x1]
  %v959 = vld [vmem:[%s2 + $0x6c] sm:$0xf]
  %v960 = vld [vmem:[%s2 + $0x70] sm:$0xf]
  %v961 = vld [vmem:[%s2 + $0x74] sm:$0x1]
  %v962 = vld [vmem:[%s2 + $0x78] sm:$0xf]
  %v963 = vld [vmem:[%s2 + $0x7c] sm:$0xf]
  %v964 = vld [vmem:[%s2 + $0x80] sm:$0x1]
  %v965 = vld [vmem:[%s2 + $0x84] sm:$0xf]
  %v966 = vld [vmem:[%s2 + $0x88] sm:$0xf]
  %v967 = vld [vmem:[%s2 + $0x8c] sm:$0x1]
  %v968 = vld [vmem:[%s2 + $0x90] sm:$0xf]
  %v969 = vld [vmem:[%s2 + $0x94] sm:$0xf]
  %v970 = vld [vmem:[%s2 + $0x98] sm:$0x1]
  %v971 = vld [vmem:[%s2 + $0x9c] sm:$0xf]
  %v972 = vld [vmem:[%s2 + $0xa0] sm:$0xf]
  %v973 = vld [vmem:[%s2 + $0xa4] sm:$0x1]
  %v974 = vld [vmem:[%s2 + $0xa8] sm:$0xf]
  %v975 = vld [vmem:[%s2 + $0xac] sm:$0xf]
  %v976 = vld [vmem:[%s2 + $0xb0] sm:$0x1]
  %v977 = vld [vmem:[%s2 + $0xb4] sm:$0xf]
  %v978 = vld [vmem:[%s2 + $0xb8] sm:$0xf]
  %v979 = vld [vmem:[%s2 + $0xbc] sm:$0x1]
  %v980 = vld [vmem:[%s2 + $0xc0] sm:$0xf]
  %v981 = vld [vmem:[%s2 + $0xc4] sm:$0xf]
  %v982 = vld [vmem:[%s2 + $0xc8] sm:$0x1]
  %v983 = vld [vmem:[%s2 + $0xcc] sm:$0xf]
  %v984 = vld [vmem:[%s2 + $0xd0] sm:$0xf]
  %v985 = vld [vmem:[%s2 + $0xd4] sm:$0x1]
  %v986 = vld [vmem:[%s2 + $0xd8] sm:$0xf]
  %v987 = vld [vmem:[%s2 + $0xdc] sm:$0xf]
  %v988 = vld [vmem:[%s2 + $0xe0] sm:$0x1]
  %v989 = vld [vmem:[%s2 + $0xe4] sm:$0xf]
  %v990 = vld [vmem:[%s2 + $0xe8] sm:$0xf]
  %v991 = vld [vmem:[%s2 + $0xec] sm:$0x1]
  %v992 = vld [vmem:[%s2 + $0xf0] sm:$0xf]
  %v993 = vld [vmem:[%s2 + $0xf4] sm:$0xf]
  %v994 = vld [vmem:[%s2 + $0xf8] sm:$0x1]
  %v995 = vld [vmem:[%s2 + $0xfc] sm:$0xf]
  %v996 = vld [vmem:[%s2 + $0x100] sm:$0xf]
  %v997 = vld [vmem:[%s2 + $0x104] sm:$0x1]
  %v998 = vld [vmem:[%s2 + $0x108] sm:$0xf]
  %v999 = vld [vmem:[%s2 + $0x10c] sm:$0xf]
  %v1000 = vld [vmem:[%s2 + $0x110] sm:$0x1]
  %v1001 = vld [vmem:[%s2 + $0x114] sm:$0xf]
  %v1002 = vld [vmem:[%s2 + $0x118] sm:$0xf]
  %v1003 = vld [vmem:[%s2 + $0x11c] sm:$0x1]
  %v1004 = vld [vmem:[%s2 + $0x120] sm:$0xf]
  %v1005 = vld [vmem:[%s2 + $0x124] sm:$0xf]
  %v1006 = vld [vmem:[%s2 + $0x128] sm:$0x1]
  %v1007 = vld [vmem:[%s2 + $0x12c] sm:$0xf]
  %v1008 = vld [vmem:[%s2 + $0x130] sm:$0xf]
  %v1009 = vld [vmem:[%s2 + $0x134] sm:$0x1]
  %v1010 = vld [vmem:[%s2 + $0x138] sm:$0xf]
  %v1011 = vld [vmem:[%s2 + $0x13c] sm:$0xf]
  %v1012 = vld [vmem:[%s2 + $0x140] sm:$0x1]
  %v1013 = vld [vmem:[%s2 + $0x144] sm:$0xf]
  %v1014 = vld [vmem:[%s2 + $0x148] sm:$0xf]
  %v1015 = vld [vmem:[%s2 + $0x14c] sm:$0x1]
  %v1016 = vld [vmem:[%s2 + $0x150] sm:$0xf]
  %v1017 = vld [vmem:[%s2 + $0x154] sm:$0xf]
  %v1018 = vld [vmem:[%s2 + $0x158] sm:$0x1]
  %v1019 = vld [vmem:[%s2 + $0x15c] sm:$0xf]
  %v1020 = vld [vmem:[%s2 + $0x160] sm:$0xf]
  %v1021 = vld [vmem:[%s2 + $0x164] sm:$0x1]
  %v1022 = vld [vmem:[%s2 + $0x168] sm:$0xf]
  %v1023 = vld [vmem:[%s2 + $0x16c] sm:$0xf]
  %v1024 = vld [vmem:[%s2 + $0x170] sm:$0x1]
  %v1025 = vld [vmem:[%s2 + $0x174] sm:$0xf]
  %v1026 = vld [vmem:[%s2 + $0x178] sm:$0xf]
  %v1027 = vld [vmem:[%s2 + $0x17c] sm:$0x1]
  %v1028 = vld [vmem:[%s2 + $0x180] sm:$0xf]
  %v1029 = vld [vmem:[%s2 + $0x184] sm:$0xf]
  %v1030 = vld [vmem:[%s2 + $0x188] sm:$0x1]
  %v1031 = vld [vmem:[%s2 + $0x18c] sm:$0xf]
  %v1032 = vld [vmem:[%s2 + $0x190] sm:$0xf]
  %v1033 = vld [vmem:[%s2 + $0x194] sm:$0x1]
  %v1034 = vld [vmem:[%s2 + $0x198] sm:$0xf]
  %v1035 = vld [vmem:[%s2 + $0x19c] sm:$0xf]
  %v1036 = vld [vmem:[%s2 + $0x1a0] sm:$0x1]
  %v1040 = vunpack.c.l.b16 %v932
  %v1041 = vunpack.c.l.b16 %v933
  %v1042 = vunpack.c.l.b16 %v934
  %v1043 = vpack.c.b16 %v1041, %v1040
  %v1044 = vpack.c.b16 %v1042, %v1042
  %v1047 = vsel %vm284, %v897, 0
  %vm1049 = vcmask 1040384
  %v1050 = vsel 0, 4294967295, 65535
  %v1051 = vsel %vm1049, %v1050, 0
  %v1053 = vand.u32 %v1044, %v1051
  %1055 = vmatprep.subr.bf16.mxu0 0
  %1056 = vmatpush1.bf16.msra.mxu0 %v1043
  %1057 = vmatprep.subr.bf16.mxu0 0
  %1058 = vmatpush1.bf16.msra.mxu0 %v1053
  %1059 = vmatprep.subr.bf16.mxu0 0
  %1060 = vmatpush1.bf16.msra.mxu0 0
  %1061 = vmatprep.subr.bf16.mxu0 0
  %1062 = vmatpush1.bf16.msra.mxu0 0
  %1063 = vmatprep.subr.bf16.mxu0 0
  %1064 = vmatpush1.bf16.msra.mxu0 0
  %1065 = vmatprep.subr.bf16.mxu0 0
  %1066 = vmatpush1.bf16.msra.mxu0 0
  %1067 = vmatprep.subr.bf16.mxu0 0
  %1068 = vmatpush1.bf16.msra.mxu0 0
  %1069 = vmatprep.subr.bf16.mxu0 0
  %1070 = vmatpush1.bf16.msra.mxu0 0
  %1071 = vmatprep.subr.bf16.mxu0 0
  %1072 = vmatpush1.bf16.msra.mxu0 0
  %1073 = vmatprep.subr.bf16.mxu0 0
  %1074 = vmatpush1.bf16.msra.mxu0 0
  %1075 = vmatprep.subr.bf16.mxu0 0
  %1076 = vmatpush1.bf16.msra.mxu0 0
  %1077 = vmatprep.subr.bf16.mxu0 0
  %1078 = vmatpush1.bf16.msra.mxu0 0
  %1079 = vmatprep.subr.bf16.mxu0 0
  %1080 = vmatpush1.bf16.msra.mxu0 0
  %1081 = vmatprep.subr.bf16.mxu0 0
  %1082 = vmatpush1.bf16.msra.mxu0 0
  %1083 = vmatprep.subr.bf16.mxu0 0
  %1084 = vmatpush1.bf16.msra.mxu0 0
  %1085 = vmatprep.subr.bf16.mxu0 0
  %1086 = vmatpush1.bf16.msra.mxu0 0
  %1087 = vmatprep.mubr.bf16.mxu0 0
  %1088 = vmatmul.mubr.bf16.gmra.mrb[0].mxu0 %v1047
  %v1089 = vpop.f32.mrb[0].mxu0
  %v1090 = vadd.f32 0.0, %v1089
  %v1091 = vpop.f32.mrb[0].mxu0
  %v1092 = vpop.f32.mrb[0].mxu0
  %v1093 = vpop.f32.mrb[0].mxu0
  %1094 = vdwg.mxu0
  %v1098 = vunpack.c.l.b16 %v935
  %v1099 = vunpack.c.l.b16 %v936
  %v1100 = vunpack.c.l.b16 %v937
  %v1101 = vpack.c.b16 %v1099, %v1098
  %v1102 = vpack.c.b16 %v1100, %v1100
  %v1105 = vsel %vm284, %v898, 0
  %v1108 = vand.u32 %v1102, %v1051
  %1110 = vmatprep.subr.bf16.mxu0 0
  %1111 = vmatpush1.bf16.msra.mxu0 %v1101
  %1112 = vmatprep.subr.bf16.mxu0 0
  %1113 = vmatpush1.bf16.msra.mxu0 %v1108
  %1114 = vmatprep.subr.bf16.mxu0 0
  %1115 = vmatpush1.bf16.msra.mxu0 0
  %1116 = vmatprep.subr.bf16.mxu0 0
  %1117 = vmatpush1.bf16.msra.mxu0 0
  %1118 = vmatprep.subr.bf16.mxu0 0
  %1119 = vmatpush1.bf16.msra.mxu0 0
  %1120 = vmatprep.subr.bf16.mxu0 0
  %1121 = vmatpush1.bf16.msra.mxu0 0
  %1122 = vmatprep.subr.bf16.mxu0 0
  %1123 = vmatpush1.bf16.msra.mxu0 0
  %1124 = vmatprep.subr.bf16.mxu0 0
  %1125 = vmatpush1.bf16.msra.mxu0 0
  %1126 = vmatprep.subr.bf16.mxu0 0
  %1127 = vmatpush1.bf16.msra.mxu0 0
  %1128 = vmatprep.subr.bf16.mxu0 0
  %1129 = vmatpush1.bf16.msra.mxu0 0
  %1130 = vmatprep.subr.bf16.mxu0 0
  %1131 = vmatpush1.bf16.msra.mxu0 0
  %1132 = vmatprep.subr.bf16.mxu0 0
  %1133 = vmatpush1.bf16.msra.mxu0 0
  %1134 = vmatprep.subr.bf16.mxu0 0
  %1135 = vmatpush1.bf16.msra.mxu0 0
  %1136 = vmatprep.subr.bf16.mxu0 0
  %1137 = vmatpush1.bf16.msra.mxu0 0
  %1138 = vmatprep.subr.bf16.mxu0 0
  %1139 = vmatpush1.bf16.msra.mxu0 0
  %1140 = vmatprep.subr.bf16.mxu0 0
  %1141 = vmatpush1.bf16.msra.mxu0 0
  %1142 = vmatprep.mubr.bf16.mxu0 0
  %1143 = vmatmul.mubr.bf16.gmra.mrb[0].mxu0 %v1105
  %v1144 = vpop.f32.mrb[0].mxu0
  %v1145 = vadd.f32 0.0, %v1144
  %v1146 = vpop.f32.mrb[0].mxu0
  %v1147 = vpop.f32.mrb[0].mxu0
  %v1148 = vpop.f32.mrb[0].mxu0
  %1149 = vdwg.mxu0
  %v1153 = vunpack.c.l.b16 %v938
  %v1154 = vunpack.c.l.b16 %v939
  %v1155 = vunpack.c.l.b16 %v940
  %v1156 = vpack.c.b16 %v1154, %v1153
  %v1157 = vpack.c.b16 %v1155, %v1155
  %v1160 = vsel %vm284, %v899, 0
  %v1163 = vand.u32 %v1157, %v1051
  %1165 = vmatprep.subr.bf16.mxu0 0
  %1166 = vmatpush1.bf16.msra.mxu0 %v1156
  %1167 = vmatprep.subr.bf16.mxu0 0
  %1168 = vmatpush1.bf16.msra.mxu0 %v1163
  %1169 = vmatprep.subr.bf16.mxu0 0
  %1170 = vmatpush1.bf16.msra.mxu0 0
  %1171 = vmatprep.subr.bf16.mxu0 0
  %1172 = vmatpush1.bf16.msra.mxu0 0
  %1173 = vmatprep.subr.bf16.mxu0 0
  %1174 = vmatpush1.bf16.msra.mxu0 0
  %1175 = vmatprep.subr.bf16.mxu0 0
  %1176 = vmatpush1.bf16.msra.mxu0 0
  %1177 = vmatprep.subr.bf16.mxu0 0
  %1178 = vmatpush1.bf16.msra.mxu0 0
  %1179 = vmatprep.subr.bf16.mxu0 0
  %1180 = vmatpush1.bf16.msra.mxu0 0
  %1181 = vmatprep.subr.bf16.mxu0 0
  %1182 = vmatpush1.bf16.msra.mxu0 0
  %1183 = vmatprep.subr.bf16.mxu0 0
  %1184 = vmatpush1.bf16.msra.mxu0 0
  %1185 = vmatprep.subr.bf16.mxu0 0
  %1186 = vmatpush1.bf16.msra.mxu0 0
  %1187 = vmatprep.subr.bf16.mxu0 0
  %1188 = vmatpush1.bf16.msra.mxu0 0
  %1189 = vmatprep.subr.bf16.mxu0 0
  %1190 = vmatpush1.bf16.msra.mxu0 0
  %1191 = vmatprep.subr.bf16.mxu0 0
  %1192 = vmatpush1.bf16.msra.mxu0 0
  %1193 = vmatprep.subr.bf16.mxu0 0
  %1194 = vmatpush1.bf16.msra.mxu0 0
  %1195 = vmatprep.subr.bf16.mxu0 0
  %1196 = vmatpush1.bf16.msra.mxu0 0
  %1197 = vmatprep.mubr.bf16.mxu0 0
  %1198 = vmatmul.mubr.bf16.gmra.mrb[0].mxu0 %v1160
  %v1199 = vpop.f32.mrb[0].mxu0
  %v1200 = vadd.f32 0.0, %v1199
  %v1201 = vpop.f32.mrb[0].mxu0
  %v1202 = vpop.f32.mrb[0].mxu0
  %v1203 = vpop.f32.mrb[0].mxu0
  %1204 = vdwg.mxu0
  %v1208 = vunpack.c.l.b16 %v941
  %v1209 = vunpack.c.l.b16 %v942
  %v1210 = vunpack.c.l.b16 %v943
  %v1211 = vpack.c.b16 %v1209, %v1208
  %v1212 = vpack.c.b16 %v1210, %v1210
  %v1215 = vsel %vm284, %v900, 0
  %v1218 = vand.u32 %v1212, %v1051
  %1220 = vmatprep.subr.bf16.mxu0 0
  %1221 = vmatpush1.bf16.msra.mxu0 %v1211
  %1222 = vmatprep.subr.bf16.mxu0 0
  %1223 = vmatpush1.bf16.msra.mxu0 %v1218
  %1224 = vmatprep.subr.bf16.mxu0 0
  %1225 = vmatpush1.bf16.msra.mxu0 0
  %1226 = vmatprep.subr.bf16.mxu0 0
  %1227 = vmatpush1.bf16.msra.mxu0 0
  %1228 = vmatprep.subr.bf16.mxu0 0
  %1229 = vmatpush1.bf16.msra.mxu0 0
  %1230 = vmatprep.subr.bf16.mxu0 0
  %1231 = vmatpush1.bf16.msra.mxu0 0
  %1232 = vmatprep.subr.bf16.mxu0 0
  %1233 = vmatpush1.bf16.msra.mxu0 0
  %1234 = vmatprep.subr.bf16.mxu0 0
  %1235 = vmatpush1.bf16.msra.mxu0 0
  %1236 = vmatprep.subr.bf16.mxu0 0
  %1237 = vmatpush1.bf16.msra.mxu0 0
  %1238 = vmatprep.subr.bf16.mxu0 0
  %1239 = vmatpush1.bf16.msra.mxu0 0
  %1240 = vmatprep.subr.bf16.mxu0 0
  %1241 = vmatpush1.bf16.msra.mxu0 0
  %1242 = vmatprep.subr.bf16.mxu0 0
  %1243 = vmatpush1.bf16.msra.mxu0 0
  %1244 = vmatprep.subr.bf16.mxu0 0
  %1245 = vmatpush1.bf16.msra.mxu0 0
  %1246 = vmatprep.subr.bf16.mxu0 0
  %1247 = vmatpush1.bf16.msra.mxu0 0
  %1248 = vmatprep.subr.bf16.mxu0 0
  %1249 = vmatpush1.bf16.msra.mxu0 0
  %1250 = vmatprep.subr.bf16.mxu0 0
  %1251 = vmatpush1.bf16.msra.mxu0 0
  %1252 = vmatprep.mubr.bf16.mxu0 0
  %1253 = vmatmul.mubr.bf16.gmra.mrb[0].mxu0 %v1215
  %v1254 = vpop.f32.mrb[0].mxu0
  %v1255 = vadd.f32 0.0, %v1254
  %v1256 = vpop.f32.mrb[0].mxu0
  %v1257 = vpop.f32.mrb[0].mxu0
  %v1258 = vpop.f32.mrb[0].mxu0
  %1259 = vdwg.mxu0
  %v1263 = vunpack.c.l.b16 %v944
  %v1264 = vunpack.c.l.b16 %v945
  %v1265 = vunpack.c.l.b16 %v946
  %v1266 = vpack.c.b16 %v1264, %v1263
  %v1267 = vpack.c.b16 %v1265, %v1265
  %v1270 = vsel %vm284, %v901, 0
  %v1273 = vand.u32 %v1267, %v1051
  %1275 = vmatprep.subr.bf16.mxu0 0
  %1276 = vmatpush1.bf16.msra.mxu0 %v1266
  %1277 = vmatprep.subr.bf16.mxu0 0
  %1278 = vmatpush1.bf16.msra.mxu0 %v1273
  %1279 = vmatprep.subr.bf16.mxu0 0
  %1280 = vmatpush1.bf16.msra.mxu0 0
  %1281 = vmatprep.subr.bf16.mxu0 0
  %1282 = vmatpush1.bf16.msra.mxu0 0
  %1283 = vmatprep.subr.bf16.mxu0 0
  %1284 = vmatpush1.bf16.msra.mxu0 0
  %1285 = vmatprep.subr.bf16.mxu0 0
  %1286 = vmatpush1.bf16.msra.mxu0 0
  %1287 = vmatprep.subr.bf16.mxu0 0
  %1288 = vmatpush1.bf16.msra.mxu0 0
  %1289 = vmatprep.subr.bf16.mxu0 0
  %1290 = vmatpush1.bf16.msra.mxu0 0
  %1291 = vmatprep.subr.bf16.mxu0 0
  %1292 = vmatpush1.bf16.msra.mxu0 0
  %1293 = vmatprep.subr.bf16.mxu0 0
  %1294 = vmatpush1.bf16.msra.mxu0 0
  %1295 = vmatprep.subr.bf16.mxu0 0
  %1296 = vmatpush1.bf16.msra.mxu0 0
  %1297 = vmatprep.subr.bf16.mxu0 0
  %1298 = vmatpush1.bf16.msra.mxu0 0
  %1299 = vmatprep.subr.bf16.mxu0 0
  %1300 = vmatpush1.bf16.msra.mxu0 0
  %1301 = vmatprep.subr.bf16.mxu0 0
  %1302 = vmatpush1.bf16.msra.mxu0 0
  %1303 = vmatprep.subr.bf16.mxu0 0
  %1304 = vmatpush1.bf16.msra.mxu0 0
  %1305 = vmatprep.subr.bf16.mxu0 0
  %1306 = vmatpush1.bf16.msra.mxu0 0
  %1307 = vmatprep.mubr.bf16.mxu0 0
  %1308 = vmatmul.mubr.bf16.gmra.mrb[0].mxu0 %v1270
  %v1309 = vpop.f32.mrb[0].mxu0
  %v1310 = vadd.f32 0.0, %v1309
  %v1311 = vpop.f32.mrb[0].mxu0
  %v1312 = vpop.f32.mrb[0].mxu0
  %v1313 = vpop.f32.mrb[0].mxu0
  %1314 = vdwg.mxu0
  %v1318 = vunpack.c.l.b16 %v947
  %v1319 = vunpack.c.l.b16 %v948
  %v1320 = vunpack.c.l.b16 %v949
  %v1321 = vpack.c.b16 %v1319, %v1318
  %v1322 = vpack.c.b16 %v1320, %v1320
  %v1325 = vsel %vm284, %v902, 0
  %v1328 = vand.u32 %v1322, %v1051
  %1330 = vmatprep.subr.bf16.mxu0 0
  %1331 = vmatpush1.bf16.msra.mxu0 %v1321
  %1332 = vmatprep.subr.bf16.mxu0 0
  %1333 = vmatpush1.bf16.msra.mxu0 %v1328
  %1334 = vmatprep.subr.bf16.mxu0 0
  %1335 = vmatpush1.bf16.msra.mxu0 0
  %1336 = vmatprep.subr.bf16.mxu0 0
  %1337 = vmatpush1.bf16.msra.mxu0 0
  %1338 = vmatprep.subr.bf16.mxu0 0
  %1339 = vmatpush1.bf16.msra.mxu0 0
  %1340 = vmatprep.subr.bf16.mxu0 0
  %1341 = vmatpush1.bf16.msra.mxu0 0
  %1342 = vmatprep.subr.bf16.mxu0 0
  %1343 = vmatpush1.bf16.msra.mxu0 0
  %1344 = vmatprep.subr.bf16.mxu0 0
  %1345 = vmatpush1.bf16.msra.mxu0 0
  %1346 = vmatprep.subr.bf16.mxu0 0
  %1347 = vmatpush1.bf16.msra.mxu0 0
  %1348 = vmatprep.subr.bf16.mxu0 0
  %1349 = vmatpush1.bf16.msra.mxu0 0
  %1350 = vmatprep.subr.bf16.mxu0 0
  %1351 = vmatpush1.bf16.msra.mxu0 0
  %1352 = vmatprep.subr.bf16.mxu0 0
  %1353 = vmatpush1.bf16.msra.mxu0 0
  %1354 = vmatprep.subr.bf16.mxu0 0
  %1355 = vmatpush1.bf16.msra.mxu0 0
  %1356 = vmatprep.subr.bf16.mxu0 0
  %1357 = vmatpush1.bf16.msra.mxu0 0
  %1358 = vmatprep.subr.bf16.mxu0 0
  %1359 = vmatpush1.bf16.msra.mxu0 0
  %1360 = vmatprep.subr.bf16.mxu0 0
  %1361 = vmatpush1.bf16.msra.mxu0 0
  %1362 = vmatprep.mubr.bf16.mxu0 0
  %1363 = vmatmul.mubr.bf16.gmra.mrb[0].mxu0 %v1325
  %v1364 = vpop.f32.mrb[0].mxu0
  %v1365 = vadd.f32 0.0, %v1364
  %v1366 = vpop.f32.mrb[0].mxu0
  %v1367 = vpop.f32.mrb[0].mxu0
  %v1368 = vpop.f32.mrb[0].mxu0
  %1369 = vdwg.mxu0
  %v1373 = vunpack.c.l.b16 %v950
  %v1374 = vunpack.c.l.b16 %v951
  %v1375 = vunpack.c.l.b16 %v952
  %v1376 = vpack.c.b16 %v1374, %v1373
  %v1377 = vpack.c.b16 %v1375, %v1375
  %v1380 = vsel %vm284, %v903, 0
  %v1383 = vand.u32 %v1377, %v1051
  %1385 = vmatprep.subr.bf16.mxu0 0
  %1386 = vmatpush1.bf16.msra.mxu0 %v1376
  %1387 = vmatprep.subr.bf16.mxu0 0
  %1388 = vmatpush1.bf16.msra.mxu0 %v1383
  %1389 = vmatprep.subr.bf16.mxu0 0
  %1390 = vmatpush1.bf16.msra.mxu0 0
  %1391 = vmatprep.subr.bf16.mxu0 0
  %1392 = vmatpush1.bf16.msra.mxu0 0
  %1393 = vmatprep.subr.bf16.mxu0 0
  %1394 = vmatpush1.bf16.msra.mxu0 0
  %1395 = vmatprep.subr.bf16.mxu0 0
  %1396 = vmatpush1.bf16.msra.mxu0 0
  %1397 = vmatprep.subr.bf16.mxu0 0
  %1398 = vmatpush1.bf16.msra.mxu0 0
  %1399 = vmatprep.subr.bf16.mxu0 0
  %1400 = vmatpush1.bf16.msra.mxu0 0
  %1401 = vmatprep.subr.bf16.mxu0 0
  %1402 = vmatpush1.bf16.msra.mxu0 0
  %1403 = vmatprep.subr.bf16.mxu0 0
  %1404 = vmatpush1.bf16.msra.mxu0 0
  %1405 = vmatprep.subr.bf16.mxu0 0
  %1406 = vmatpush1.bf16.msra.mxu0 0
  %1407 = vmatprep.subr.bf16.mxu0 0
  %1408 = vmatpush1.bf16.msra.mxu0 0
  %1409 = vmatprep.subr.bf16.mxu0 0
  %1410 = vmatpush1.bf16.msra.mxu0 0
  %1411 = vmatprep.subr.bf16.mxu0 0
  %1412 = vmatpush1.bf16.msra.mxu0 0
  %1413 = vmatprep.subr.bf16.mxu0 0
  %1414 = vmatpush1.bf16.msra.mxu0 0
  %1415 = vmatprep.subr.bf16.mxu0 0
  %1416 = vmatpush1.bf16.msra.mxu0 0
  %1417 = vmatprep.mubr.bf16.mxu0 0
  %1418 = vmatmul.mubr.bf16.gmra.mrb[0].mxu0 %v1380
  %v1419 = vpop.f32.mrb[0].mxu0
  %v1420 = vadd.f32 0.0, %v1419
  %v1421 = vpop.f32.mrb[0].mxu0
  %v1422 = vpop.f32.mrb[0].mxu0
  %v1423 = vpop.f32.mrb[0].mxu0
  %1424 = vdwg.mxu0
  %v1428 = vunpack.c.l.b16 %v953
  %v1429 = vunpack.c.l.b16 %v954
  %v1430 = vunpack.c.l.b16 %v955
  %v1431 = vpack.c.b16 %v1429, %v1428
  %v1432 = vpack.c.b16 %v1430, %v1430
  %v1435 = vsel %vm284, %v904, 0
  %v1438 = vand.u32 %v1432, %v1051
  %1440 = vmatprep.subr.bf16.mxu0 0
  %1441 = vmatpush1.bf16.msra.mxu0 %v1431
  %1442 = vmatprep.subr.bf16.mxu0 0
  %1443 = vmatpush1.bf16.msra.mxu0 %v1438
  %1444 = vmatprep.subr.bf16.mxu0 0
  %1445 = vmatpush1.bf16.msra.mxu0 0
  %1446 = vmatprep.subr.bf16.mxu0 0
  %1447 = vmatpush1.bf16.msra.mxu0 0
  %1448 = vmatprep.subr.bf16.mxu0 0
  %1449 = vmatpush1.bf16.msra.mxu0 0
  %1450 = vmatprep.subr.bf16.mxu0 0
  %1451 = vmatpush1.bf16.msra.mxu0 0
  %1452 = vmatprep.subr.bf16.mxu0 0
  %1453 = vmatpush1.bf16.msra.mxu0 0
  %1454 = vmatprep.subr.bf16.mxu0 0
  %1455 = vmatpush1.bf16.msra.mxu0 0
  %1456 = vmatprep.subr.bf16.mxu0 0
  %1457 = vmatpush1.bf16.msra.mxu0 0
  %1458 = vmatprep.subr.bf16.mxu0 0
  %1459 = vmatpush1.bf16.msra.mxu0 0
  %1460 = vmatprep.subr.bf16.mxu0 0
  %1461 = vmatpush1.bf16.msra.mxu0 0
  %1462 = vmatprep.subr.bf16.mxu0 0
  %1463 = vmatpush1.bf16.msra.mxu0 0
  %1464 = vmatprep.subr.bf16.mxu0 0
  %1465 = vmatpush1.bf16.msra.mxu0 0
  %1466 = vmatprep.subr.bf16.mxu0 0
  %1467 = vmatpush1.bf16.msra.mxu0 0
  %1468 = vmatprep.subr.bf16.mxu0 0
  %1469 = vmatpush1.bf16.msra.mxu0 0
  %1470 = vmatprep.subr.bf16.mxu0 0
  %1471 = vmatpush1.bf16.msra.mxu0 0
  %1472 = vmatprep.mubr.bf16.mxu0 0
  %1473 = vmatmul.mubr.bf16.gmra.mrb[0].mxu0 %v1435
  %v1474 = vpop.f32.mrb[0].mxu0
  %v1475 = vadd.f32 0.0, %v1474
  %v1476 = vpop.f32.mrb[0].mxu0
  %v1477 = vpop.f32.mrb[0].mxu0
  %v1478 = vpop.f32.mrb[0].mxu0
  %1479 = vdwg.mxu0
  %v1483 = vunpack.c.l.b16 %v956
  %v1484 = vunpack.c.l.b16 %v957
  %v1485 = vunpack.c.l.b16 %v958
  %v1486 = vpack.c.b16 %v1484, %v1483
  %v1487 = vpack.c.b16 %v1485, %v1485
  %v1490 = vsel %vm284, %v905, 0
  %v1493 = vand.u32 %v1487, %v1051
  %1495 = vmatprep.subr.bf16.mxu0 0
  %1496 = vmatpush1.bf16.msra.mxu0 %v1486
  %1497 = vmatprep.subr.bf16.mxu0 0
  %1498 = vmatpush1.bf16.msra.mxu0 %v1493
  %1499 = vmatprep.subr.bf16.mxu0 0
  %1500 = vmatpush1.bf16.msra.mxu0 0
  %1501 = vmatprep.subr.bf16.mxu0 0
  %1502 = vmatpush1.bf16.msra.mxu0 0
  %1503 = vmatprep.subr.bf16.mxu0 0
  %1504 = vmatpush1.bf16.msra.mxu0 0
  %1505 = vmatprep.subr.bf16.mxu0 0
  %1506 = vmatpush1.bf16.msra.mxu0 0
  %1507 = vmatprep.subr.bf16.mxu0 0
  %1508 = vmatpush1.bf16.msra.mxu0 0
  %1509 = vmatprep.subr.bf16.mxu0 0
  %1510 = vmatpush1.bf16.msra.mxu0 0
  %1511 = vmatprep.subr.bf16.mxu0 0
  %1512 = vmatpush1.bf16.msra.mxu0 0
  %1513 = vmatprep.subr.bf16.mxu0 0
  %1514 = vmatpush1.bf16.msra.mxu0 0
  %1515 = vmatprep.subr.bf16.mxu0 0
  %1516 = vmatpush1.bf16.msra.mxu0 0
  %1517 = vmatprep.subr.bf16.mxu0 0
  %1518 = vmatpush1.bf16.msra.mxu0 0
  %1519 = vmatprep.subr.bf16.mxu0 0
  %1520 = vmatpush1.bf16.msra.mxu0 0
  %1521 = vmatprep.subr.bf16.mxu0 0
  %1522 = vmatpush1.bf16.msra.mxu0 0
  %1523 = vmatprep.subr.bf16.mxu0 0
  %1524 = vmatpush1.bf16.msra.mxu0 0
  %1525 = vmatprep.subr.bf16.mxu0 0
  %1526 = vmatpush1.bf16.msra.mxu0 0
  %1527 = vmatprep.mubr.bf16.mxu0 0
  %1528 = vmatmul.mubr.bf16.gmra.mrb[0].mxu0 %v1490
  %v1529 = vpop.f32.mrb[0].mxu0
  %v1530 = vadd.f32 0.0, %v1529
  %v1531 = vpop.f32.mrb[0].mxu0
  %v1532 = vpop.f32.mrb[0].mxu0
  %v1533 = vpop.f32.mrb[0].mxu0
  %1534 = vdwg.mxu0
  %v1538 = vunpack.c.l.b16 %v959
  %v1539 = vunpack.c.l.b16 %v960
  %v1540 = vunpack.c.l.b16 %v961
  %v1541 = vpack.c.b16 %v1539, %v1538
  %v1542 = vpack.c.b16 %v1540, %v1540
  %v1545 = vsel %vm284, %v906, 0
  %v1548 = vand.u32 %v1542, %v1051
  %1550 = vmatprep.subr.bf16.mxu0 0
  %1551 = vmatpush1.bf16.msra.mxu0 %v1541
  %1552 = vmatprep.subr.bf16.mxu0 0
  %1553 = vmatpush1.bf16.msra.mxu0 %v1548
  %1554 = vmatprep.subr.bf16.mxu0 0
  %1555 = vmatpush1.bf16.msra.mxu0 0
  %1556 = vmatprep.subr.bf16.mxu0 0
  %1557 = vmatpush1.bf16.msra.mxu0 0
  %1558 = vmatprep.subr.bf16.mxu0 0
  %1559 = vmatpush1.bf16.msra.mxu0 0
  %1560 = vmatprep.subr.bf16.mxu0 0
  %1561 = vmatpush1.bf16.msra.mxu0 0
  %1562 = vmatprep.subr.bf16.mxu0 0
  %1563 = vmatpush1.bf16.msra.mxu0 0
  %1564 = vmatprep.subr.bf16.mxu0 0
  %1565 = vmatpush1.bf16.msra.mxu0 0
  %1566 = vmatprep.subr.bf16.mxu0 0
  %1567 = vmatpush1.bf16.msra.mxu0 0
  %1568 = vmatprep.subr.bf16.mxu0 0
  %1569 = vmatpush1.bf16.msra.mxu0 0
  %1570 = vmatprep.subr.bf16.mxu0 0
  %1571 = vmatpush1.bf16.msra.mxu0 0
  %1572 = vmatprep.subr.bf16.mxu0 0
  %1573 = vmatpush1.bf16.msra.mxu0 0
  %1574 = vmatprep.subr.bf16.mxu0 0
  %1575 = vmatpush1.bf16.msra.mxu0 0
  %1576 = vmatprep.subr.bf16.mxu0 0
  %1577 = vmatpush1.bf16.msra.mxu0 0
  %1578 = vmatprep.subr.bf16.mxu0 0
  %1579 = vmatpush1.bf16.msra.mxu0 0
  %1580 = vmatprep.subr.bf16.mxu0 0
  %1581 = vmatpush1.bf16.msra.mxu0 0
  %1582 = vmatprep.mubr.bf16.mxu0 0
  %1583 = vmatmul.mubr.bf16.gmra.mrb[0].mxu0 %v1545
  %v1584 = vpop.f32.mrb[0].mxu0
  %v1585 = vadd.f32 0.0, %v1584
  %v1586 = vpop.f32.mrb[0].mxu0
  %v1587 = vpop.f32.mrb[0].mxu0
  %v1588 = vpop.f32.mrb[0].mxu0
  %1589 = vdwg.mxu0
  %v1593 = vunpack.c.l.b16 %v962
  %v1594 = vunpack.c.l.b16 %v963
  %v1595 = vunpack.c.l.b16 %v964
  %v1596 = vpack.c.b16 %v1594, %v1593
  %v1597 = vpack.c.b16 %v1595, %v1595
  %v1600 = vsel %vm284, %v907, 0
  %v1603 = vand.u32 %v1597, %v1051
  %1605 = vmatprep.subr.bf16.mxu0 0
  %1606 = vmatpush1.bf16.msra.mxu0 %v1596
  %1607 = vmatprep.subr.bf16.mxu0 0
  %1608 = vmatpush1.bf16.msra.mxu0 %v1603
  %1609 = vmatprep.subr.bf16.mxu0 0
  %1610 = vmatpush1.bf16.msra.mxu0 0
  %1611 = vmatprep.subr.bf16.mxu0 0
  %1612 = vmatpush1.bf16.msra.mxu0 0
  %1613 = vmatprep.subr.bf16.mxu0 0
  %1614 = vmatpush1.bf16.msra.mxu0 0
  %1615 = vmatprep.subr.bf16.mxu0 0
  %1616 = vmatpush1.bf16.msra.mxu0 0
  %1617 = vmatprep.subr.bf16.mxu0 0
  %1618 = vmatpush1.bf16.msra.mxu0 0
  %1619 = vmatprep.subr.bf16.mxu0 0
  %1620 = vmatpush1.bf16.msra.mxu0 0
  %1621 = vmatprep.subr.bf16.mxu0 0
  %1622 = vmatpush1.bf16.msra.mxu0 0
  %1623 = vmatprep.subr.bf16.mxu0 0
  %1624 = vmatpush1.bf16.msra.mxu0 0
  %1625 = vmatprep.subr.bf16.mxu0 0
  %1626 = vmatpush1.bf16.msra.mxu0 0
  %1627 = vmatprep.subr.bf16.mxu0 0
  %1628 = vmatpush1.bf16.msra.mxu0 0
  %1629 = vmatprep.subr.bf16.mxu0 0
  %1630 = vmatpush1.bf16.msra.mxu0 0
  %1631 = vmatprep.subr.bf16.mxu0 0
  %1632 = vmatpush1.bf16.msra.mxu0 0
  %1633 = vmatprep.subr.bf16.mxu0 0
  %1634 = vmatpush1.bf16.msra.mxu0 0
  %1635 = vmatprep.subr.bf16.mxu0 0
  %1636 = vmatpush1.bf16.msra.mxu0 0
  %1637 = vmatprep.mubr.bf16.mxu0 0
  %1638 = vmatmul.mubr.bf16.gmra.mrb[0].mxu0 %v1600
  %v1639 = vpop.f32.mrb[0].mxu0
  %v1640 = vadd.f32 0.0, %v1639
  %v1641 = vpop.f32.mrb[0].mxu0
  %v1642 = vpop.f32.mrb[0].mxu0
  %v1643 = vpop.f32.mrb[0].mxu0
  %1644 = vdwg.mxu0
  %v1648 = vunpack.c.l.b16 %v965
  %v1649 = vunpack.c.l.b16 %v966
  %v1650 = vunpack.c.l.b16 %v967
  %v1651 = vpack.c.b16 %v1649, %v1648
  %v1652 = vpack.c.b16 %v1650, %v1650
  %v1655 = vsel %vm284, %v908, 0
  %v1658 = vand.u32 %v1652, %v1051
  %1660 = vmatprep.subr.bf16.mxu0 0
  %1661 = vmatpush1.bf16.msra.mxu0 %v1651
  %1662 = vmatprep.subr.bf16.mxu0 0
  %1663 = vmatpush1.bf16.msra.mxu0 %v1658
  %1664 = vmatprep.subr.bf16.mxu0 0
  %1665 = vmatpush1.bf16.msra.mxu0 0
  %1666 = vmatprep.subr.bf16.mxu0 0
  %1667 = vmatpush1.bf16.msra.mxu0 0
  %1668 = vmatprep.subr.bf16.mxu0 0
  %1669 = vmatpush1.bf16.msra.mxu0 0
  %1670 = vmatprep.subr.bf16.mxu0 0
  %1671 = vmatpush1.bf16.msra.mxu0 0
  %1672 = vmatprep.subr.bf16.mxu0 0
  %1673 = vmatpush1.bf16.msra.mxu0 0
  %1674 = vmatprep.subr.bf16.mxu0 0
  %1675 = vmatpush1.bf16.msra.mxu0 0
  %1676 = vmatprep.subr.bf16.mxu0 0
  %1677 = vmatpush1.bf16.msra.mxu0 0
  %1678 = vmatprep.subr.bf16.mxu0 0
  %1679 = vmatpush1.bf16.msra.mxu0 0
  %1680 = vmatprep.subr.bf16.mxu0 0
  %1681 = vmatpush1.bf16.msra.mxu0 0
  %1682 = vmatprep.subr.bf16.mxu0 0
  %1683 = vmatpush1.bf16.msra.mxu0 0
  %1684 = vmatprep.subr.bf16.mxu0 0
  %1685 = vmatpush1.bf16.msra.mxu0 0
  %1686 = vmatprep.subr.bf16.mxu0 0
  %1687 = vmatpush1.bf16.msra.mxu0 0
  %1688 = vmatprep.subr.bf16.mxu0 0
  %1689 = vmatpush1.bf16.msra.mxu0 0
  %1690 = vmatprep.subr.bf16.mxu0 0
  %1691 = vmatpush1.bf16.msra.mxu0 0
  %1692 = vmatprep.mubr.bf16.mxu0 0
  %1693 = vmatmul.mubr.bf16.gmra.mrb[0].mxu0 %v1655
  %v1694 = vpop.f32.mrb[0].mxu0
  %v1695 = vadd.f32 0.0, %v1694
  %v1696 = vpop.f32.mrb[0].mxu0
  %v1697 = vpop.f32.mrb[0].mxu0
  %v1698 = vpop.f32.mrb[0].mxu0
  %1699 = vdwg.mxu0
  %v1703 = vunpack.c.l.b16 %v968
  %v1704 = vunpack.c.l.b16 %v969
  %v1705 = vunpack.c.l.b16 %v970
  %v1706 = vpack.c.b16 %v1704, %v1703
  %v1707 = vpack.c.b16 %v1705, %v1705
  %v1710 = vsel %vm284, %v909, 0
  %v1713 = vand.u32 %v1707, %v1051
  %1715 = vmatprep.subr.bf16.mxu0 0
  %1716 = vmatpush1.bf16.msra.mxu0 %v1706
  %1717 = vmatprep.subr.bf16.mxu0 0
  %1718 = vmatpush1.bf16.msra.mxu0 %v1713
  %1719 = vmatprep.subr.bf16.mxu0 0
  %1720 = vmatpush1.bf16.msra.mxu0 0
  %1721 = vmatprep.subr.bf16.mxu0 0
  %1722 = vmatpush1.bf16.msra.mxu0 0
  %1723 = vmatprep.subr.bf16.mxu0 0
  %1724 = vmatpush1.bf16.msra.mxu0 0
  %1725 = vmatprep.subr.bf16.mxu0 0
  %1726 = vmatpush1.bf16.msra.mxu0 0
  %1727 = vmatprep.subr.bf16.mxu0 0
  %1728 = vmatpush1.bf16.msra.mxu0 0
  %1729 = vmatprep.subr.bf16.mxu0 0
  %1730 = vmatpush1.bf16.msra.mxu0 0
  %1731 = vmatprep.subr.bf16.mxu0 0
  %1732 = vmatpush1.bf16.msra.mxu0 0
  %1733 = vmatprep.subr.bf16.mxu0 0
  %1734 = vmatpush1.bf16.msra.mxu0 0
  %1735 = vmatprep.subr.bf16.mxu0 0
  %1736 = vmatpush1.bf16.msra.mxu0 0
  %1737 = vmatprep.subr.bf16.mxu0 0
  %1738 = vmatpush1.bf16.msra.mxu0 0
  %1739 = vmatprep.subr.bf16.mxu0 0
  %1740 = vmatpush1.bf16.msra.mxu0 0
  %1741 = vmatprep.subr.bf16.mxu0 0
  %1742 = vmatpush1.bf16.msra.mxu0 0
  %1743 = vmatprep.subr.bf16.mxu0 0
  %1744 = vmatpush1.bf16.msra.mxu0 0
  %1745 = vmatprep.subr.bf16.mxu0 0
  %1746 = vmatpush1.bf16.msra.mxu0 0
  %1747 = vmatprep.mubr.bf16.mxu0 0
  %1748 = vmatmul.mubr.bf16.gmra.mrb[0].mxu0 %v1710
  %v1749 = vpop.f32.mrb[0].mxu0
  %v1750 = vadd.f32 0.0, %v1749
  %v1751 = vpop.f32.mrb[0].mxu0
  %v1752 = vpop.f32.mrb[0].mxu0
  %v1753 = vpop.f32.mrb[0].mxu0
  %1754 = vdwg.mxu0
  %v1758 = vunpack.c.l.b16 %v971
  %v1759 = vunpack.c.l.b16 %v972
  %v1760 = vunpack.c.l.b16 %v973
  %v1761 = vpack.c.b16 %v1759, %v1758
  %v1762 = vpack.c.b16 %v1760, %v1760
  %v1765 = vsel %vm284, %v910, 0
  %v1768 = vand.u32 %v1762, %v1051
  %1770 = vmatprep.subr.bf16.mxu0 0
  %1771 = vmatpush1.bf16.msra.mxu0 %v1761
  %1772 = vmatprep.subr.bf16.mxu0 0
  %1773 = vmatpush1.bf16.msra.mxu0 %v1768
  %1774 = vmatprep.subr.bf16.mxu0 0
  %1775 = vmatpush1.bf16.msra.mxu0 0
  %1776 = vmatprep.subr.bf16.mxu0 0
  %1777 = vmatpush1.bf16.msra.mxu0 0
  %1778 = vmatprep.subr.bf16.mxu0 0
  %1779 = vmatpush1.bf16.msra.mxu0 0
  %1780 = vmatprep.subr.bf16.mxu0 0
  %1781 = vmatpush1.bf16.msra.mxu0 0
  %1782 = vmatprep.subr.bf16.mxu0 0
  %1783 = vmatpush1.bf16.msra.mxu0 0
  %1784 = vmatprep.subr.bf16.mxu0 0
  %1785 = vmatpush1.bf16.msra.mxu0 0
  %1786 = vmatprep.subr.bf16.mxu0 0
  %1787 = vmatpush1.bf16.msra.mxu0 0
  %1788 = vmatprep.subr.bf16.mxu0 0
  %1789 = vmatpush1.bf16.msra.mxu0 0
  %1790 = vmatprep.subr.bf16.mxu0 0
  %1791 = vmatpush1.bf16.msra.mxu0 0
  %1792 = vmatprep.subr.bf16.mxu0 0
  %1793 = vmatpush1.bf16.msra.mxu0 0
  %1794 = vmatprep.subr.bf16.mxu0 0
  %1795 = vmatpush1.bf16.msra.mxu0 0
  %1796 = vmatprep.subr.bf16.mxu0 0
  %1797 = vmatpush1.bf16.msra.mxu0 0
  %1798 = vmatprep.subr.bf16.mxu0 0
  %1799 = vmatpush1.bf16.msra.mxu0 0
  %1800 = vmatprep.subr.bf16.mxu0 0
  %1801 = vmatpush1.bf16.msra.mxu0 0
  %1802 = vmatprep.mubr.bf16.mxu0 0
  %1803 = vmatmul.mubr.bf16.gmra.mrb[0].mxu0 %v1765
  %v1804 = vpop.f32.mrb[0].mxu0
  %v1805 = vadd.f32 0.0, %v1804
  %v1806 = vpop.f32.mrb[0].mxu0
  %v1807 = vpop.f32.mrb[0].mxu0
  %v1808 = vpop.f32.mrb[0].mxu0
  %1809 = vdwg.mxu0
  %v1813 = vunpack.c.l.b16 %v974
  %v1814 = vunpack.c.l.b16 %v975
  %v1815 = vunpack.c.l.b16 %v976
  %v1816 = vpack.c.b16 %v1814, %v1813
  %v1817 = vpack.c.b16 %v1815, %v1815
  %v1820 = vsel %vm284, %v911, 0
  %v1823 = vand.u32 %v1817, %v1051
  %1825 = vmatprep.subr.bf16.mxu0 0
  %1826 = vmatpush1.bf16.msra.mxu0 %v1816
  %1827 = vmatprep.subr.bf16.mxu0 0
  %1828 = vmatpush1.bf16.msra.mxu0 %v1823
  %1829 = vmatprep.subr.bf16.mxu0 0
  %1830 = vmatpush1.bf16.msra.mxu0 0
  %1831 = vmatprep.subr.bf16.mxu0 0
  %1832 = vmatpush1.bf16.msra.mxu0 0
  %1833 = vmatprep.subr.bf16.mxu0 0
  %1834 = vmatpush1.bf16.msra.mxu0 0
  %1835 = vmatprep.subr.bf16.mxu0 0
  %1836 = vmatpush1.bf16.msra.mxu0 0
  %1837 = vmatprep.subr.bf16.mxu0 0
  %1838 = vmatpush1.bf16.msra.mxu0 0
  %1839 = vmatprep.subr.bf16.mxu0 0
  %1840 = vmatpush1.bf16.msra.mxu0 0
  %1841 = vmatprep.subr.bf16.mxu0 0
  %1842 = vmatpush1.bf16.msra.mxu0 0
  %1843 = vmatprep.subr.bf16.mxu0 0
  %1844 = vmatpush1.bf16.msra.mxu0 0
  %1845 = vmatprep.subr.bf16.mxu0 0
  %1846 = vmatpush1.bf16.msra.mxu0 0
  %1847 = vmatprep.subr.bf16.mxu0 0
  %1848 = vmatpush1.bf16.msra.mxu0 0
  %1849 = vmatprep.subr.bf16.mxu0 0
  %1850 = vmatpush1.bf16.msra.mxu0 0
  %1851 = vmatprep.subr.bf16.mxu0 0
  %1852 = vmatpush1.bf16.msra.mxu0 0
  %1853 = vmatprep.subr.bf16.mxu0 0
  %1854 = vmatpush1.bf16.msra.mxu0 0
  %1855 = vmatprep.subr.bf16.mxu0 0
  %1856 = vmatpush1.bf16.msra.mxu0 0
  %1857 = vmatprep.mubr.bf16.mxu0 0
  %1858 = vmatmul.mubr.bf16.gmra.mrb[0].mxu0 %v1820
  %v1859 = vpop.f32.mrb[0].mxu0
  %v1860 = vadd.f32 0.0, %v1859
  %v1861 = vpop.f32.mrb[0].mxu0
  %v1862 = vpop.f32.mrb[0].mxu0
  %v1863 = vpop.f32.mrb[0].mxu0
  %1864 = vdwg.mxu0
  %v1868 = vunpack.c.l.b16 %v977
  %v1869 = vunpack.c.l.b16 %v978
  %v1870 = vunpack.c.l.b16 %v979
  %v1871 = vpack.c.b16 %v1869, %v1868
  %v1872 = vpack.c.b16 %v1870, %v1870
  %v1875 = vsel %vm284, %v912, 0
  %v1878 = vand.u32 %v1872, %v1051
  %1880 = vmatprep.subr.bf16.mxu0 0
  %1881 = vmatpush1.bf16.msra.mxu0 %v1871
  %1882 = vmatprep.subr.bf16.mxu0 0
  %1883 = vmatpush1.bf16.msra.mxu0 %v1878
  %1884 = vmatprep.subr.bf16.mxu0 0
  %1885 = vmatpush1.bf16.msra.mxu0 0
  %1886 = vmatprep.subr.bf16.mxu0 0
  %1887 = vmatpush1.bf16.msra.mxu0 0
  %1888 = vmatprep.subr.bf16.mxu0 0
  %1889 = vmatpush1.bf16.msra.mxu0 0
  %1890 = vmatprep.subr.bf16.mxu0 0
  %1891 = vmatpush1.bf16.msra.mxu0 0
  %1892 = vmatprep.subr.bf16.mxu0 0
  %1893 = vmatpush1.bf16.msra.mxu0 0
  %1894 = vmatprep.subr.bf16.mxu0 0
  %1895 = vmatpush1.bf16.msra.mxu0 0
  %1896 = vmatprep.subr.bf16.mxu0 0
  %1897 = vmatpush1.bf16.msra.mxu0 0
  %1898 = vmatprep.subr.bf16.mxu0 0
  %1899 = vmatpush1.bf16.msra.mxu0 0
  %1900 = vmatprep.subr.bf16.mxu0 0
  %1901 = vmatpush1.bf16.msra.mxu0 0
  %1902 = vmatprep.subr.bf16.mxu0 0
  %1903 = vmatpush1.bf16.msra.mxu0 0
  %1904 = vmatprep.subr.bf16.mxu0 0
  %1905 = vmatpush1.bf16.msra.mxu0 0
  %1906 = vmatprep.subr.bf16.mxu0 0
  %1907 = vmatpush1.bf16.msra.mxu0 0
  %1908 = vmatprep.subr.bf16.mxu0 0
  %1909 = vmatpush1.bf16.msra.mxu0 0
  %1910 = vmatprep.subr.bf16.mxu0 0
  %1911 = vmatpush1.bf16.msra.mxu0 0
  %1912 = vmatprep.mubr.bf16.mxu0 0
  %1913 = vmatmul.mubr.bf16.gmra.mrb[0].mxu0 %v1875
  %v1914 = vpop.f32.mrb[0].mxu0
  %v1915 = vadd.f32 0.0, %v1914
  %v1916 = vpop.f32.mrb[0].mxu0
  %v1917 = vpop.f32.mrb[0].mxu0
  %v1918 = vpop.f32.mrb[0].mxu0
  %1919 = vdwg.mxu0
  %v1923 = vunpack.c.l.b16 %v980
  %v1924 = vunpack.c.l.b16 %v981
  %v1925 = vunpack.c.l.b16 %v982
  %v1926 = vpack.c.b16 %v1924, %v1923
  %v1927 = vpack.c.b16 %v1925, %v1925
  %v1930 = vsel %vm284, %v913, 0
  %v1933 = vand.u32 %v1927, %v1051
  %1935 = vmatprep.subr.bf16.mxu0 0
  %1936 = vmatpush1.bf16.msra.mxu0 %v1926
  %1937 = vmatprep.subr.bf16.mxu0 0
  %1938 = vmatpush1.bf16.msra.mxu0 %v1933
  %1939 = vmatprep.subr.bf16.mxu0 0
  %1940 = vmatpush1.bf16.msra.mxu0 0
  %1941 = vmatprep.subr.bf16.mxu0 0
  %1942 = vmatpush1.bf16.msra.mxu0 0
  %1943 = vmatprep.subr.bf16.mxu0 0
  %1944 = vmatpush1.bf16.msra.mxu0 0
  %1945 = vmatprep.subr.bf16.mxu0 0
  %1946 = vmatpush1.bf16.msra.mxu0 0
  %1947 = vmatprep.subr.bf16.mxu0 0
  %1948 = vmatpush1.bf16.msra.mxu0 0
  %1949 = vmatprep.subr.bf16.mxu0 0
  %1950 = vmatpush1.bf16.msra.mxu0 0
  %1951 = vmatprep.subr.bf16.mxu0 0
  %1952 = vmatpush1.bf16.msra.mxu0 0
  %1953 = vmatprep.subr.bf16.mxu0 0
  %1954 = vmatpush1.bf16.msra.mxu0 0
  %1955 = vmatprep.subr.bf16.mxu0 0
  %1956 = vmatpush1.bf16.msra.mxu0 0
  %1957 = vmatprep.subr.bf16.mxu0 0
  %1958 = vmatpush1.bf16.msra.mxu0 0
  %1959 = vmatprep.subr.bf16.mxu0 0
  %1960 = vmatpush1.bf16.msra.mxu0 0
  %1961 = vmatprep.subr.bf16.mxu0 0
  %1962 = vmatpush1.bf16.msra.mxu0 0
  %1963 = vmatprep.subr.bf16.mxu0 0
  %1964 = vmatpush1.bf16.msra.mxu0 0
  %1965 = vmatprep.subr.bf16.mxu0 0
  %1966 = vmatpush1.bf16.msra.mxu0 0
  %1967 = vmatprep.mubr.bf16.mxu0 0
  %1968 = vmatmul.mubr.bf16.gmra.mrb[0].mxu0 %v1930
  %v1969 = vpop.f32.mrb[0].mxu0
  %v1970 = vadd.f32 0.0, %v1969
  %v1971 = vpop.f32.mrb[0].mxu0
  %v1972 = vpop.f32.mrb[0].mxu0
  %v1973 = vpop.f32.mrb[0].mxu0
  %1974 = vdwg.mxu0
  %v1978 = vunpack.c.l.b16 %v983
  %v1979 = vunpack.c.l.b16 %v984
  %v1980 = vunpack.c.l.b16 %v985
  %v1981 = vpack.c.b16 %v1979, %v1978
  %v1982 = vpack.c.b16 %v1980, %v1980
  %v1985 = vsel %vm284, %v914, 0
  %v1988 = vand.u32 %v1982, %v1051
  %1990 = vmatprep.subr.bf16.mxu0 0
  %1991 = vmatpush1.bf16.msra.mxu0 %v1981
  %1992 = vmatprep.subr.bf16.mxu0 0
  %1993 = vmatpush1.bf16.msra.mxu0 %v1988
  %1994 = vmatprep.subr.bf16.mxu0 0
  %1995 = vmatpush1.bf16.msra.mxu0 0
  %1996 = vmatprep.subr.bf16.mxu0 0
  %1997 = vmatpush1.bf16.msra.mxu0 0
  %1998 = vmatprep.subr.bf16.mxu0 0
  %1999 = vmatpush1.bf16.msra.mxu0 0
  %2000 = vmatprep.subr.bf16.mxu0 0
  %2001 = vmatpush1.bf16.msra.mxu0 0
  %2002 = vmatprep.subr.bf16.mxu0 0
  %2003 = vmatpush1.bf16.msra.mxu0 0
  %2004 = vmatprep.subr.bf16.mxu0 0
  %2005 = vmatpush1.bf16.msra.mxu0 0
  %2006 = vmatprep.subr.bf16.mxu0 0
  %2007 = vmatpush1.bf16.msra.mxu0 0
  %2008 = vmatprep.subr.bf16.mxu0 0
  %2009 = vmatpush1.bf16.msra.mxu0 0
  %2010 = vmatprep.subr.bf16.mxu0 0
  %2011 = vmatpush1.bf16.msra.mxu0 0
  %2012 = vmatprep.subr.bf16.mxu0 0
  %2013 = vmatpush1.bf16.msra.mxu0 0
  %2014 = vmatprep.subr.bf16.mxu0 0
  %2015 = vmatpush1.bf16.msra.mxu0 0
  %2016 = vmatprep.subr.bf16.mxu0 0
  %2017 = vmatpush1.bf16.msra.mxu0 0
  %2018 = vmatprep.subr.bf16.mxu0 0
  %2019 = vmatpush1.bf16.msra.mxu0 0
  %2020 = vmatprep.subr.bf16.mxu0 0
  %2021 = vmatpush1.bf16.msra.mxu0 0
  %2022 = vmatprep.mubr.bf16.mxu0 0
  %2023 = vmatmul.mubr.bf16.gmra.mrb[0].mxu0 %v1985
  %v2024 = vpop.f32.mrb[0].mxu0
  %v2025 = vadd.f32 0.0, %v2024
  %v2026 = vpop.f32.mrb[0].mxu0
  %v2027 = vpop.f32.mrb[0].mxu0
  %v2028 = vpop.f32.mrb[0].mxu0
  %2029 = vdwg.mxu0
  %v2033 = vunpack.c.l.b16 %v986
  %v2034 = vunpack.c.l.b16 %v987
  %v2035 = vunpack.c.l.b16 %v988
  %v2036 = vpack.c.b16 %v2034, %v2033
  %v2037 = vpack.c.b16 %v2035, %v2035
  %v2040 = vsel %vm284, %v915, 0
  %v2043 = vand.u32 %v2037, %v1051
  %2045 = vmatprep.subr.bf16.mxu0 0
  %2046 = vmatpush1.bf16.msra.mxu0 %v2036
  %2047 = vmatprep.subr.bf16.mxu0 0
  %2048 = vmatpush1.bf16.msra.mxu0 %v2043
  %2049 = vmatprep.subr.bf16.mxu0 0
  %2050 = vmatpush1.bf16.msra.mxu0 0
  %2051 = vmatprep.subr.bf16.mxu0 0
  %2052 = vmatpush1.bf16.msra.mxu0 0
  %2053 = vmatprep.subr.bf16.mxu0 0
  %2054 = vmatpush1.bf16.msra.mxu0 0
  %2055 = vmatprep.subr.bf16.mxu0 0
  %2056 = vmatpush1.bf16.msra.mxu0 0
  %2057 = vmatprep.subr.bf16.mxu0 0
  %2058 = vmatpush1.bf16.msra.mxu0 0
  %2059 = vmatprep.subr.bf16.mxu0 0
  %2060 = vmatpush1.bf16.msra.mxu0 0
  %2061 = vmatprep.subr.bf16.mxu0 0
  %2062 = vmatpush1.bf16.msra.mxu0 0
  %2063 = vmatprep.subr.bf16.mxu0 0
  %2064 = vmatpush1.bf16.msra.mxu0 0
  %2065 = vmatprep.subr.bf16.mxu0 0
  %2066 = vmatpush1.bf16.msra.mxu0 0
  %2067 = vmatprep.subr.bf16.mxu0 0
  %2068 = vmatpush1.bf16.msra.mxu0 0
  %2069 = vmatprep.subr.bf16.mxu0 0
  %2070 = vmatpush1.bf16.msra.mxu0 0
  %2071 = vmatprep.subr.bf16.mxu0 0
  %2072 = vmatpush1.bf16.msra.mxu0 0
  %2073 = vmatprep.subr.bf16.mxu0 0
  %2074 = vmatpush1.bf16.msra.mxu0 0
  %2075 = vmatprep.subr.bf16.mxu0 0
  %2076 = vmatpush1.bf16.msra.mxu0 0
  %2077 = vmatprep.mubr.bf16.mxu0 0
  %2078 = vmatmul.mubr.bf16.gmra.mrb[0].mxu0 %v2040
  %v2079 = vpop.f32.mrb[0].mxu0
  %v2080 = vadd.f32 0.0, %v2079
  %v2081 = vpop.f32.mrb[0].mxu0
  %v2082 = vpop.f32.mrb[0].mxu0
  %v2083 = vpop.f32.mrb[0].mxu0
  %2084 = vdwg.mxu0
  %v2088 = vunpack.c.l.b16 %v989
  %v2089 = vunpack.c.l.b16 %v990
  %v2090 = vunpack.c.l.b16 %v991
  %v2091 = vpack.c.b16 %v2089, %v2088
  %v2092 = vpack.c.b16 %v2090, %v2090
  %v2095 = vsel %vm284, %v916, 0
  %v2098 = vand.u32 %v2092, %v1051
  %2100 = vmatprep.subr.bf16.mxu0 0
  %2101 = vmatpush1.bf16.msra.mxu0 %v2091
  %2102 = vmatprep.subr.bf16.mxu0 0
  %2103 = vmatpush1.bf16.msra.mxu0 %v2098
  %2104 = vmatprep.subr.bf16.mxu0 0
  %2105 = vmatpush1.bf16.msra.mxu0 0
  %2106 = vmatprep.subr.bf16.mxu0 0
  %2107 = vmatpush1.bf16.msra.mxu0 0
  %2108 = vmatprep.subr.bf16.mxu0 0
  %2109 = vmatpush1.bf16.msra.mxu0 0
  %2110 = vmatprep.subr.bf16.mxu0 0
  %2111 = vmatpush1.bf16.msra.mxu0 0
  %2112 = vmatprep.subr.bf16.mxu0 0
  %2113 = vmatpush1.bf16.msra.mxu0 0
  %2114 = vmatprep.subr.bf16.mxu0 0
  %2115 = vmatpush1.bf16.msra.mxu0 0
  %2116 = vmatprep.subr.bf16.mxu0 0
  %2117 = vmatpush1.bf16.msra.mxu0 0
  %2118 = vmatprep.subr.bf16.mxu0 0
  %2119 = vmatpush1.bf16.msra.mxu0 0
  %2120 = vmatprep.subr.bf16.mxu0 0
  %2121 = vmatpush1.bf16.msra.mxu0 0
  %2122 = vmatprep.subr.bf16.mxu0 0
  %2123 = vmatpush1.bf16.msra.mxu0 0
  %2124 = vmatprep.subr.bf16.mxu0 0
  %2125 = vmatpush1.bf16.msra.mxu0 0
  %2126 = vmatprep.subr.bf16.mxu0 0
  %2127 = vmatpush1.bf16.msra.mxu0 0
  %2128 = vmatprep.subr.bf16.mxu0 0
  %2129 = vmatpush1.bf16.msra.mxu0 0
  %2130 = vmatprep.subr.bf16.mxu0 0
  %2131 = vmatpush1.bf16.msra.mxu0 0
  %2132 = vmatprep.mubr.bf16.mxu0 0
  %2133 = vmatmul.mubr.bf16.gmra.mrb[0].mxu0 %v2095
  %v2134 = vpop.f32.mrb[0].mxu0
  %v2135 = vadd.f32 0.0, %v2134
  %v2136 = vpop.f32.mrb[0].mxu0
  %v2137 = vpop.f32.mrb[0].mxu0
  %v2138 = vpop.f32.mrb[0].mxu0
  %2139 = vdwg.mxu0
  %v2143 = vunpack.c.l.b16 %v992
  %v2144 = vunpack.c.l.b16 %v993
  %v2145 = vunpack.c.l.b16 %v994
  %v2146 = vpack.c.b16 %v2144, %v2143
  %v2147 = vpack.c.b16 %v2145, %v2145
  %v2150 = vsel %vm284, %v917, 0
  %v2153 = vand.u32 %v2147, %v1051
  %2155 = vmatprep.subr.bf16.mxu0 0
  %2156 = vmatpush1.bf16.msra.mxu0 %v2146
  %2157 = vmatprep.subr.bf16.mxu0 0
  %2158 = vmatpush1.bf16.msra.mxu0 %v2153
  %2159 = vmatprep.subr.bf16.mxu0 0
  %2160 = vmatpush1.bf16.msra.mxu0 0
  %2161 = vmatprep.subr.bf16.mxu0 0
  %2162 = vmatpush1.bf16.msra.mxu0 0
  %2163 = vmatprep.subr.bf16.mxu0 0
  %2164 = vmatpush1.bf16.msra.mxu0 0
  %2165 = vmatprep.subr.bf16.mxu0 0
  %2166 = vmatpush1.bf16.msra.mxu0 0
  %2167 = vmatprep.subr.bf16.mxu0 0
  %2168 = vmatpush1.bf16.msra.mxu0 0
  %2169 = vmatprep.subr.bf16.mxu0 0
  %2170 = vmatpush1.bf16.msra.mxu0 0
  %2171 = vmatprep.subr.bf16.mxu0 0
  %2172 = vmatpush1.bf16.msra.mxu0 0
  %2173 = vmatprep.subr.bf16.mxu0 0
  %2174 = vmatpush1.bf16.msra.mxu0 0
  %2175 = vmatprep.subr.bf16.mxu0 0
  %2176 = vmatpush1.bf16.msra.mxu0 0
  %2177 = vmatprep.subr.bf16.mxu0 0
  %2178 = vmatpush1.bf16.msra.mxu0 0
  %2179 = vmatprep.subr.bf16.mxu0 0
  %2180 = vmatpush1.bf16.msra.mxu0 0
  %2181 = vmatprep.subr.bf16.mxu0 0
  %2182 = vmatpush1.bf16.msra.mxu0 0
  %2183 = vmatprep.subr.bf16.mxu0 0
  %2184 = vmatpush1.bf16.msra.mxu0 0
  %2185 = vmatprep.subr.bf16.mxu0 0
  %2186 = vmatpush1.bf16.msra.mxu0 0
  %2187 = vmatprep.mubr.bf16.mxu0 0
  %2188 = vmatmul.mubr.bf16.gmra.mrb[0].mxu0 %v2150
  %v2189 = vpop.f32.mrb[0].mxu0
  %v2190 = vadd.f32 0.0, %v2189
  %v2191 = vpop.f32.mrb[0].mxu0
  %v2192 = vpop.f32.mrb[0].mxu0
  %v2193 = vpop.f32.mrb[0].mxu0
  %2194 = vdwg.mxu0
  %v2198 = vunpack.c.l.b16 %v995
  %v2199 = vunpack.c.l.b16 %v996
  %v2200 = vunpack.c.l.b16 %v997
  %v2201 = vpack.c.b16 %v2199, %v2198
  %v2202 = vpack.c.b16 %v2200, %v2200
  %v2205 = vsel %vm284, %v918, 0
  %v2208 = vand.u32 %v2202, %v1051
  %2210 = vmatprep.subr.bf16.mxu0 0
  %2211 = vmatpush1.bf16.msra.mxu0 %v2201
  %2212 = vmatprep.subr.bf16.mxu0 0
  %2213 = vmatpush1.bf16.msra.mxu0 %v2208
  %2214 = vmatprep.subr.bf16.mxu0 0
  %2215 = vmatpush1.bf16.msra.mxu0 0
  %2216 = vmatprep.subr.bf16.mxu0 0
  %2217 = vmatpush1.bf16.msra.mxu0 0
  %2218 = vmatprep.subr.bf16.mxu0 0
  %2219 = vmatpush1.bf16.msra.mxu0 0
  %2220 = vmatprep.subr.bf16.mxu0 0
  %2221 = vmatpush1.bf16.msra.mxu0 0
  %2222 = vmatprep.subr.bf16.mxu0 0
  %2223 = vmatpush1.bf16.msra.mxu0 0
  %2224 = vmatprep.subr.bf16.mxu0 0
  %2225 = vmatpush1.bf16.msra.mxu0 0
  %2226 = vmatprep.subr.bf16.mxu0 0
  %2227 = vmatpush1.bf16.msra.mxu0 0
  %2228 = vmatprep.subr.bf16.mxu0 0
  %2229 = vmatpush1.bf16.msra.mxu0 0
  %2230 = vmatprep.subr.bf16.mxu0 0
  %2231 = vmatpush1.bf16.msra.mxu0 0
  %2232 = vmatprep.subr.bf16.mxu0 0
  %2233 = vmatpush1.bf16.msra.mxu0 0
  %2234 = vmatprep.subr.bf16.mxu0 0
  %2235 = vmatpush1.bf16.msra.mxu0 0
  %2236 = vmatprep.subr.bf16.mxu0 0
  %2237 = vmatpush1.bf16.msra.mxu0 0
  %2238 = vmatprep.subr.bf16.mxu0 0
  %2239 = vmatpush1.bf16.msra.mxu0 0
  %2240 = vmatprep.subr.bf16.mxu0 0
  %2241 = vmatpush1.bf16.msra.mxu0 0
  %2242 = vmatprep.mubr.bf16.mxu0 0
  %2243 = vmatmul.mubr.bf16.gmra.mrb[0].mxu0 %v2205
  %v2244 = vpop.f32.mrb[0].mxu0
  %v2245 = vadd.f32 0.0, %v2244
  %v2246 = vpop.f32.mrb[0].mxu0
  %v2247 = vpop.f32.mrb[0].mxu0
  %v2248 = vpop.f32.mrb[0].mxu0
  %2249 = vdwg.mxu0
  %v2253 = vunpack.c.l.b16 %v998
  %v2254 = vunpack.c.l.b16 %v999
  %v2255 = vunpack.c.l.b16 %v1000
  %v2256 = vpack.c.b16 %v2254, %v2253
  %v2257 = vpack.c.b16 %v2255, %v2255
  %v2260 = vsel %vm284, %v919, 0
  %v2263 = vand.u32 %v2257, %v1051
  %2265 = vmatprep.subr.bf16.mxu0 0
  %2266 = vmatpush1.bf16.msra.mxu0 %v2256
  %2267 = vmatprep.subr.bf16.mxu0 0
  %2268 = vmatpush1.bf16.msra.mxu0 %v2263
  %2269 = vmatprep.subr.bf16.mxu0 0
  %2270 = vmatpush1.bf16.msra.mxu0 0
  %2271 = vmatprep.subr.bf16.mxu0 0
  %2272 = vmatpush1.bf16.msra.mxu0 0
  %2273 = vmatprep.subr.bf16.mxu0 0
  %2274 = vmatpush1.bf16.msra.mxu0 0
  %2275 = vmatprep.subr.bf16.mxu0 0
  %2276 = vmatpush1.bf16.msra.mxu0 0
  %2277 = vmatprep.subr.bf16.mxu0 0
  %2278 = vmatpush1.bf16.msra.mxu0 0
  %2279 = vmatprep.subr.bf16.mxu0 0
  %2280 = vmatpush1.bf16.msra.mxu0 0
  %2281 = vmatprep.subr.bf16.mxu0 0
  %2282 = vmatpush1.bf16.msra.mxu0 0
  %2283 = vmatprep.subr.bf16.mxu0 0
  %2284 = vmatpush1.bf16.msra.mxu0 0
  %2285 = vmatprep.subr.bf16.mxu0 0
  %2286 = vmatpush1.bf16.msra.mxu0 0
  %2287 = vmatprep.subr.bf16.mxu0 0
  %2288 = vmatpush1.bf16.msra.mxu0 0
  %2289 = vmatprep.subr.bf16.mxu0 0
  %2290 = vmatpush1.bf16.msra.mxu0 0
  %2291 = vmatprep.subr.bf16.mxu0 0
  %2292 = vmatpush1.bf16.msra.mxu0 0
  %2293 = vmatprep.subr.bf16.mxu0 0
  %2294 = vmatpush1.bf16.msra.mxu0 0
  %2295 = vmatprep.subr.bf16.mxu0 0
  %2296 = vmatpush1.bf16.msra.mxu0 0
  %2297 = vmatprep.mubr.bf16.mxu0 0
  %2298 = vmatmul.mubr.bf16.gmra.mrb[0].mxu0 %v2260
  %v2299 = vpop.f32.mrb[0].mxu0
  %v2300 = vadd.f32 0.0, %v2299
  %v2301 = vpop.f32.mrb[0].mxu0
  %v2302 = vpop.f32.mrb[0].mxu0
  %v2303 = vpop.f32.mrb[0].mxu0
  %2304 = vdwg.mxu0
  %v2308 = vunpack.c.l.b16 %v1001
  %v2309 = vunpack.c.l.b16 %v1002
  %v2310 = vunpack.c.l.b16 %v1003
  %v2311 = vpack.c.b16 %v2309, %v2308
  %v2312 = vpack.c.b16 %v2310, %v2310
  %v2315 = vsel %vm284, %v920, 0
  %v2318 = vand.u32 %v2312, %v1051
  %2320 = vmatprep.subr.bf16.mxu0 0
  %2321 = vmatpush1.bf16.msra.mxu0 %v2311
  %2322 = vmatprep.subr.bf16.mxu0 0
  %2323 = vmatpush1.bf16.msra.mxu0 %v2318
  %2324 = vmatprep.subr.bf16.mxu0 0
  %2325 = vmatpush1.bf16.msra.mxu0 0
  %2326 = vmatprep.subr.bf16.mxu0 0
  %2327 = vmatpush1.bf16.msra.mxu0 0
  %2328 = vmatprep.subr.bf16.mxu0 0
  %2329 = vmatpush1.bf16.msra.mxu0 0
  %2330 = vmatprep.subr.bf16.mxu0 0
  %2331 = vmatpush1.bf16.msra.mxu0 0
  %2332 = vmatprep.subr.bf16.mxu0 0
  %2333 = vmatpush1.bf16.msra.mxu0 0
  %2334 = vmatprep.subr.bf16.mxu0 0
  %2335 = vmatpush1.bf16.msra.mxu0 0
  %2336 = vmatprep.subr.bf16.mxu0 0
  %2337 = vmatpush1.bf16.msra.mxu0 0
  %2338 = vmatprep.subr.bf16.mxu0 0
  %2339 = vmatpush1.bf16.msra.mxu0 0
  %2340 = vmatprep.subr.bf16.mxu0 0
  %2341 = vmatpush1.bf16.msra.mxu0 0
  %2342 = vmatprep.subr.bf16.mxu0 0
  %2343 = vmatpush1.bf16.msra.mxu0 0
  %2344 = vmatprep.subr.bf16.mxu0 0
  %2345 = vmatpush1.bf16.msra.mxu0 0
  %2346 = vmatprep.subr.bf16.mxu0 0
  %2347 = vmatpush1.bf16.msra.mxu0 0
  %2348 = vmatprep.subr.bf16.mxu0 0
  %2349 = vmatpush1.bf16.msra.mxu0 0
  %2350 = vmatprep.subr.bf16.mxu0 0
  %2351 = vmatpush1.bf16.msra.mxu0 0
  %2352 = vmatprep.mubr.bf16.mxu0 0
  %2353 = vmatmul.mubr.bf16.gmra.mrb[0].mxu0 %v2315
  %v2354 = vpop.f32.mrb[0].mxu0
  %v2355 = vadd.f32 0.0, %v2354
  %v2356 = vpop.f32.mrb[0].mxu0
  %v2357 = vpop.f32.mrb[0].mxu0
  %v2358 = vpop.f32.mrb[0].mxu0
  %2359 = vdwg.mxu0
  %v2363 = vunpack.c.l.b16 %v1004
  %v2364 = vunpack.c.l.b16 %v1005
  %v2365 = vunpack.c.l.b16 %v1006
  %v2366 = vpack.c.b16 %v2364, %v2363
  %v2367 = vpack.c.b16 %v2365, %v2365
  %v2370 = vsel %vm284, %v921, 0
  %v2373 = vand.u32 %v2367, %v1051
  %2375 = vmatprep.subr.bf16.mxu0 0
  %2376 = vmatpush1.bf16.msra.mxu0 %v2366
  %2377 = vmatprep.subr.bf16.mxu0 0
  %2378 = vmatpush1.bf16.msra.mxu0 %v2373
  %2379 = vmatprep.subr.bf16.mxu0 0
  %2380 = vmatpush1.bf16.msra.mxu0 0
  %2381 = vmatprep.subr.bf16.mxu0 0
  %2382 = vmatpush1.bf16.msra.mxu0 0
  %2383 = vmatprep.subr.bf16.mxu0 0
  %2384 = vmatpush1.bf16.msra.mxu0 0
  %2385 = vmatprep.subr.bf16.mxu0 0
  %2386 = vmatpush1.bf16.msra.mxu0 0
  %2387 = vmatprep.subr.bf16.mxu0 0
  %2388 = vmatpush1.bf16.msra.mxu0 0
  %2389 = vmatprep.subr.bf16.mxu0 0
  %2390 = vmatpush1.bf16.msra.mxu0 0
  %2391 = vmatprep.subr.bf16.mxu0 0
  %2392 = vmatpush1.bf16.msra.mxu0 0
  %2393 = vmatprep.subr.bf16.mxu0 0
  %2394 = vmatpush1.bf16.msra.mxu0 0
  %2395 = vmatprep.subr.bf16.mxu0 0
  %2396 = vmatpush1.bf16.msra.mxu0 0
  %2397 = vmatprep.subr.bf16.mxu0 0
  %2398 = vmatpush1.bf16.msra.mxu0 0
  %2399 = vmatprep.subr.bf16.mxu0 0
  %2400 = vmatpush1.bf16.msra.mxu0 0
  %2401 = vmatprep.subr.bf16.mxu0 0
  %2402 = vmatpush1.bf16.msra.mxu0 0
  %2403 = vmatprep.subr.bf16.mxu0 0
  %2404 = vmatpush1.bf16.msra.mxu0 0
  %2405 = vmatprep.subr.bf16.mxu0 0
  %2406 = vmatpush1.bf16.msra.mxu0 0
  %2407 = vmatprep.mubr.bf16.mxu0 0
  %2408 = vmatmul.mubr.bf16.gmra.mrb[0].mxu0 %v2370
  %v2409 = vpop.f32.mrb[0].mxu0
  %v2410 = vadd.f32 0.0, %v2409
  %v2411 = vpop.f32.mrb[0].mxu0
  %v2412 = vpop.f32.mrb[0].mxu0
  %v2413 = vpop.f32.mrb[0].mxu0
  %2414 = vdwg.mxu0
  %v2418 = vunpack.c.l.b16 %v1007
  %v2419 = vunpack.c.l.b16 %v1008
  %v2420 = vunpack.c.l.b16 %v1009
  %v2421 = vpack.c.b16 %v2419, %v2418
  %v2422 = vpack.c.b16 %v2420, %v2420
  %v2425 = vsel %vm284, %v922, 0
  %v2428 = vand.u32 %v2422, %v1051
  %2430 = vmatprep.subr.bf16.mxu0 0
  %2431 = vmatpush1.bf16.msra.mxu0 %v2421
  %2432 = vmatprep.subr.bf16.mxu0 0
  %2433 = vmatpush1.bf16.msra.mxu0 %v2428
  %2434 = vmatprep.subr.bf16.mxu0 0
  %2435 = vmatpush1.bf16.msra.mxu0 0
  %2436 = vmatprep.subr.bf16.mxu0 0
  %2437 = vmatpush1.bf16.msra.mxu0 0
  %2438 = vmatprep.subr.bf16.mxu0 0
  %2439 = vmatpush1.bf16.msra.mxu0 0
  %2440 = vmatprep.subr.bf16.mxu0 0
  %2441 = vmatpush1.bf16.msra.mxu0 0
  %2442 = vmatprep.subr.bf16.mxu0 0
  %2443 = vmatpush1.bf16.msra.mxu0 0
  %2444 = vmatprep.subr.bf16.mxu0 0
  %2445 = vmatpush1.bf16.msra.mxu0 0
  %2446 = vmatprep.subr.bf16.mxu0 0
  %2447 = vmatpush1.bf16.msra.mxu0 0
  %2448 = vmatprep.subr.bf16.mxu0 0
  %2449 = vmatpush1.bf16.msra.mxu0 0
  %2450 = vmatprep.subr.bf16.mxu0 0
  %2451 = vmatpush1.bf16.msra.mxu0 0
  %2452 = vmatprep.subr.bf16.mxu0 0
  %2453 = vmatpush1.bf16.msra.mxu0 0
  %2454 = vmatprep.subr.bf16.mxu0 0
  %2455 = vmatpush1.bf16.msra.mxu0 0
  %2456 = vmatprep.subr.bf16.mxu0 0
  %2457 = vmatpush1.bf16.msra.mxu0 0
  %2458 = vmatprep.subr.bf16.mxu0 0
  %2459 = vmatpush1.bf16.msra.mxu0 0
  %2460 = vmatprep.subr.bf16.mxu0 0
  %2461 = vmatpush1.bf16.msra.mxu0 0
  %2462 = vmatprep.mubr.bf16.mxu0 0
  %2463 = vmatmul.mubr.bf16.gmra.mrb[0].mxu0 %v2425
  %v2464 = vpop.f32.mrb[0].mxu0
  %v2465 = vadd.f32 0.0, %v2464
  %v2466 = vpop.f32.mrb[0].mxu0
  %v2467 = vpop.f32.mrb[0].mxu0
  %v2468 = vpop.f32.mrb[0].mxu0
  %2469 = vdwg.mxu0
  %v2473 = vunpack.c.l.b16 %v1010
  %v2474 = vunpack.c.l.b16 %v1011
  %v2475 = vunpack.c.l.b16 %v1012
  %v2476 = vpack.c.b16 %v2474, %v2473
  %v2477 = vpack.c.b16 %v2475, %v2475
  %v2480 = vsel %vm284, %v923, 0
  %v2483 = vand.u32 %v2477, %v1051
  %2485 = vmatprep.subr.bf16.mxu0 0
  %2486 = vmatpush1.bf16.msra.mxu0 %v2476
  %2487 = vmatprep.subr.bf16.mxu0 0
  %2488 = vmatpush1.bf16.msra.mxu0 %v2483
  %2489 = vmatprep.subr.bf16.mxu0 0
  %2490 = vmatpush1.bf16.msra.mxu0 0
  %2491 = vmatprep.subr.bf16.mxu0 0
  %2492 = vmatpush1.bf16.msra.mxu0 0
  %2493 = vmatprep.subr.bf16.mxu0 0
  %2494 = vmatpush1.bf16.msra.mxu0 0
  %2495 = vmatprep.subr.bf16.mxu0 0
  %2496 = vmatpush1.bf16.msra.mxu0 0
  %2497 = vmatprep.subr.bf16.mxu0 0
  %2498 = vmatpush1.bf16.msra.mxu0 0
  %2499 = vmatprep.subr.bf16.mxu0 0
  %2500 = vmatpush1.bf16.msra.mxu0 0
  %2501 = vmatprep.subr.bf16.mxu0 0
  %2502 = vmatpush1.bf16.msra.mxu0 0
  %2503 = vmatprep.subr.bf16.mxu0 0
  %2504 = vmatpush1.bf16.msra.mxu0 0
  %2505 = vmatprep.subr.bf16.mxu0 0
  %2506 = vmatpush1.bf16.msra.mxu0 0
  %2507 = vmatprep.subr.bf16.mxu0 0
  %2508 = vmatpush1.bf16.msra.mxu0 0
  %2509 = vmatprep.subr.bf16.mxu0 0
  %2510 = vmatpush1.bf16.msra.mxu0 0
  %2511 = vmatprep.subr.bf16.mxu0 0
  %2512 = vmatpush1.bf16.msra.mxu0 0
  %2513 = vmatprep.subr.bf16.mxu0 0
  %2514 = vmatpush1.bf16.msra.mxu0 0
  %2515 = vmatprep.subr.bf16.mxu0 0
  %2516 = vmatpush1.bf16.msra.mxu0 0
  %2517 = vmatprep.mubr.bf16.mxu0 0
  %2518 = vmatmul.mubr.bf16.gmra.mrb[0].mxu0 %v2480
  %v2519 = vpop.f32.mrb[0].mxu0
  %v2520 = vadd.f32 0.0, %v2519
  %v2521 = vpop.f32.mrb[0].mxu0
  %v2522 = vpop.f32.mrb[0].mxu0
  %v2523 = vpop.f32.mrb[0].mxu0
  %2524 = vdwg.mxu0
  %v2528 = vunpack.c.l.b16 %v1013
  %v2529 = vunpack.c.l.b16 %v1014
  %v2530 = vunpack.c.l.b16 %v1015
  %v2531 = vpack.c.b16 %v2529, %v2528
  %v2532 = vpack.c.b16 %v2530, %v2530
  %v2535 = vsel %vm284, %v924, 0
  %v2538 = vand.u32 %v2532, %v1051
  %2540 = vmatprep.subr.bf16.mxu0 0
  %2541 = vmatpush1.bf16.msra.mxu0 %v2531
  %2542 = vmatprep.subr.bf16.mxu0 0
  %2543 = vmatpush1.bf16.msra.mxu0 %v2538
  %2544 = vmatprep.subr.bf16.mxu0 0
  %2545 = vmatpush1.bf16.msra.mxu0 0
  %2546 = vmatprep.subr.bf16.mxu0 0
  %2547 = vmatpush1.bf16.msra.mxu0 0
  %2548 = vmatprep.subr.bf16.mxu0 0
  %2549 = vmatpush1.bf16.msra.mxu0 0
  %2550 = vmatprep.subr.bf16.mxu0 0
  %2551 = vmatpush1.bf16.msra.mxu0 0
  %2552 = vmatprep.subr.bf16.mxu0 0
  %2553 = vmatpush1.bf16.msra.mxu0 0
  %2554 = vmatprep.subr.bf16.mxu0 0
  %2555 = vmatpush1.bf16.msra.mxu0 0
  %2556 = vmatprep.subr.bf16.mxu0 0
  %2557 = vmatpush1.bf16.msra.mxu0 0
  %2558 = vmatprep.subr.bf16.mxu0 0
  %2559 = vmatpush1.bf16.msra.mxu0 0
  %2560 = vmatprep.subr.bf16.mxu0 0
  %2561 = vmatpush1.bf16.msra.mxu0 0
  %2562 = vmatprep.subr.bf16.mxu0 0
  %2563 = vmatpush1.bf16.msra.mxu0 0
  %2564 = vmatprep.subr.bf16.mxu0 0
  %2565 = vmatpush1.bf16.msra.mxu0 0
  %2566 = vmatprep.subr.bf16.mxu0 0
  %2567 = vmatpush1.bf16.msra.mxu0 0
  %2568 = vmatprep.subr.bf16.mxu0 0
  %2569 = vmatpush1.bf16.msra.mxu0 0
  %2570 = vmatprep.subr.bf16.mxu0 0
  %2571 = vmatpush1.bf16.msra.mxu0 0
  %2572 = vmatprep.mubr.bf16.mxu0 0
  %2573 = vmatmul.mubr.bf16.gmra.mrb[0].mxu0 %v2535
  %v2574 = vpop.f32.mrb[0].mxu0
  %v2575 = vadd.f32 0.0, %v2574
  %v2576 = vpop.f32.mrb[0].mxu0
  %v2577 = vpop.f32.mrb[0].mxu0
  %v2578 = vpop.f32.mrb[0].mxu0
  %2579 = vdwg.mxu0
  %v2583 = vunpack.c.l.b16 %v1016
  %v2584 = vunpack.c.l.b16 %v1017
  %v2585 = vunpack.c.l.b16 %v1018
  %v2586 = vpack.c.b16 %v2584, %v2583
  %v2587 = vpack.c.b16 %v2585, %v2585
  %v2590 = vsel %vm284, %v925, 0
  %v2593 = vand.u32 %v2587, %v1051
  %2595 = vmatprep.subr.bf16.mxu0 0
  %2596 = vmatpush1.bf16.msra.mxu0 %v2586
  %2597 = vmatprep.subr.bf16.mxu0 0
  %2598 = vmatpush1.bf16.msra.mxu0 %v2593
  %2599 = vmatprep.subr.bf16.mxu0 0
  %2600 = vmatpush1.bf16.msra.mxu0 0
  %2601 = vmatprep.subr.bf16.mxu0 0
  %2602 = vmatpush1.bf16.msra.mxu0 0
  %2603 = vmatprep.subr.bf16.mxu0 0
  %2604 = vmatpush1.bf16.msra.mxu0 0
  %2605 = vmatprep.subr.bf16.mxu0 0
  %2606 = vmatpush1.bf16.msra.mxu0 0
  %2607 = vmatprep.subr.bf16.mxu0 0
  %2608 = vmatpush1.bf16.msra.mxu0 0
  %2609 = vmatprep.subr.bf16.mxu0 0
  %2610 = vmatpush1.bf16.msra.mxu0 0
  %2611 = vmatprep.subr.bf16.mxu0 0
  %2612 = vmatpush1.bf16.msra.mxu0 0
  %2613 = vmatprep.subr.bf16.mxu0 0
  %2614 = vmatpush1.bf16.msra.mxu0 0
  %2615 = vmatprep.subr.bf16.mxu0 0
  %2616 = vmatpush1.bf16.msra.mxu0 0
  %2617 = vmatprep.subr.bf16.mxu0 0
  %2618 = vmatpush1.bf16.msra.mxu0 0
  %2619 = vmatprep.subr.bf16.mxu0 0
  %2620 = vmatpush1.bf16.msra.mxu0 0
  %2621 = vmatprep.subr.bf16.mxu0 0
  %2622 = vmatpush1.bf16.msra.mxu0 0
  %2623 = vmatprep.subr.bf16.mxu0 0
  %2624 = vmatpush1.bf16.msra.mxu0 0
  %2625 = vmatprep.subr.bf16.mxu0 0
  %2626 = vmatpush1.bf16.msra.mxu0 0
  %2627 = vmatprep.mubr.bf16.mxu0 0
  %2628 = vmatmul.mubr.bf16.gmra.mrb[0].mxu0 %v2590
  %v2629 = vpop.f32.mrb[0].mxu0
  %v2630 = vadd.f32 0.0, %v2629
  %v2631 = vpop.f32.mrb[0].mxu0
  %v2632 = vpop.f32.mrb[0].mxu0
  %v2633 = vpop.f32.mrb[0].mxu0
  %2634 = vdwg.mxu0
  %v2638 = vunpack.c.l.b16 %v1019
  %v2639 = vunpack.c.l.b16 %v1020
  %v2640 = vunpack.c.l.b16 %v1021
  %v2641 = vpack.c.b16 %v2639, %v2638
  %v2642 = vpack.c.b16 %v2640, %v2640
  %v2645 = vsel %vm284, %v926, 0
  %v2648 = vand.u32 %v2642, %v1051
  %2650 = vmatprep.subr.bf16.mxu0 0
  %2651 = vmatpush1.bf16.msra.mxu0 %v2641
  %2652 = vmatprep.subr.bf16.mxu0 0
  %2653 = vmatpush1.bf16.msra.mxu0 %v2648
  %2654 = vmatprep.subr.bf16.mxu0 0
  %2655 = vmatpush1.bf16.msra.mxu0 0
  %2656 = vmatprep.subr.bf16.mxu0 0
  %2657 = vmatpush1.bf16.msra.mxu0 0
  %2658 = vmatprep.subr.bf16.mxu0 0
  %2659 = vmatpush1.bf16.msra.mxu0 0
  %2660 = vmatprep.subr.bf16.mxu0 0
  %2661 = vmatpush1.bf16.msra.mxu0 0
  %2662 = vmatprep.subr.bf16.mxu0 0
  %2663 = vmatpush1.bf16.msra.mxu0 0
  %2664 = vmatprep.subr.bf16.mxu0 0
  %2665 = vmatpush1.bf16.msra.mxu0 0
  %2666 = vmatprep.subr.bf16.mxu0 0
  %2667 = vmatpush1.bf16.msra.mxu0 0
  %2668 = vmatprep.subr.bf16.mxu0 0
  %2669 = vmatpush1.bf16.msra.mxu0 0
  %2670 = vmatprep.subr.bf16.mxu0 0
  %2671 = vmatpush1.bf16.msra.mxu0 0
  %2672 = vmatprep.subr.bf16.mxu0 0
  %2673 = vmatpush1.bf16.msra.mxu0 0
  %2674 = vmatprep.subr.bf16.mxu0 0
  %2675 = vmatpush1.bf16.msra.mxu0 0
  %2676 = vmatprep.subr.bf16.mxu0 0
  %2677 = vmatpush1.bf16.msra.mxu0 0
  %2678 = vmatprep.subr.bf16.mxu0 0
  %2679 = vmatpush1.bf16.msra.mxu0 0
  %2680 = vmatprep.subr.bf16.mxu0 0
  %2681 = vmatpush1.bf16.msra.mxu0 0
  %2682 = vmatprep.mubr.bf16.mxu0 0
  %2683 = vmatmul.mubr.bf16.gmra.mrb[0].mxu0 %v2645
  %v2684 = vpop.f32.mrb[0].mxu0
  %v2685 = vadd.f32 0.0, %v2684
  %v2686 = vpop.f32.mrb[0].mxu0
  %v2687 = vpop.f32.mrb[0].mxu0
  %v2688 = vpop.f32.mrb[0].mxu0
  %2689 = vdwg.mxu0
  %v2693 = vunpack.c.l.b16 %v1022
  %v2694 = vunpack.c.l.b16 %v1023
  %v2695 = vunpack.c.l.b16 %v1024
  %v2696 = vpack.c.b16 %v2694, %v2693
  %v2697 = vpack.c.b16 %v2695, %v2695
  %v2700 = vsel %vm284, %v927, 0
  %v2703 = vand.u32 %v2697, %v1051
  %2705 = vmatprep.subr.bf16.mxu0 0
  %2706 = vmatpush1.bf16.msra.mxu0 %v2696
  %2707 = vmatprep.subr.bf16.mxu0 0
  %2708 = vmatpush1.bf16.msra.mxu0 %v2703
  %2709 = vmatprep.subr.bf16.mxu0 0
  %2710 = vmatpush1.bf16.msra.mxu0 0
  %2711 = vmatprep.subr.bf16.mxu0 0
  %2712 = vmatpush1.bf16.msra.mxu0 0
  %2713 = vmatprep.subr.bf16.mxu0 0
  %2714 = vmatpush1.bf16.msra.mxu0 0
  %2715 = vmatprep.subr.bf16.mxu0 0
  %2716 = vmatpush1.bf16.msra.mxu0 0
  %2717 = vmatprep.subr.bf16.mxu0 0
  %2718 = vmatpush1.bf16.msra.mxu0 0
  %2719 = vmatprep.subr.bf16.mxu0 0
  %2720 = vmatpush1.bf16.msra.mxu0 0
  %2721 = vmatprep.subr.bf16.mxu0 0
  %2722 = vmatpush1.bf16.msra.mxu0 0
  %2723 = vmatprep.subr.bf16.mxu0 0
  %2724 = vmatpush1.bf16.msra.mxu0 0
  %2725 = vmatprep.subr.bf16.mxu0 0
  %2726 = vmatpush1.bf16.msra.mxu0 0
  %2727 = vmatprep.subr.bf16.mxu0 0
  %2728 = vmatpush1.bf16.msra.mxu0 0
  %2729 = vmatprep.subr.bf16.mxu0 0
  %2730 = vmatpush1.bf16.msra.mxu0 0
  %2731 = vmatprep.subr.bf16.mxu0 0
  %2732 = vmatpush1.bf16.msra.mxu0 0
  %2733 = vmatprep.subr.bf16.mxu0 0
  %2734 = vmatpush1.bf16.msra.mxu0 0
  %2735 = vmatprep.subr.bf16.mxu0 0
  %2736 = vmatpush1.bf16.msra.mxu0 0
  %2737 = vmatprep.mubr.bf16.mxu0 0
  %2738 = vmatmul.mubr.bf16.gmra.mrb[0].mxu0 %v2700
  %v2739 = vpop.f32.mrb[0].mxu0
  %v2740 = vadd.f32 0.0, %v2739
  %v2741 = vpop.f32.mrb[0].mxu0
  %v2742 = vpop.f32.mrb[0].mxu0
  %v2743 = vpop.f32.mrb[0].mxu0
  %2744 = vdwg.mxu0
  %v2748 = vunpack.c.l.b16 %v1025
  %v2749 = vunpack.c.l.b16 %v1026
  %v2750 = vunpack.c.l.b16 %v1027
  %v2751 = vpack.c.b16 %v2749, %v2748
  %v2752 = vpack.c.b16 %v2750, %v2750
  %v2755 = vsel %vm284, %v928, 0
  %v2758 = vand.u32 %v2752, %v1051
  %2760 = vmatprep.subr.bf16.mxu0 0
  %2761 = vmatpush1.bf16.msra.mxu0 %v2751
  %2762 = vmatprep.subr.bf16.mxu0 0
  %2763 = vmatpush1.bf16.msra.mxu0 %v2758
  %2764 = vmatprep.subr.bf16.mxu0 0
  %2765 = vmatpush1.bf16.msra.mxu0 0
  %2766 = vmatprep.subr.bf16.mxu0 0
  %2767 = vmatpush1.bf16.msra.mxu0 0
  %2768 = vmatprep.subr.bf16.mxu0 0
  %2769 = vmatpush1.bf16.msra.mxu0 0
  %2770 = vmatprep.subr.bf16.mxu0 0
  %2771 = vmatpush1.bf16.msra.mxu0 0
  %2772 = vmatprep.subr.bf16.mxu0 0
  %2773 = vmatpush1.bf16.msra.mxu0 0
  %2774 = vmatprep.subr.bf16.mxu0 0
  %2775 = vmatpush1.bf16.msra.mxu0 0
  %2776 = vmatprep.subr.bf16.mxu0 0
  %2777 = vmatpush1.bf16.msra.mxu0 0
  %2778 = vmatprep.subr.bf16.mxu0 0
  %2779 = vmatpush1.bf16.msra.mxu0 0
  %2780 = vmatprep.subr.bf16.mxu0 0
  %2781 = vmatpush1.bf16.msra.mxu0 0
  %2782 = vmatprep.subr.bf16.mxu0 0
  %2783 = vmatpush1.bf16.msra.mxu0 0
  %2784 = vmatprep.subr.bf16.mxu0 0
  %2785 = vmatpush1.bf16.msra.mxu0 0
  %2786 = vmatprep.subr.bf16.mxu0 0
  %2787 = vmatpush1.bf16.msra.mxu0 0
  %2788 = vmatprep.subr.bf16.mxu0 0
  %2789 = vmatpush1.bf16.msra.mxu0 0
  %2790 = vmatprep.subr.bf16.mxu0 0
  %2791 = vmatpush1.bf16.msra.mxu0 0
  %2792 = vmatprep.mubr.bf16.mxu0 0
  %2793 = vmatmul.mubr.bf16.gmra.mrb[0].mxu0 %v2755
  %v2794 = vpop.f32.mrb[0].mxu0
  %v2795 = vadd.f32 0.0, %v2794
  %v2796 = vpop.f32.mrb[0].mxu0
  %v2797 = vpop.f32.mrb[0].mxu0
  %v2798 = vpop.f32.mrb[0].mxu0
  %2799 = vdwg.mxu0
  %v2803 = vunpack.c.l.b16 %v1028
  %v2804 = vunpack.c.l.b16 %v1029
  %v2805 = vunpack.c.l.b16 %v1030
  %v2806 = vpack.c.b16 %v2804, %v2803
  %v2807 = vpack.c.b16 %v2805, %v2805
  %v2810 = vsel %vm284, %v929, 0
  %v2813 = vand.u32 %v2807, %v1051
  %2815 = vmatprep.subr.bf16.mxu0 0
  %2816 = vmatpush1.bf16.msra.mxu0 %v2806
  %2817 = vmatprep.subr.bf16.mxu0 0
  %2818 = vmatpush1.bf16.msra.mxu0 %v2813
  %2819 = vmatprep.subr.bf16.mxu0 0
  %2820 = vmatpush1.bf16.msra.mxu0 0
  %2821 = vmatprep.subr.bf16.mxu0 0
  %2822 = vmatpush1.bf16.msra.mxu0 0
  %2823 = vmatprep.subr.bf16.mxu0 0
  %2824 = vmatpush1.bf16.msra.mxu0 0
  %2825 = vmatprep.subr.bf16.mxu0 0
  %2826 = vmatpush1.bf16.msra.mxu0 0
  %2827 = vmatprep.subr.bf16.mxu0 0
  %2828 = vmatpush1.bf16.msra.mxu0 0
  %2829 = vmatprep.subr.bf16.mxu0 0
  %2830 = vmatpush1.bf16.msra.mxu0 0
  %2831 = vmatprep.subr.bf16.mxu0 0
  %2832 = vmatpush1.bf16.msra.mxu0 0
  %2833 = vmatprep.subr.bf16.mxu0 0
  %2834 = vmatpush1.bf16.msra.mxu0 0
  %2835 = vmatprep.subr.bf16.mxu0 0
  %2836 = vmatpush1.bf16.msra.mxu0 0
  %2837 = vmatprep.subr.bf16.mxu0 0
  %2838 = vmatpush1.bf16.msra.mxu0 0
  %2839 = vmatprep.subr.bf16.mxu0 0
  %2840 = vmatpush1.bf16.msra.mxu0 0
  %2841 = vmatprep.subr.bf16.mxu0 0
  %2842 = vmatpush1.bf16.msra.mxu0 0
  %2843 = vmatprep.subr.bf16.mxu0 0
  %2844 = vmatpush1.bf16.msra.mxu0 0
  %2845 = vmatprep.subr.bf16.mxu0 0
  %2846 = vmatpush1.bf16.msra.mxu0 0
  %2847 = vmatprep.mubr.bf16.mxu0 0
  %2848 = vmatmul.mubr.bf16.gmra.mrb[0].mxu0 %v2810
  %v2849 = vpop.f32.mrb[0].mxu0
  %v2850 = vadd.f32 0.0, %v2849
  %v2851 = vpop.f32.mrb[0].mxu0
  %v2852 = vpop.f32.mrb[0].mxu0
  %v2853 = vpop.f32.mrb[0].mxu0
  %2854 = vdwg.mxu0
  %v2858 = vunpack.c.l.b16 %v1031
  %v2859 = vunpack.c.l.b16 %v1032
  %v2860 = vunpack.c.l.b16 %v1033
  %v2861 = vpack.c.b16 %v2859, %v2858
  %v2862 = vpack.c.b16 %v2860, %v2860
  %v2865 = vsel %vm284, %v930, 0
  %v2868 = vand.u32 %v2862, %v1051
  %2870 = vmatprep.subr.bf16.mxu0 0
  %2871 = vmatpush1.bf16.msra.mxu0 %v2861
  %2872 = vmatprep.subr.bf16.mxu0 0
  %2873 = vmatpush1.bf16.msra.mxu0 %v2868
  %2874 = vmatprep.subr.bf16.mxu0 0
  %2875 = vmatpush1.bf16.msra.mxu0 0
  %2876 = vmatprep.subr.bf16.mxu0 0
  %2877 = vmatpush1.bf16.msra.mxu0 0
  %2878 = vmatprep.subr.bf16.mxu0 0
  %2879 = vmatpush1.bf16.msra.mxu0 0
  %2880 = vmatprep.subr.bf16.mxu0 0
  %2881 = vmatpush1.bf16.msra.mxu0 0
  %2882 = vmatprep.subr.bf16.mxu0 0
  %2883 = vmatpush1.bf16.msra.mxu0 0
  %2884 = vmatprep.subr.bf16.mxu0 0
  %2885 = vmatpush1.bf16.msra.mxu0 0
  %2886 = vmatprep.subr.bf16.mxu0 0
  %2887 = vmatpush1.bf16.msra.mxu0 0
  %2888 = vmatprep.subr.bf16.mxu0 0
  %2889 = vmatpush1.bf16.msra.mxu0 0
  %2890 = vmatprep.subr.bf16.mxu0 0
  %2891 = vmatpush1.bf16.msra.mxu0 0
  %2892 = vmatprep.subr.bf16.mxu0 0
  %2893 = vmatpush1.bf16.msra.mxu0 0
  %2894 = vmatprep.subr.bf16.mxu0 0
  %2895 = vmatpush1.bf16.msra.mxu0 0
  %2896 = vmatprep.subr.bf16.mxu0 0
  %2897 = vmatpush1.bf16.msra.mxu0 0
  %2898 = vmatprep.subr.bf16.mxu0 0
  %2899 = vmatpush1.bf16.msra.mxu0 0
  %2900 = vmatprep.subr.bf16.mxu0 0
  %2901 = vmatpush1.bf16.msra.mxu0 0
  %2902 = vmatprep.mubr.bf16.mxu0 0
  %2903 = vmatmul.mubr.bf16.gmra.mrb[0].mxu0 %v2865
  %v2904 = vpop.f32.mrb[0].mxu0
  %v2905 = vadd.f32 0.0, %v2904
  %v2906 = vpop.f32.mrb[0].mxu0
  %v2907 = vpop.f32.mrb[0].mxu0
  %v2908 = vpop.f32.mrb[0].mxu0
  %2909 = vdwg.mxu0
  %v2913 = vunpack.c.l.b16 %v1034
  %v2914 = vunpack.c.l.b16 %v1035
  %v2915 = vunpack.c.l.b16 %v1036
  %v2916 = vpack.c.b16 %v2914, %v2913
  %v2917 = vpack.c.b16 %v2915, %v2915
  %v2920 = vsel %vm284, %v931, 0
  %v2923 = vand.u32 %v2917, %v1051
  %2925 = vmatprep.subr.bf16.mxu0 0
  %2926 = vmatpush1.bf16.msra.mxu0 %v2916
  %2927 = vmatprep.subr.bf16.mxu0 0
  %2928 = vmatpush1.bf16.msra.mxu0 %v2923
  %2929 = vmatprep.subr.bf16.mxu0 0
  %2930 = vmatpush1.bf16.msra.mxu0 0
  %2931 = vmatprep.subr.bf16.mxu0 0
  %2932 = vmatpush1.bf16.msra.mxu0 0
  %2933 = vmatprep.subr.bf16.mxu0 0
  %2934 = vmatpush1.bf16.msra.mxu0 0
  %2935 = vmatprep.subr.bf16.mxu0 0
  %2936 = vmatpush1.bf16.msra.mxu0 0
  %2937 = vmatprep.subr.bf16.mxu0 0
  %2938 = vmatpush1.bf16.msra.mxu0 0
  %2939 = vmatprep.subr.bf16.mxu0 0
  %2940 = vmatpush1.bf16.msra.mxu0 0
  %2941 = vmatprep.subr.bf16.mxu0 0
  %2942 = vmatpush1.bf16.msra.mxu0 0
  %2943 = vmatprep.subr.bf16.mxu0 0
  %2944 = vmatpush1.bf16.msra.mxu0 0
  %2945 = vmatprep.subr.bf16.mxu0 0
  %2946 = vmatpush1.bf16.msra.mxu0 0
  %2947 = vmatprep.subr.bf16.mxu0 0
  %2948 = vmatpush1.bf16.msra.mxu0 0
  %2949 = vmatprep.subr.bf16.mxu0 0
  %2950 = vmatpush1.bf16.msra.mxu0 0
  %2951 = vmatprep.subr.bf16.mxu0 0
  %2952 = vmatpush1.bf16.msra.mxu0 0
  %2953 = vmatprep.subr.bf16.mxu0 0
  %2954 = vmatpush1.bf16.msra.mxu0 0
  %2955 = vmatprep.subr.bf16.mxu0 0
  %2956 = vmatpush1.bf16.msra.mxu0 0
  %2957 = vmatprep.mubr.bf16.mxu0 0
  %2958 = vmatmul.mubr.bf16.gmra.mrb[0].mxu0 %v2920
  %v2959 = vpop.f32.mrb[0].mxu0
  %v2960 = vadd.f32 0.0, %v2959
  %v2961 = vpop.f32.mrb[0].mxu0
  %v2962 = vpop.f32.mrb[0].mxu0
  %v2963 = vpop.f32.mrb[0].mxu0
  %2964 = vdwg.mxu0
  %v2965 = vsel %vm153, %v1090, 0.0
  %2966 = vadd.xlane.f32.xlu0 %v2965
  %v2967 = vpop.xlane.xlu0 %2966
  %v2968 = vsel %vm153, %v1145, 0.0
  %2969 = vadd.xlane.f32.xlu0 %v2968
  %v2970 = vpop.xlane.xlu0 %2969
  %v2971 = vsel %vm153, %v1200, 0.0
  %2972 = vadd.xlane.f32.xlu0 %v2971
  %v2973 = vpop.xlane.xlu0 %2972
  %v2974 = vsel %vm153, %v1255, 0.0
  %2975 = vadd.xlane.f32.xlu0 %v2974
  %v2976 = vpop.xlane.xlu0 %2975
  %v2977 = vsel %vm153, %v1310, 0.0
  %2978 = vadd.xlane.f32.xlu0 %v2977
  %v2979 = vpop.xlane.xlu0 %2978
  %v2980 = vsel %vm153, %v1365, 0.0
  %2981 = vadd.xlane.f32.xlu0 %v2980
  %v2982 = vpop.xlane.xlu0 %2981
  %v2983 = vsel %vm153, %v1420, 0.0
  %2984 = vadd.xlane.f32.xlu0 %v2983
  %v2985 = vpop.xlane.xlu0 %2984
  %v2986 = vsel %vm153, %v1475, 0.0
  %2987 = vadd.xlane.f32.xlu0 %v2986
  %v2988 = vpop.xlane.xlu0 %2987
  %v2989 = vsel %vm153, %v1530, 0.0
  %2990 = vadd.xlane.f32.xlu0 %v2989
  %v2991 = vpop.xlane.xlu0 %2990
  %v2992 = vsel %vm153, %v1585, 0.0
  %2993 = vadd.xlane.f32.xlu0 %v2992
  %v2994 = vpop.xlane.xlu0 %2993
  %v2995 = vsel %vm153, %v1640, 0.0
  %2996 = vadd.xlane.f32.xlu0 %v2995
  %v2997 = vpop.xlane.xlu0 %2996
  %v2998 = vsel %vm153, %v1695, 0.0
  %2999 = vadd.xlane.f32.xlu0 %v2998
  %v3000 = vpop.xlane.xlu0 %2999
  %v3001 = vsel %vm153, %v1750, 0.0
  %3002 = vadd.xlane.f32.xlu0 %v3001
  %v3003 = vpop.xlane.xlu0 %3002
  %v3004 = vsel %vm153, %v1805, 0.0
  %3005 = vadd.xlane.f32.xlu0 %v3004
  %v3006 = vpop.xlane.xlu0 %3005
  %v3007 = vsel %vm153, %v1860, 0.0
  %3008 = vadd.xlane.f32.xlu0 %v3007
  %v3009 = vpop.xlane.xlu0 %3008
  %v3010 = vsel %vm153, %v1915, 0.0
  %3011 = vadd.xlane.f32.xlu0 %v3010
  %v3012 = vpop.xlane.xlu0 %3011
  %v3013 = vsel %vm153, %v1970, 0.0
  %3014 = vadd.xlane.f32.xlu0 %v3013
  %v3015 = vpop.xlane.xlu0 %3014
  %v3016 = vsel %vm153, %v2025, 0.0
  %3017 = vadd.xlane.f32.xlu0 %v3016
  %v3018 = vpop.xlane.xlu0 %3017
  %v3019 = vsel %vm153, %v2080, 0.0
  %3020 = vadd.xlane.f32.xlu0 %v3019
  %v3021 = vpop.xlane.xlu0 %3020
  %v3022 = vsel %vm153, %v2135, 0.0
  %3023 = vadd.xlane.f32.xlu0 %v3022
  %v3024 = vpop.xlane.xlu0 %3023
  %v3025 = vsel %vm153, %v2190, 0.0
  %3026 = vadd.xlane.f32.xlu0 %v3025
  %v3027 = vpop.xlane.xlu0 %3026
  %v3028 = vsel %vm153, %v2245, 0.0
  %3029 = vadd.xlane.f32.xlu0 %v3028
  %v3030 = vpop.xlane.xlu0 %3029
  %v3031 = vsel %vm153, %v2300, 0.0
  %3032 = vadd.xlane.f32.xlu0 %v3031
  %v3033 = vpop.xlane.xlu0 %3032
  %v3034 = vsel %vm153, %v2355, 0.0
  %3035 = vadd.xlane.f32.xlu0 %v3034
  %v3036 = vpop.xlane.xlu0 %3035
  %v3037 = vsel %vm153, %v2410, 0.0
  %3038 = vadd.xlane.f32.xlu0 %v3037
  %v3039 = vpop.xlane.xlu0 %3038
  %v3040 = vsel %vm153, %v2465, 0.0
  %3041 = vadd.xlane.f32.xlu0 %v3040
  %v3042 = vpop.xlane.xlu0 %3041
  %v3043 = vsel %vm153, %v2520, 0.0
  %3044 = vadd.xlane.f32.xlu0 %v3043
  %v3045 = vpop.xlane.xlu0 %3044
  %v3046 = vsel %vm153, %v2575, 0.0
  %3047 = vadd.xlane.f32.xlu0 %v3046
  %v3048 = vpop.xlane.xlu0 %3047
  %v3049 = vsel %vm153, %v2630, 0.0
  %3050 = vadd.xlane.f32.xlu0 %v3049
  %v3051 = vpop.xlane.xlu0 %3050
  %v3052 = vsel %vm153, %v2685, 0.0
  %3053 = vadd.xlane.f32.xlu0 %v3052
  %v3054 = vpop.xlane.xlu0 %3053
  %v3055 = vsel %vm153, %v2740, 0.0
  %3056 = vadd.xlane.f32.xlu0 %v3055
  %v3057 = vpop.xlane.xlu0 %3056
  %v3058 = vsel %vm153, %v2795, 0.0
  %3059 = vadd.xlane.f32.xlu0 %v3058
  %v3060 = vpop.xlane.xlu0 %3059
  %v3061 = vsel %vm153, %v2850, 0.0
  %3062 = vadd.xlane.f32.xlu0 %v3061
  %v3063 = vpop.xlane.xlu0 %3062
  %v3064 = vsel %vm153, %v2905, 0.0
  %3065 = vadd.xlane.f32.xlu0 %v3064
  %v3066 = vpop.xlane.xlu0 %3065
  %v3067 = vsel %vm153, %v2960, 0.0
  %3068 = vadd.xlane.f32.xlu0 %v3067
  %v3069 = vpop.xlane.xlu0 %3068
  %v3070 = vrcp.pop 64.0
  %v3071 = vmul.f32 %v2967, %v3070
  %v3072 = vmul.f32 %v2970, %v3070
  %v3073 = vmul.f32 %v2973, %v3070
  %v3074 = vmul.f32 %v2976, %v3070
  %v3075 = vmul.f32 %v2979, %v3070
  %v3076 = vmul.f32 %v2982, %v3070
  %v3077 = vmul.f32 %v2985, %v3070
  %v3078 = vmul.f32 %v2988, %v3070
  %v3079 = vmul.f32 %v2991, %v3070
  %v3080 = vmul.f32 %v2994, %v3070
  %v3081 = vmul.f32 %v2997, %v3070
  %v3082 = vmul.f32 %v3000, %v3070
  %v3083 = vmul.f32 %v3003, %v3070
  %v3084 = vmul.f32 %v3006, %v3070
  %v3085 = vmul.f32 %v3009, %v3070
  %v3086 = vmul.f32 %v3012, %v3070
  %v3087 = vmul.f32 %v3015, %v3070
  %v3088 = vmul.f32 %v3018, %v3070
  %v3089 = vmul.f32 %v3021, %v3070
  %v3090 = vmul.f32 %v3024, %v3070
  %v3091 = vmul.f32 %v3027, %v3070
  %v3092 = vmul.f32 %v3030, %v3070
  %v3093 = vmul.f32 %v3033, %v3070
  %v3094 = vmul.f32 %v3036, %v3070
  %v3095 = vmul.f32 %v3039, %v3070
  %v3096 = vmul.f32 %v3042, %v3070
  %v3097 = vmul.f32 %v3045, %v3070
  %v3098 = vmul.f32 %v3048, %v3070
  %v3099 = vmul.f32 %v3051, %v3070
  %v3100 = vmul.f32 %v3054, %v3070
  %v3101 = vmul.f32 %v3057, %v3070
  %v3102 = vmul.f32 %v3060, %v3070
  %v3103 = vmul.f32 %v3063, %v3070
  %v3104 = vmul.f32 %v3066, %v3070
  %v3105 = vmul.f32 %v3069, %v3070
  %v3106 = vsub.f32 %v1090, %v3071
  %v3107 = vsub.f32 %v1145, %v3072
  %v3108 = vsub.f32 %v1200, %v3073
  %v3109 = vsub.f32 %v1255, %v3074
  %v3110 = vsub.f32 %v1310, %v3075
  %v3111 = vsub.f32 %v1365, %v3076
  %v3112 = vsub.f32 %v1420, %v3077
  %v3113 = vsub.f32 %v1475, %v3078
  %v3114 = vsub.f32 %v1530, %v3079
  %v3115 = vsub.f32 %v1585, %v3080
  %v3116 = vsub.f32 %v1640, %v3081
  %v3117 = vsub.f32 %v1695, %v3082
  %v3118 = vsub.f32 %v1750, %v3083
  %v3119 = vsub.f32 %v1805, %v3084
  %v3120 = vsub.f32 %v1860, %v3085
  %v3121 = vsub.f32 %v1915, %v3086
  %v3122 = vsub.f32 %v1970, %v3087
  %v3123 = vsub.f32 %v2025, %v3088
  %v3124 = vsub.f32 %v2080, %v3089
  %v3125 = vsub.f32 %v2135, %v3090
  %v3126 = vsub.f32 %v2190, %v3091
  %v3127 = vsub.f32 %v2245, %v3092
  %v3128 = vsub.f32 %v2300, %v3093
  %v3129 = vsub.f32 %v2355, %v3094
  %v3130 = vsub.f32 %v2410, %v3095
  %v3131 = vsub.f32 %v2465, %v3096
  %v3132 = vsub.f32 %v2520, %v3097
  %v3133 = vsub.f32 %v2575, %v3098
  %v3134 = vsub.f32 %v2630, %v3099
  %v3135 = vsub.f32 %v2685, %v3100
  %v3136 = vsub.f32 %v2740, %v3101
  %v3137 = vsub.f32 %v2795, %v3102
  %v3138 = vsub.f32 %v2850, %v3103
  %v3139 = vsub.f32 %v2905, %v3104
  %v3140 = vsub.f32 %v2960, %v3105
  %v3141 = vmul.f32 %v3106, %v3106
  %v3142 = vmul.f32 %v3107, %v3107
  %v3143 = vmul.f32 %v3108, %v3108
  %v3144 = vmul.f32 %v3109, %v3109
  %v3145 = vmul.f32 %v3110, %v3110
  %v3146 = vmul.f32 %v3111, %v3111
  %v3147 = vmul.f32 %v3112, %v3112
  %v3148 = vmul.f32 %v3113, %v3113
  %v3149 = vmul.f32 %v3114, %v3114
  %v3150 = vmul.f32 %v3115, %v3115
  %v3151 = vmul.f32 %v3116, %v3116
  %v3152 = vmul.f32 %v3117, %v3117
  %v3153 = vmul.f32 %v3118, %v3118
  %v3154 = vmul.f32 %v3119, %v3119
  %v3155 = vmul.f32 %v3120, %v3120
  %v3156 = vmul.f32 %v3121, %v3121
  %v3157 = vmul.f32 %v3122, %v3122
  %v3158 = vmul.f32 %v3123, %v3123
  %v3159 = vmul.f32 %v3124, %v3124
  %v3160 = vmul.f32 %v3125, %v3125
  %v3161 = vmul.f32 %v3126, %v3126
  %v3162 = vmul.f32 %v3127, %v3127
  %v3163 = vmul.f32 %v3128, %v3128
  %v3164 = vmul.f32 %v3129, %v3129
  %v3165 = vmul.f32 %v3130, %v3130
  %v3166 = vmul.f32 %v3131, %v3131
  %v3167 = vmul.f32 %v3132, %v3132
  %v3168 = vmul.f32 %v3133, %v3133
  %v3169 = vmul.f32 %v3134, %v3134
  %v3170 = vmul.f32 %v3135, %v3135
  %v3171 = vmul.f32 %v3136, %v3136
  %v3172 = vmul.f32 %v3137, %v3137
  %v3173 = vmul.f32 %v3138, %v3138
  %v3174 = vmul.f32 %v3139, %v3139
  %v3175 = vmul.f32 %v3140, %v3140
  %v3176 = vsel %vm153, %v3141, 0.0
  %3177 = vadd.xlane.f32.xlu0 %v3176
  %v3178 = vpop.xlane.xlu0 %3177
  %v3179 = vsel %vm153, %v3142, 0.0
  %3180 = vadd.xlane.f32.xlu0 %v3179
  %v3181 = vpop.xlane.xlu0 %3180
  %v3182 = vsel %vm153, %v3143, 0.0
  %3183 = vadd.xlane.f32.xlu0 %v3182
  %v3184 = vpop.xlane.xlu0 %3183
  %v3185 = vsel %vm153, %v3144, 0.0
  %3186 = vadd.xlane.f32.xlu0 %v3185
  %v3187 = vpop.xlane.xlu0 %3186
  %v3188 = vsel %vm153, %v3145, 0.0
  %3189 = vadd.xlane.f32.xlu0 %v3188
  %v3190 = vpop.xlane.xlu0 %3189
  %v3191 = vsel %vm153, %v3146, 0.0
  %3192 = vadd.xlane.f32.xlu0 %v3191
  %v3193 = vpop.xlane.xlu0 %3192
  %v3194 = vsel %vm153, %v3147, 0.0
  %3195 = vadd.xlane.f32.xlu0 %v3194
  %v3196 = vpop.xlane.xlu0 %3195
  %v3197 = vsel %vm153, %v3148, 0.0
  %3198 = vadd.xlane.f32.xlu0 %v3197
  %v3199 = vpop.xlane.xlu0 %3198
  %v3200 = vsel %vm153, %v3149, 0.0
  %3201 = vadd.xlane.f32.xlu0 %v3200
  %v3202 = vpop.xlane.xlu0 %3201
  %v3203 = vsel %vm153, %v3150, 0.0
  %3204 = vadd.xlane.f32.xlu0 %v3203
  %v3205 = vpop.xlane.xlu0 %3204
  %v3206 = vsel %vm153, %v3151, 0.0
  %3207 = vadd.xlane.f32.xlu0 %v3206
  %v3208 = vpop.xlane.xlu0 %3207
  %v3209 = vsel %vm153, %v3152, 0.0
  %3210 = vadd.xlane.f32.xlu0 %v3209
  %v3211 = vpop.xlane.xlu0 %3210
  %v3212 = vsel %vm153, %v3153, 0.0
  %3213 = vadd.xlane.f32.xlu0 %v3212
  %v3214 = vpop.xlane.xlu0 %3213
  %v3215 = vsel %vm153, %v3154, 0.0
  %3216 = vadd.xlane.f32.xlu0 %v3215
  %v3217 = vpop.xlane.xlu0 %3216
  %v3218 = vsel %vm153, %v3155, 0.0
  %3219 = vadd.xlane.f32.xlu0 %v3218
  %v3220 = vpop.xlane.xlu0 %3219
  %v3221 = vsel %vm153, %v3156, 0.0
  %3222 = vadd.xlane.f32.xlu0 %v3221
  %v3223 = vpop.xlane.xlu0 %3222
  %v3224 = vsel %vm153, %v3157, 0.0
  %3225 = vadd.xlane.f32.xlu0 %v3224
  %v3226 = vpop.xlane.xlu0 %3225
  %v3227 = vsel %vm153, %v3158, 0.0
  %3228 = vadd.xlane.f32.xlu0 %v3227
  %v3229 = vpop.xlane.xlu0 %3228
  %v3230 = vsel %vm153, %v3159, 0.0
  %3231 = vadd.xlane.f32.xlu0 %v3230
  %v3232 = vpop.xlane.xlu0 %3231
  %v3233 = vsel %vm153, %v3160, 0.0
  %3234 = vadd.xlane.f32.xlu0 %v3233
  %v3235 = vpop.xlane.xlu0 %3234
  %v3236 = vsel %vm153, %v3161, 0.0
  %3237 = vadd.xlane.f32.xlu0 %v3236
  %v3238 = vpop.xlane.xlu0 %3237
  %v3239 = vsel %vm153, %v3162, 0.0
  %3240 = vadd.xlane.f32.xlu0 %v3239
  %v3241 = vpop.xlane.xlu0 %3240
  %v3242 = vsel %vm153, %v3163, 0.0
  %3243 = vadd.xlane.f32.xlu0 %v3242
  %v3244 = vpop.xlane.xlu0 %3243
  %v3245 = vsel %vm153, %v3164, 0.0
  %3246 = vadd.xlane.f32.xlu0 %v3245
  %v3247 = vpop.xlane.xlu0 %3246
  %v3248 = vsel %vm153, %v3165, 0.0
  %3249 = vadd.xlane.f32.xlu0 %v3248
  %v3250 = vpop.xlane.xlu0 %3249
  %v3251 = vsel %vm153, %v3166, 0.0
  %3252 = vadd.xlane.f32.xlu0 %v3251
  %v3253 = vpop.xlane.xlu0 %3252
  %v3254 = vsel %vm153, %v3167, 0.0
  %3255 = vadd.xlane.f32.xlu0 %v3254
  %v3256 = vpop.xlane.xlu0 %3255
  %v3257 = vsel %vm153, %v3168, 0.0
  %3258 = vadd.xlane.f32.xlu0 %v3257
  %v3259 = vpop.xlane.xlu0 %3258
  %v3260 = vsel %vm153, %v3169, 0.0
  %3261 = vadd.xlane.f32.xlu0 %v3260
  %v3262 = vpop.xlane.xlu0 %3261
  %v3263 = vsel %vm153, %v3170, 0.0
  %3264 = vadd.xlane.f32.xlu0 %v3263
  %v3265 = vpop.xlane.xlu0 %3264
  %v3266 = vsel %vm153, %v3171, 0.0
  %3267 = vadd.xlane.f32.xlu0 %v3266
  %v3268 = vpop.xlane.xlu0 %3267
  %v3269 = vsel %vm153, %v3172, 0.0
  %3270 = vadd.xlane.f32.xlu0 %v3269
  %v3271 = vpop.xlane.xlu0 %3270
  %v3272 = vsel %vm153, %v3173, 0.0
  %3273 = vadd.xlane.f32.xlu0 %v3272
  %v3274 = vpop.xlane.xlu0 %3273
  %v3275 = vsel %vm153, %v3174, 0.0
  %3276 = vadd.xlane.f32.xlu0 %v3275
  %v3277 = vpop.xlane.xlu0 %3276
  %v3278 = vsel %vm153, %v3175, 0.0
  %3279 = vadd.xlane.f32.xlu0 %v3278
  %v3280 = vpop.xlane.xlu0 %3279
  %v3281 = vmul.f32 %v3178, %v3070
  %v3282 = vmul.f32 %v3181, %v3070
  %v3283 = vmul.f32 %v3184, %v3070
  %v3284 = vmul.f32 %v3187, %v3070
  %v3285 = vmul.f32 %v3190, %v3070
  %v3286 = vmul.f32 %v3193, %v3070
  %v3287 = vmul.f32 %v3196, %v3070
  %v3288 = vmul.f32 %v3199, %v3070
  %v3289 = vmul.f32 %v3202, %v3070
  %v3290 = vmul.f32 %v3205, %v3070
  %v3291 = vmul.f32 %v3208, %v3070
  %v3292 = vmul.f32 %v3211, %v3070
  %v3293 = vmul.f32 %v3214, %v3070
  %v3294 = vmul.f32 %v3217, %v3070
  %v3295 = vmul.f32 %v3220, %v3070
  %v3296 = vmul.f32 %v3223, %v3070
  %v3297 = vmul.f32 %v3226, %v3070
  %v3298 = vmul.f32 %v3229, %v3070
  %v3299 = vmul.f32 %v3232, %v3070
  %v3300 = vmul.f32 %v3235, %v3070
  %v3301 = vmul.f32 %v3238, %v3070
  %v3302 = vmul.f32 %v3241, %v3070
  %v3303 = vmul.f32 %v3244, %v3070
  %v3304 = vmul.f32 %v3247, %v3070
  %v3305 = vmul.f32 %v3250, %v3070
  %v3306 = vmul.f32 %v3253, %v3070
  %v3307 = vmul.f32 %v3256, %v3070
  %v3308 = vmul.f32 %v3259, %v3070
  %v3309 = vmul.f32 %v3262, %v3070
  %v3310 = vmul.f32 %v3265, %v3070
  %v3311 = vmul.f32 %v3268, %v3070
  %v3312 = vmul.f32 %v3271, %v3070
  %v3313 = vmul.f32 %v3274, %v3070
  %v3314 = vmul.f32 %v3277, %v3070
  %v3315 = vmul.f32 %v3280, %v3070
  %v3316 = vadd.f32 %v3281, 1e-05
  %v3317 = vadd.f32 %v3282, 1e-05
  %v3318 = vadd.f32 %v3283, 1e-05
  %v3319 = vadd.f32 %v3284, 1e-05
  %v3320 = vadd.f32 %v3285, 1e-05
  %v3321 = vadd.f32 %v3286, 1e-05
  %v3322 = vadd.f32 %v3287, 1e-05
  %v3323 = vadd.f32 %v3288, 1e-05
  %v3324 = vadd.f32 %v3289, 1e-05
  %v3325 = vadd.f32 %v3290, 1e-05
  %v3326 = vadd.f32 %v3291, 1e-05
  %v3327 = vadd.f32 %v3292, 1e-05
  %v3328 = vadd.f32 %v3293, 1e-05
  %v3329 = vadd.f32 %v3294, 1e-05
  %v3330 = vadd.f32 %v3295, 1e-05
  %v3331 = vadd.f32 %v3296, 1e-05
  %v3332 = vadd.f32 %v3297, 1e-05
  %v3333 = vadd.f32 %v3298, 1e-05
  %v3334 = vadd.f32 %v3299, 1e-05
  %v3335 = vadd.f32 %v3300, 1e-05
  %v3336 = vadd.f32 %v3301, 1e-05
  %v3337 = vadd.f32 %v3302, 1e-05
  %v3338 = vadd.f32 %v3303, 1e-05
  %v3339 = vadd.f32 %v3304, 1e-05
  %v3340 = vadd.f32 %v3305, 1e-05
  %v3341 = vadd.f32 %v3306, 1e-05
  %v3342 = vadd.f32 %v3307, 1e-05
  %v3343 = vadd.f32 %v3308, 1e-05
  %v3344 = vadd.f32 %v3309, 1e-05
  %v3345 = vadd.f32 %v3310, 1e-05
  %v3346 = vadd.f32 %v3311, 1e-05
  %v3347 = vadd.f32 %v3312, 1e-05
  %v3348 = vadd.f32 %v3313, 1e-05
  %v3349 = vadd.f32 %v3314, 1e-05
  %v3350 = vadd.f32 %v3315, 1e-05
  %v3351 = vrsqrt.pop %v3316
  %v3352 = vrsqrt.pop %v3317
  %v3353 = vrsqrt.pop %v3318
  %v3354 = vrsqrt.pop %v3319
  %v3355 = vrsqrt.pop %v3320
  %v3356 = vrsqrt.pop %v3321
  %v3357 = vrsqrt.pop %v3322
  %v3358 = vrsqrt.pop %v3323
  %v3359 = vrsqrt.pop %v3324
  %v3360 = vrsqrt.pop %v3325
  %v3361 = vrsqrt.pop %v3326
  %v3362 = vrsqrt.pop %v3327
  %v3363 = vrsqrt.pop %v3328
  %v3364 = vrsqrt.pop %v3329
  %v3365 = vrsqrt.pop %v3330
  %v3366 = vrsqrt.pop %v3331
  %v3367 = vrsqrt.pop %v3332
  %v3368 = vrsqrt.pop %v3333
  %v3369 = vrsqrt.pop %v3334
  %v3370 = vrsqrt.pop %v3335
  %v3371 = vrsqrt.pop %v3336
  %v3372 = vrsqrt.pop %v3337
  %v3373 = vrsqrt.pop %v3338
  %v3374 = vrsqrt.pop %v3339
  %v3375 = vrsqrt.pop %v3340
  %v3376 = vrsqrt.pop %v3341
  %v3377 = vrsqrt.pop %v3342
  %v3378 = vrsqrt.pop %v3343
  %v3379 = vrsqrt.pop %v3344
  %v3380 = vrsqrt.pop %v3345
  %v3381 = vrsqrt.pop %v3346
  %v3382 = vrsqrt.pop %v3347
  %v3383 = vrsqrt.pop %v3348
  %v3384 = vrsqrt.pop %v3349
  %v3385 = vrsqrt.pop %v3350
  %v3386 = vmul.f32 %v3106, %v3351
  %v3387 = vmul.f32 %v3107, %v3352
  %v3388 = vmul.f32 %v3108, %v3353
  %v3389 = vmul.f32 %v3109, %v3354
  %v3390 = vmul.f32 %v3110, %v3355
  %v3391 = vmul.f32 %v3111, %v3356
  %v3392 = vmul.f32 %v3112, %v3357
  %v3393 = vmul.f32 %v3113, %v3358
  %v3394 = vmul.f32 %v3114, %v3359
  %v3395 = vmul.f32 %v3115, %v3360
  %v3396 = vmul.f32 %v3116, %v3361
  %v3397 = vmul.f32 %v3117, %v3362
  %v3398 = vmul.f32 %v3118, %v3363
  %v3399 = vmul.f32 %v3119, %v3364
  %v3400 = vmul.f32 %v3120, %v3365
  %v3401 = vmul.f32 %v3121, %v3366
  %v3402 = vmul.f32 %v3122, %v3367
  %v3403 = vmul.f32 %v3123, %v3368
  %v3404 = vmul.f32 %v3124, %v3369
  %v3405 = vmul.f32 %v3125, %v3370
  %v3406 = vmul.f32 %v3126, %v3371
  %v3407 = vmul.f32 %v3127, %v3372
  %v3408 = vmul.f32 %v3128, %v3373
  %v3409 = vmul.f32 %v3129, %v3374
  %v3410 = vmul.f32 %v3130, %v3375
  %v3411 = vmul.f32 %v3131, %v3376
  %v3412 = vmul.f32 %v3132, %v3377
  %v3413 = vmul.f32 %v3133, %v3378
  %v3414 = vmul.f32 %v3134, %v3379
  %v3415 = vmul.f32 %v3135, %v3380
  %v3416 = vmul.f32 %v3136, %v3381
  %v3417 = vmul.f32 %v3137, %v3382
  %v3418 = vmul.f32 %v3138, %v3383
  %v3419 = vmul.f32 %v3139, %v3384
  %v3420 = vmul.f32 %v3140, %v3385
  %v3421 = vld [vmem:[%s3] sm:$0x1]
  %v3423 = vlaneseq
  %v3424 = vshrl.u32 %v3423, 7
  %v3425 = vsub.s32 0, %v3424
  %v3426 = vrot.slane %v3421, %v3425
  %v3428 = vmul.f32 %v3386, %v3426
  %v3429 = vmul.f32 %v3387, %v3426
  %v3430 = vmul.f32 %v3388, %v3426
  %v3431 = vmul.f32 %v3389, %v3426
  %v3432 = vmul.f32 %v3390, %v3426
  %v3433 = vmul.f32 %v3391, %v3426
  %v3434 = vmul.f32 %v3392, %v3426
  %v3435 = vmul.f32 %v3393, %v3426
  %v3436 = vmul.f32 %v3394, %v3426
  %v3437 = vmul.f32 %v3395, %v3426
  %v3438 = vmul.f32 %v3396, %v3426
  %v3439 = vmul.f32 %v3397, %v3426
  %v3440 = vmul.f32 %v3398, %v3426
  %v3441 = vmul.f32 %v3399, %v3426
  %v3442 = vmul.f32 %v3400, %v3426
  %v3443 = vmul.f32 %v3401, %v3426
  %v3444 = vmul.f32 %v3402, %v3426
  %v3445 = vmul.f32 %v3403, %v3426
  %v3446 = vmul.f32 %v3404, %v3426
  %v3447 = vmul.f32 %v3405, %v3426
  %v3448 = vmul.f32 %v3406, %v3426
  %v3449 = vmul.f32 %v3407, %v3426
  %v3450 = vmul.f32 %v3408, %v3426
  %v3451 = vmul.f32 %v3409, %v3426
  %v3452 = vmul.f32 %v3410, %v3426
  %v3453 = vmul.f32 %v3411, %v3426
  %v3454 = vmul.f32 %v3412, %v3426
  %v3455 = vmul.f32 %v3413, %v3426
  %v3456 = vmul.f32 %v3414, %v3426
  %v3457 = vmul.f32 %v3415, %v3426
  %v3458 = vmul.f32 %v3416, %v3426
  %v3459 = vmul.f32 %v3417, %v3426
  %v3460 = vmul.f32 %v3418, %v3426
  %v3461 = vmul.f32 %v3419, %v3426
  %v3462 = vmul.f32 %v3420, %v3426
  %v3463 = vld [vmem:[%s4] sm:$0x1]
  %v3465 = vlaneseq
  %v3466 = vshrl.u32 %v3465, 7
  %v3467 = vsub.s32 0, %v3466
  %v3468 = vrot.slane %v3463, %v3467
  %v3470 = vadd.f32 %v3428, %v3468
  %v3471 = vadd.f32 %v3429, %v3468
  %v3472 = vadd.f32 %v3430, %v3468
  %v3473 = vadd.f32 %v3431, %v3468
  %v3474 = vadd.f32 %v3432, %v3468
  %v3475 = vadd.f32 %v3433, %v3468
  %v3476 = vadd.f32 %v3434, %v3468
  %v3477 = vadd.f32 %v3435, %v3468
  %v3478 = vadd.f32 %v3436, %v3468
  %v3479 = vadd.f32 %v3437, %v3468
  %v3480 = vadd.f32 %v3438, %v3468
  %v3481 = vadd.f32 %v3439, %v3468
  %v3482 = vadd.f32 %v3440, %v3468
  %v3483 = vadd.f32 %v3441, %v3468
  %v3484 = vadd.f32 %v3442, %v3468
  %v3485 = vadd.f32 %v3443, %v3468
  %v3486 = vadd.f32 %v3444, %v3468
  %v3487 = vadd.f32 %v3445, %v3468
  %v3488 = vadd.f32 %v3446, %v3468
  %v3489 = vadd.f32 %v3447, %v3468
  %v3490 = vadd.f32 %v3448, %v3468
  %v3491 = vadd.f32 %v3449, %v3468
  %v3492 = vadd.f32 %v3450, %v3468
  %v3493 = vadd.f32 %v3451, %v3468
  %v3494 = vadd.f32 %v3452, %v3468
  %v3495 = vadd.f32 %v3453, %v3468
  %v3496 = vadd.f32 %v3454, %v3468
  %v3497 = vadd.f32 %v3455, %v3468
  %v3498 = vadd.f32 %v3456, %v3468
  %v3499 = vadd.f32 %v3457, %v3468
  %v3500 = vadd.f32 %v3458, %v3468
  %v3501 = vadd.f32 %v3459, %v3468
  %v3502 = vadd.f32 %v3460, %v3468
  %v3503 = vadd.f32 %v3461, %v3468
  %v3504 = vadd.f32 %v3462, %v3468
  %v3505 = vcombine.low %v3470, %v3472
  %v3506 = vcombine.high %v3470, %v3472
  %v3508 = vunpack.c.l.s4 1983009808
  %v3509 = vunpack.c.0.s8 %v3508
  %v3510 = vlaneseq
  %v3511 = vshrl.u32 %v3510, 7
  %v3512 = vsub.s32 %v3509, %v3511
  %v3513 = vrot.slane %v3505, %v3512
  %v3515 = vunpack.c.l.s4 1983009808
  %v3516 = vunpack.c.0.s8 %v3515
  %v3517 = vlaneseq
  %v3518 = vshrl.u32 %v3517, 7
  %v3519 = vsub.s32 %v3516, %v3518
  %v3520 = vrot.slane %v3506, %v3519
  %v3521 = vcombine.low %v3471, %v3473
  %v3522 = vcombine.high %v3471, %v3473
  %v3524 = vunpack.c.l.s4 1983009808
  %v3525 = vunpack.c.0.s8 %v3524
  %v3526 = vlaneseq
  %v3527 = vshrl.u32 %v3526, 7
  %v3528 = vsub.s32 %v3525, %v3527
  %v3529 = vrot.slane %v3521, %v3528
  %v3531 = vunpack.c.l.s4 1983009808
  %v3532 = vunpack.c.0.s8 %v3531
  %v3533 = vlaneseq
  %v3534 = vshrl.u32 %v3533, 7
  %v3535 = vsub.s32 %v3532, %v3534
  %v3536 = vrot.slane %v3522, %v3535
  %v3537 = vcombine.low %v3474, %v3476
  %v3538 = vcombine.high %v3474, %v3476
  %v3540 = vunpack.c.l.s4 1983009808
  %v3541 = vunpack.c.0.s8 %v3540
  %v3542 = vlaneseq
  %v3543 = vshrl.u32 %v3542, 7
  %v3544 = vsub.s32 %v3541, %v3543
  %v3545 = vrot.slane %v3537, %v3544
  %v3547 = vunpack.c.l.s4 1983009808
  %v3548 = vunpack.c.0.s8 %v3547
  %v3549 = vlaneseq
  %v3550 = vshrl.u32 %v3549, 7
  %v3551 = vsub.s32 %v3548, %v3550
  %v3552 = vrot.slane %v3538, %v3551
  %v3553 = vcombine.low %v3475, %v3477
  %v3554 = vcombine.high %v3475, %v3477
  %v3556 = vunpack.c.l.s4 1983009808
  %v3557 = vunpack.c.0.s8 %v3556
  %v3558 = vlaneseq
  %v3559 = vshrl.u32 %v3558, 7
  %v3560 = vsub.s32 %v3557, %v3559
  %v3561 = vrot.slane %v3553, %v3560
  %v3563 = vunpack.c.l.s4 1983009808
  %v3564 = vunpack.c.0.s8 %v3563
  %v3565 = vlaneseq
  %v3566 = vshrl.u32 %v3565, 7
  %v3567 = vsub.s32 %v3564, %v3566
  %v3568 = vrot.slane %v3554, %v3567
  %v3569 = vcombine.low %v3513, %v3529
  %v3570 = vcombine.high %v3513, %v3529
  %v3572 = vunpack.c.l.s4 1934713408
  %v3573 = vunpack.c.0.s8 %v3572
  %v3574 = vlaneseq
  %v3575 = vshrl.u32 %v3574, 7
  %v3576 = vsub.s32 %v3573, %v3575
  %v3577 = vrot.slane %v3569, %v3576
  %v3579 = vunpack.c.l.s4 1934713408
  %v3580 = vunpack.c.0.s8 %v3579
  %v3581 = vlaneseq
  %v3582 = vshrl.u32 %v3581, 7
  %v3583 = vsub.s32 %v3580, %v3582
  %v3584 = vrot.slane %v3570, %v3583
  %v3585 = vcombine.low %v3520, %v3536
  %v3586 = vcombine.high %v3520, %v3536
  %v3588 = vunpack.c.l.s4 1934713408
  %v3589 = vunpack.c.0.s8 %v3588
  %v3590 = vlaneseq
  %v3591 = vshrl.u32 %v3590, 7
  %v3592 = vsub.s32 %v3589, %v3591
  %v3593 = vrot.slane %v3585, %v3592
  %v3595 = vunpack.c.l.s4 1934713408
  %v3596 = vunpack.c.0.s8 %v3595
  %v3597 = vlaneseq
  %v3598 = vshrl.u32 %v3597, 7
  %v3599 = vsub.s32 %v3596, %v3598
  %v3600 = vrot.slane %v3586, %v3599
  %v3601 = vcombine.low %v3545, %v3561
  %v3602 = vcombine.high %v3545, %v3561
  %v3604 = vunpack.c.l.s4 1934713408
  %v3605 = vunpack.c.0.s8 %v3604
  %v3606 = vlaneseq
  %v3607 = vshrl.u32 %v3606, 7
  %v3608 = vsub.s32 %v3605, %v3607
  %v3609 = vrot.slane %v3601, %v3608
  %v3611 = vunpack.c.l.s4 1934713408
  %v3612 = vunpack.c.0.s8 %v3611
  %v3613 = vlaneseq
  %v3614 = vshrl.u32 %v3613, 7
  %v3615 = vsub.s32 %v3612, %v3614
  %v3616 = vrot.slane %v3602, %v3615
  %v3617 = vcombine.low %v3552, %v3568
  %v3618 = vcombine.high %v3552, %v3568
  %v3620 = vunpack.c.l.s4 1934713408
  %v3621 = vunpack.c.0.s8 %v3620
  %v3622 = vlaneseq
  %v3623 = vshrl.u32 %v3622, 7
  %v3624 = vsub.s32 %v3621, %v3623
  %v3625 = vrot.slane %v3617, %v3624
  %v3627 = vunpack.c.l.s4 1934713408
  %v3628 = vunpack.c.0.s8 %v3627
  %v3629 = vlaneseq
  %v3630 = vshrl.u32 %v3629, 7
  %v3631 = vsub.s32 %v3628, %v3630
  %v3632 = vrot.slane %v3618, %v3631
  %v3633 = vcombine.low %v3577, %v3609
  %v3634 = vcombine.high %v3577, %v3609
  %v3635 = vcombine.low %v3584, %v3616
  %v3636 = vcombine.high %v3584, %v3616
  %v3637 = vcombine.low %v3593, %v3625
  %v3638 = vcombine.high %v3593, %v3625
  %v3639 = vcombine.low %v3600, %v3632
  %v3640 = vcombine.high %v3600, %v3632
  %v3641 = vcombine.low %v3478, %v3480
  %v3642 = vcombine.high %v3478, %v3480
  %v3644 = vunpack.c.l.s4 1983009808
  %v3645 = vunpack.c.0.s8 %v3644
  %v3646 = vlaneseq
  %v3647 = vshrl.u32 %v3646, 7
  %v3648 = vsub.s32 %v3645, %v3647
  %v3649 = vrot.slane %v3641, %v3648
  %v3651 = vunpack.c.l.s4 1983009808
  %v3652 = vunpack.c.0.s8 %v3651
  %v3653 = vlaneseq
  %v3654 = vshrl.u32 %v3653, 7
  %v3655 = vsub.s32 %v3652, %v3654
  %v3656 = vrot.slane %v3642, %v3655
  %v3657 = vcombine.low %v3479, %v3481
  %v3658 = vcombine.high %v3479, %v3481
  %v3660 = vunpack.c.l.s4 1983009808
  %v3661 = vunpack.c.0.s8 %v3660
  %v3662 = vlaneseq
  %v3663 = vshrl.u32 %v3662, 7
  %v3664 = vsub.s32 %v3661, %v3663
  %v3665 = vrot.slane %v3657, %v3664
  %v3667 = vunpack.c.l.s4 1983009808
  %v3668 = vunpack.c.0.s8 %v3667
  %v3669 = vlaneseq
  %v3670 = vshrl.u32 %v3669, 7
  %v3671 = vsub.s32 %v3668, %v3670
  %v3672 = vrot.slane %v3658, %v3671
  %v3673 = vcombine.low %v3482, %v3484
  %v3674 = vcombine.high %v3482, %v3484
  %v3676 = vunpack.c.l.s4 1983009808
  %v3677 = vunpack.c.0.s8 %v3676
  %v3678 = vlaneseq
  %v3679 = vshrl.u32 %v3678, 7
  %v3680 = vsub.s32 %v3677, %v3679
  %v3681 = vrot.slane %v3673, %v3680
  %v3683 = vunpack.c.l.s4 1983009808
  %v3684 = vunpack.c.0.s8 %v3683
  %v3685 = vlaneseq
  %v3686 = vshrl.u32 %v3685, 7
  %v3687 = vsub.s32 %v3684, %v3686
  %v3688 = vrot.slane %v3674, %v3687
  %v3689 = vcombine.low %v3483, %v3485
  %v3690 = vcombine.high %v3483, %v3485
  %v3692 = vunpack.c.l.s4 1983009808
  %v3693 = vunpack.c.0.s8 %v3692
  %v3694 = vlaneseq
  %v3695 = vshrl.u32 %v3694, 7
  %v3696 = vsub.s32 %v3693, %v3695
  %v3697 = vrot.slane %v3689, %v3696
  %v3699 = vunpack.c.l.s4 1983009808
  %v3700 = vunpack.c.0.s8 %v3699
  %v3701 = vlaneseq
  %v3702 = vshrl.u32 %v3701, 7
  %v3703 = vsub.s32 %v3700, %v3702
  %v3704 = vrot.slane %v3690, %v3703
  %v3705 = vcombine.low %v3649, %v3665
  %v3706 = vcombine.high %v3649, %v3665
  %v3708 = vunpack.c.l.s4 1934713408
  %v3709 = vunpack.c.0.s8 %v3708
  %v3710 = vlaneseq
  %v3711 = vshrl.u32 %v3710, 7
  %v3712 = vsub.s32 %v3709, %v3711
  %v3713 = vrot.slane %v3705, %v3712
  %v3715 = vunpack.c.l.s4 1934713408
  %v3716 = vunpack.c.0.s8 %v3715
  %v3717 = vlaneseq
  %v3718 = vshrl.u32 %v3717, 7
  %v3719 = vsub.s32 %v3716, %v3718
  %v3720 = vrot.slane %v3706, %v3719
  %v3721 = vcombine.low %v3656, %v3672
  %v3722 = vcombine.high %v3656, %v3672
  %v3724 = vunpack.c.l.s4 1934713408
  %v3725 = vunpack.c.0.s8 %v3724
  %v3726 = vlaneseq
  %v3727 = vshrl.u32 %v3726, 7
  %v3728 = vsub.s32 %v3725, %v3727
  %v3729 = vrot.slane %v3721, %v3728
  %v3731 = vunpack.c.l.s4 1934713408
  %v3732 = vunpack.c.0.s8 %v3731
  %v3733 = vlaneseq
  %v3734 = vshrl.u32 %v3733, 7
  %v3735 = vsub.s32 %v3732, %v3734
  %v3736 = vrot.slane %v3722, %v3735
  %v3737 = vcombine.low %v3681, %v3697
  %v3738 = vcombine.high %v3681, %v3697
  %v3740 = vunpack.c.l.s4 1934713408
  %v3741 = vunpack.c.0.s8 %v3740
  %v3742 = vlaneseq
  %v3743 = vshrl.u32 %v3742, 7
  %v3744 = vsub.s32 %v3741, %v3743
  %v3745 = vrot.slane %v3737, %v3744
  %v3747 = vunpack.c.l.s4 1934713408
  %v3748 = vunpack.c.0.s8 %v3747
  %v3749 = vlaneseq
  %v3750 = vshrl.u32 %v3749, 7
  %v3751 = vsub.s32 %v3748, %v3750
  %v3752 = vrot.slane %v3738, %v3751
  %v3753 = vcombine.low %v3688, %v3704
  %v3754 = vcombine.high %v3688, %v3704
  %v3756 = vunpack.c.l.s4 1934713408
  %v3757 = vunpack.c.0.s8 %v3756
  %v3758 = vlaneseq
  %v3759 = vshrl.u32 %v3758, 7
  %v3760 = vsub.s32 %v3757, %v3759
  %v3761 = vrot.slane %v3753, %v3760
  %v3763 = vunpack.c.l.s4 1934713408
  %v3764 = vunpack.c.0.s8 %v3763
  %v3765 = vlaneseq
  %v3766 = vshrl.u32 %v3765, 7
  %v3767 = vsub.s32 %v3764, %v3766
  %v3768 = vrot.slane %v3754, %v3767
  %v3769 = vcombine.low %v3713, %v3745
  %v3770 = vcombine.high %v3713, %v3745
  %v3771 = vcombine.low %v3720, %v3752
  %v3772 = vcombine.high %v3720, %v3752
  %v3773 = vcombine.low %v3729, %v3761
  %v3774 = vcombine.high %v3729, %v3761
  %v3775 = vcombine.low %v3736, %v3768
  %v3776 = vcombine.high %v3736, %v3768
  %v3777 = vcombine.low %v3486, %v3488
  %v3778 = vcombine.high %v3486, %v3488
  %v3780 = vunpack.c.l.s4 1983009808
  %v3781 = vunpack.c.0.s8 %v3780
  %v3782 = vlaneseq
  %v3783 = vshrl.u32 %v3782, 7
  %v3784 = vsub.s32 %v3781, %v3783
  %v3785 = vrot.slane %v3777, %v3784
  %v3787 = vunpack.c.l.s4 1983009808
  %v3788 = vunpack.c.0.s8 %v3787
  %v3789 = vlaneseq
  %v3790 = vshrl.u32 %v3789, 7
  %v3791 = vsub.s32 %v3788, %v3790
  %v3792 = vrot.slane %v3778, %v3791
  %v3793 = vcombine.low %v3487, %v3489
  %v3794 = vcombine.high %v3487, %v3489
  %v3796 = vunpack.c.l.s4 1983009808
  %v3797 = vunpack.c.0.s8 %v3796
  %v3798 = vlaneseq
  %v3799 = vshrl.u32 %v3798, 7
  %v3800 = vsub.s32 %v3797, %v3799
  %v3801 = vrot.slane %v3793, %v3800
  %v3803 = vunpack.c.l.s4 1983009808
  %v3804 = vunpack.c.0.s8 %v3803
  %v3805 = vlaneseq
  %v3806 = vshrl.u32 %v3805, 7
  %v3807 = vsub.s32 %v3804, %v3806
  %v3808 = vrot.slane %v3794, %v3807
  %v3809 = vcombine.low %v3490, %v3492
  %v3810 = vcombine.high %v3490, %v3492
  %v3812 = vunpack.c.l.s4 1983009808
  %v3813 = vunpack.c.0.s8 %v3812
  %v3814 = vlaneseq
  %v3815 = vshrl.u32 %v3814, 7
  %v3816 = vsub.s32 %v3813, %v3815
  %v3817 = vrot.slane %v3809, %v3816
  %v3819 = vunpack.c.l.s4 1983009808
  %v3820 = vunpack.c.0.s8 %v3819
  %v3821 = vlaneseq
  %v3822 = vshrl.u32 %v3821, 7
  %v3823 = vsub.s32 %v3820, %v3822
  %v3824 = vrot.slane %v3810, %v3823
  %v3825 = vcombine.low %v3491, %v3493
  %v3826 = vcombine.high %v3491, %v3493
  %v3828 = vunpack.c.l.s4 1983009808
  %v3829 = vunpack.c.0.s8 %v3828
  %v3830 = vlaneseq
  %v3831 = vshrl.u32 %v3830, 7
  %v3832 = vsub.s32 %v3829, %v3831
  %v3833 = vrot.slane %v3825, %v3832
  %v3835 = vunpack.c.l.s4 1983009808
  %v3836 = vunpack.c.0.s8 %v3835
  %v3837 = vlaneseq
  %v3838 = vshrl.u32 %v3837, 7
  %v3839 = vsub.s32 %v3836, %v3838
  %v3840 = vrot.slane %v3826, %v3839
  %v3841 = vcombine.low %v3785, %v3801
  %v3842 = vcombine.high %v3785, %v3801
  %v3844 = vunpack.c.l.s4 1934713408
  %v3845 = vunpack.c.0.s8 %v3844
  %v3846 = vlaneseq
  %v3847 = vshrl.u32 %v3846, 7
  %v3848 = vsub.s32 %v3845, %v3847
  %v3849 = vrot.slane %v3841, %v3848
  %v3851 = vunpack.c.l.s4 1934713408
  %v3852 = vunpack.c.0.s8 %v3851
  %v3853 = vlaneseq
  %v3854 = vshrl.u32 %v3853, 7
  %v3855 = vsub.s32 %v3852, %v3854
  %v3856 = vrot.slane %v3842, %v3855
  %v3857 = vcombine.low %v3792, %v3808
  %v3858 = vcombine.high %v3792, %v3808
  %v3860 = vunpack.c.l.s4 1934713408
  %v3861 = vunpack.c.0.s8 %v3860
  %v3862 = vlaneseq
  %v3863 = vshrl.u32 %v3862, 7
  %v3864 = vsub.s32 %v3861, %v3863
  %v3865 = vrot.slane %v3857, %v3864
  %v3867 = vunpack.c.l.s4 1934713408
  %v3868 = vunpack.c.0.s8 %v3867
  %v3869 = vlaneseq
  %v3870 = vshrl.u32 %v3869, 7
  %v3871 = vsub.s32 %v3868, %v3870
  %v3872 = vrot.slane %v3858, %v3871
  %v3873 = vcombine.low %v3817, %v3833
  %v3874 = vcombine.high %v3817, %v3833
  %v3876 = vunpack.c.l.s4 1934713408
  %v3877 = vunpack.c.0.s8 %v3876
  %v3878 = vlaneseq
  %v3879 = vshrl.u32 %v3878, 7
  %v3880 = vsub.s32 %v3877, %v3879
  %v3881 = vrot.slane %v3873, %v3880
  %v3883 = vunpack.c.l.s4 1934713408
  %v3884 = vunpack.c.0.s8 %v3883
  %v3885 = vlaneseq
  %v3886 = vshrl.u32 %v3885, 7
  %v3887 = vsub.s32 %v3884, %v3886
  %v3888 = vrot.slane %v3874, %v3887
  %v3889 = vcombine.low %v3824, %v3840
  %v3890 = vcombine.high %v3824, %v3840
  %v3892 = vunpack.c.l.s4 1934713408
  %v3893 = vunpack.c.0.s8 %v3892
  %v3894 = vlaneseq
  %v3895 = vshrl.u32 %v3894, 7
  %v3896 = vsub.s32 %v3893, %v3895
  %v3897 = vrot.slane %v3889, %v3896
  %v3899 = vunpack.c.l.s4 1934713408
  %v3900 = vunpack.c.0.s8 %v3899
  %v3901 = vlaneseq
  %v3902 = vshrl.u32 %v3901, 7
  %v3903 = vsub.s32 %v3900, %v3902
  %v3904 = vrot.slane %v3890, %v3903
  %v3905 = vcombine.low %v3849, %v3881
  %v3906 = vcombine.high %v3849, %v3881
  %v3907 = vcombine.low %v3856, %v3888
  %v3908 = vcombine.high %v3856, %v3888
  %v3909 = vcombine.low %v3865, %v3897
  %v3910 = vcombine.high %v3865, %v3897
  %v3911 = vcombine.low %v3872, %v3904
  %v3912 = vcombine.high %v3872, %v3904
  %v3913 = vcombine.low %v3494, %v3496
  %v3914 = vcombine.high %v3494, %v3496
  %v3916 = vunpack.c.l.s4 1983009808
  %v3917 = vunpack.c.0.s8 %v3916
  %v3918 = vlaneseq
  %v3919 = vshrl.u32 %v3918, 7
  %v3920 = vsub.s32 %v3917, %v3919
  %v3921 = vrot.slane %v3913, %v3920
  %v3923 = vunpack.c.l.s4 1983009808
  %v3924 = vunpack.c.0.s8 %v3923
  %v3925 = vlaneseq
  %v3926 = vshrl.u32 %v3925, 7
  %v3927 = vsub.s32 %v3924, %v3926
  %v3928 = vrot.slane %v3914, %v3927
  %v3929 = vcombine.low %v3495, %v3497
  %v3930 = vcombine.high %v3495, %v3497
  %v3932 = vunpack.c.l.s4 1983009808
  %v3933 = vunpack.c.0.s8 %v3932
  %v3934 = vlaneseq
  %v3935 = vshrl.u32 %v3934, 7
  %v3936 = vsub.s32 %v3933, %v3935
  %v3937 = vrot.slane %v3929, %v3936
  %v3939 = vunpack.c.l.s4 1983009808
  %v3940 = vunpack.c.0.s8 %v3939
  %v3941 = vlaneseq
  %v3942 = vshrl.u32 %v3941, 7
  %v3943 = vsub.s32 %v3940, %v3942
  %v3944 = vrot.slane %v3930, %v3943
  %v3945 = vcombine.low %v3498, %v3500
  %v3946 = vcombine.high %v3498, %v3500
  %v3948 = vunpack.c.l.s4 1983009808
  %v3949 = vunpack.c.0.s8 %v3948
  %v3950 = vlaneseq
  %v3951 = vshrl.u32 %v3950, 7
  %v3952 = vsub.s32 %v3949, %v3951
  %v3953 = vrot.slane %v3945, %v3952
  %v3955 = vunpack.c.l.s4 1983009808
  %v3956 = vunpack.c.0.s8 %v3955
  %v3957 = vlaneseq
  %v3958 = vshrl.u32 %v3957, 7
  %v3959 = vsub.s32 %v3956, %v3958
  %v3960 = vrot.slane %v3946, %v3959
  %v3961 = vcombine.low %v3499, %v3501
  %v3962 = vcombine.high %v3499, %v3501
  %v3964 = vunpack.c.l.s4 1983009808
  %v3965 = vunpack.c.0.s8 %v3964
  %v3966 = vlaneseq
  %v3967 = vshrl.u32 %v3966, 7
  %v3968 = vsub.s32 %v3965, %v3967
  %v3969 = vrot.slane %v3961, %v3968
  %v3971 = vunpack.c.l.s4 1983009808
  %v3972 = vunpack.c.0.s8 %v3971
  %v3973 = vlaneseq
  %v3974 = vshrl.u32 %v3973, 7
  %v3975 = vsub.s32 %v3972, %v3974
  %v3976 = vrot.slane %v3962, %v3975
  %v3977 = vcombine.low %v3921, %v3937
  %v3978 = vcombine.high %v3921, %v3937
  %v3980 = vunpack.c.l.s4 1934713408
  %v3981 = vunpack.c.0.s8 %v3980
  %v3982 = vlaneseq
  %v3983 = vshrl.u32 %v3982, 7
  %v3984 = vsub.s32 %v3981, %v3983
  %v3985 = vrot.slane %v3977, %v3984
  %v3987 = vunpack.c.l.s4 1934713408
  %v3988 = vunpack.c.0.s8 %v3987
  %v3989 = vlaneseq
  %v3990 = vshrl.u32 %v3989, 7
  %v3991 = vsub.s32 %v3988, %v3990
  %v3992 = vrot.slane %v3978, %v3991
  %v3993 = vcombine.low %v3928, %v3944
  %v3994 = vcombine.high %v3928, %v3944
  %v3996 = vunpack.c.l.s4 1934713408
  %v3997 = vunpack.c.0.s8 %v3996
  %v3998 = vlaneseq
  %v3999 = vshrl.u32 %v3998, 7
  %v4000 = vsub.s32 %v3997, %v3999
  %v4001 = vrot.slane %v3993, %v4000
  %v4003 = vunpack.c.l.s4 1934713408
  %v4004 = vunpack.c.0.s8 %v4003
  %v4005 = vlaneseq
  %v4006 = vshrl.u32 %v4005, 7
  %v4007 = vsub.s32 %v4004, %v4006
  %v4008 = vrot.slane %v3994, %v4007
  %v4009 = vcombine.low %v3953, %v3969
  %v4010 = vcombine.high %v3953, %v3969
  %v4012 = vunpack.c.l.s4 1934713408
  %v4013 = vunpack.c.0.s8 %v4012
  %v4014 = vlaneseq
  %v4015 = vshrl.u32 %v4014, 7
  %v4016 = vsub.s32 %v4013, %v4015
  %v4017 = vrot.slane %v4009, %v4016
  %v4019 = vunpack.c.l.s4 1934713408
  %v4020 = vunpack.c.0.s8 %v4019
  %v4021 = vlaneseq
  %v4022 = vshrl.u32 %v4021, 7
  %v4023 = vsub.s32 %v4020, %v4022
  %v4024 = vrot.slane %v4010, %v4023
  %v4025 = vcombine.low %v3960, %v3976
  %v4026 = vcombine.high %v3960, %v3976
  %v4028 = vunpack.c.l.s4 1934713408
  %v4029 = vunpack.c.0.s8 %v4028
  %v4030 = vlaneseq
  %v4031 = vshrl.u32 %v4030, 7
  %v4032 = vsub.s32 %v4029, %v4031
  %v4033 = vrot.slane %v4025, %v4032
  %v4035 = vunpack.c.l.s4 1934713408
  %v4036 = vunpack.c.0.s8 %v4035
  %v4037 = vlaneseq
  %v4038 = vshrl.u32 %v4037, 7
  %v4039 = vsub.s32 %v4036, %v4038
  %v4040 = vrot.slane %v4026, %v4039
  %v4041 = vcombine.low %v3985, %v4017
  %v4042 = vcombine.high %v3985, %v4017
  %v4043 = vcombine.low %v3992, %v4024
  %v4044 = vcombine.high %v3992, %v4024
  %v4045 = vcombine.low %v4001, %v4033
  %v4046 = vcombine.high %v4001, %v4033
  %v4047 = vcombine.low %v4008, %v4040
  %v4048 = vcombine.high %v4008, %v4040
  %v4049 = vcombine.low %v3502, %v3504
  %v4050 = vcombine.high %v3502, %v3504
  %v4052 = vunpack.c.l.s4 1983009808
  %v4053 = vunpack.c.0.s8 %v4052
  %v4054 = vlaneseq
  %v4055 = vshrl.u32 %v4054, 7
  %v4056 = vsub.s32 %v4053, %v4055
  %v4057 = vrot.slane %v4049, %v4056
  %v4059 = vunpack.c.l.s4 1983009808
  %v4060 = vunpack.c.0.s8 %v4059
  %v4061 = vlaneseq
  %v4062 = vshrl.u32 %v4061, 7
  %v4063 = vsub.s32 %v4060, %v4062
  %v4064 = vrot.slane %v4050, %v4063
  %v4065 = vcombine.high %v3503, 0.0
  %v4067 = vunpack.c.l.s4 1983009808
  %v4068 = vunpack.c.0.s8 %v4067
  %v4069 = vlaneseq
  %v4070 = vshrl.u32 %v4069, 7
  %v4071 = vsub.s32 %v4068, %v4070
  %v4072 = vrot.slane %v3503, %v4071
  %v4074 = vunpack.c.l.s4 1983009808
  %v4075 = vunpack.c.0.s8 %v4074
  %v4076 = vlaneseq
  %v4077 = vshrl.u32 %v4076, 7
  %v4078 = vsub.s32 %v4075, %v4077
  %v4079 = vrot.slane %v4065, %v4078
  %v4080 = vcombine.low %v4057, %v4072
  %v4081 = vcombine.high %v4057, %v4072
  %v4083 = vunpack.c.l.s4 1934713408
  %v4084 = vunpack.c.0.s8 %v4083
  %v4085 = vlaneseq
  %v4086 = vshrl.u32 %v4085, 7
  %v4087 = vsub.s32 %v4084, %v4086
  %v4088 = vrot.slane %v4080, %v4087
  %v4090 = vunpack.c.l.s4 1934713408
  %v4091 = vunpack.c.0.s8 %v4090
  %v4092 = vlaneseq
  %v4093 = vshrl.u32 %v4092, 7
  %v4094 = vsub.s32 %v4091, %v4093
  %v4095 = vrot.slane %v4081, %v4094
  %v4096 = vcombine.low %v4064, %v4079
  %v4097 = vcombine.high %v4064, %v4079
  %v4099 = vunpack.c.l.s4 1934713408
  %v4100 = vunpack.c.0.s8 %v4099
  %v4101 = vlaneseq
  %v4102 = vshrl.u32 %v4101, 7
  %v4103 = vsub.s32 %v4100, %v4102
  %v4104 = vrot.slane %v4096, %v4103
  %v4106 = vunpack.c.l.s4 1934713408
  %v4107 = vunpack.c.0.s8 %v4106
  %v4108 = vlaneseq
  %v4109 = vshrl.u32 %v4108, 7
  %v4110 = vsub.s32 %v4107, %v4109
  %v4111 = vrot.slane %v4097, %v4110
  %v4112 = vcombine.high %v4088, 0.0
  %v4113 = vcombine.high %v4095, 0.0
  %v4114 = vcombine.high %v4104, 0.0
  %v4115 = vcombine.high %v4111, 0.0
  %v4116 = vmul.f32 %v3633, %v3633
  %v4117 = vmul.f32 %v3769, %v3769
  %v4118 = vmul.f32 %v3905, %v3905
  %v4119 = vmul.f32 %v4041, %v4041
  %v4120 = vmul.f32 %v4088, %v4088
  %v4121 = vmul.f32 %v3634, %v3634
  %v4122 = vmul.f32 %v3770, %v3770
  %v4123 = vmul.f32 %v3906, %v3906
  %v4124 = vmul.f32 %v4042, %v4042
  %v4125 = vmul.f32 %v4112, %v4112
  %v4126 = vmul.f32 %v3635, %v3635
  %v4127 = vmul.f32 %v3771, %v3771
  %v4128 = vmul.f32 %v3907, %v3907
  %v4129 = vmul.f32 %v4043, %v4043
  %v4130 = vmul.f32 %v4095, %v4095
  %v4131 = vmul.f32 %v3636, %v3636
  %v4132 = vmul.f32 %v3772, %v3772
  %v4133 = vmul.f32 %v3908, %v3908
  %v4134 = vmul.f32 %v4044, %v4044
  %v4135 = vmul.f32 %v4113, %v4113
  %v4136 = vmul.f32 %v3637, %v3637
  %v4137 = vmul.f32 %v3773, %v3773
  %v4138 = vmul.f32 %v3909, %v3909
  %v4139 = vmul.f32 %v4045, %v4045
  %v4140 = vmul.f32 %v4104, %v4104
  %v4141 = vmul.f32 %v3638, %v3638
  %v4142 = vmul.f32 %v3774, %v3774
  %v4143 = vmul.f32 %v3910, %v3910
  %v4144 = vmul.f32 %v4046, %v4046
  %v4145 = vmul.f32 %v4114, %v4114
  %v4146 = vmul.f32 %v3639, %v3639
  %v4147 = vmul.f32 %v3775, %v3775
  %v4148 = vmul.f32 %v3911, %v3911
  %v4149 = vmul.f32 %v4047, %v4047
  %v4150 = vmul.f32 %v4111, %v4111
  %v4151 = vmul.f32 %v3640, %v3640
  %v4152 = vmul.f32 %v3776, %v3776
  %v4153 = vmul.f32 %v3912, %v3912
  %v4154 = vmul.f32 %v4048, %v4048
  %v4155 = vmul.f32 %v4115, %v4115
  %v4156 = vsel %vm153, %v4116, 0.0
  %4157 = vadd.xlane.f32.xlu0 %v4156
  %v4158 = vpop.xlane.xlu0 %4157
  %v4159 = vsel %vm153, %v4117, 0.0
  %4160 = vadd.xlane.f32.xlu0 %v4159
  %v4161 = vpop.xlane.xlu0 %4160
  %v4162 = vsel %vm153, %v4118, 0.0
  %4163 = vadd.xlane.f32.xlu0 %v4162
  %v4164 = vpop.xlane.xlu0 %4163
  %v4165 = vsel %vm153, %v4119, 0.0
  %4166 = vadd.xlane.f32.xlu0 %v4165
  %v4167 = vpop.xlane.xlu0 %4166
  %vm4168 = vcmask 518144
  %v4169 = vsel %vm4168, %v4120, 0.0
  %4170 = vadd.xlane.f32.xlu0 %v4169
  %v4171 = vpop.xlane.xlu0 %4170
  %v4172 = vsel %vm153, %v4121, 0.0
  %4173 = vadd.xlane.f32.xlu0 %v4172
  %v4174 = vpop.xlane.xlu0 %4173
  %v4175 = vsel %vm153, %v4122, 0.0
  %4176 = vadd.xlane.f32.xlu0 %v4175
  %v4177 = vpop.xlane.xlu0 %4176
  %v4178 = vsel %vm153, %v4123, 0.0
  %4179 = vadd.xlane.f32.xlu0 %v4178
  %v4180 = vpop.xlane.xlu0 %4179
  %v4181 = vsel %vm153, %v4124, 0.0
  %4182 = vadd.xlane.f32.xlu0 %v4181
  %v4183 = vpop.xlane.xlu0 %4182
  %v4184 = vsel %vm4168, %v4125, 0.0
  %4185 = vadd.xlane.f32.xlu0 %v4184
  %v4186 = vpop.xlane.xlu0 %4185
  %v4187 = vsel %vm153, %v4126, 0.0
  %4188 = vadd.xlane.f32.xlu0 %v4187
  %v4189 = vpop.xlane.xlu0 %4188
  %v4190 = vsel %vm153, %v4127, 0.0
  %4191 = vadd.xlane.f32.xlu0 %v4190
  %v4192 = vpop.xlane.xlu0 %4191
  %v4193 = vsel %vm153, %v4128, 0.0
  %4194 = vadd.xlane.f32.xlu0 %v4193
  %v4195 = vpop.xlane.xlu0 %4194
  %v4196 = vsel %vm153, %v4129, 0.0
  %4197 = vadd.xlane.f32.xlu0 %v4196
  %v4198 = vpop.xlane.xlu0 %4197
  %v4199 = vsel %vm4168, %v4130, 0.0
  %4200 = vadd.xlane.f32.xlu0 %v4199
  %v4201 = vpop.xlane.xlu0 %4200
  %v4202 = vsel %vm153, %v4131, 0.0
  %4203 = vadd.xlane.f32.xlu0 %v4202
  %v4204 = vpop.xlane.xlu0 %4203
  %v4205 = vsel %vm153, %v4132, 0.0
  %4206 = vadd.xlane.f32.xlu0 %v4205
  %v4207 = vpop.xlane.xlu0 %4206
  %v4208 = vsel %vm153, %v4133, 0.0
  %4209 = vadd.xlane.f32.xlu0 %v4208
  %v4210 = vpop.xlane.xlu0 %4209
  %v4211 = vsel %vm153, %v4134, 0.0
  %4212 = vadd.xlane.f32.xlu0 %v4211
  %v4213 = vpop.xlane.xlu0 %4212
  %v4214 = vsel %vm4168, %v4135, 0.0
  %4215 = vadd.xlane.f32.xlu0 %v4214
  %v4216 = vpop.xlane.xlu0 %4215
  %v4217 = vsel %vm153, %v4136, 0.0
  %4218 = vadd.xlane.f32.xlu0 %v4217
  %v4219 = vpop.xlane.xlu0 %4218
  %v4220 = vsel %vm153, %v4137, 0.0
  %4221 = vadd.xlane.f32.xlu0 %v4220
  %v4222 = vpop.xlane.xlu0 %4221
  %v4223 = vsel %vm153, %v4138, 0.0
  %4224 = vadd.xlane.f32.xlu0 %v4223
  %v4225 = vpop.xlane.xlu0 %4224
  %v4226 = vsel %vm153, %v4139, 0.0
  %4227 = vadd.xlane.f32.xlu0 %v4226
  %v4228 = vpop.xlane.xlu0 %4227
  %v4229 = vsel %vm4168, %v4140, 0.0
  %4230 = vadd.xlane.f32.xlu0 %v4229
  %v4231 = vpop.xlane.xlu0 %4230
  %v4232 = vsel %vm153, %v4141, 0.0
  %4233 = vadd.xlane.f32.xlu0 %v4232
  %v4234 = vpop.xlane.xlu0 %4233
  %v4235 = vsel %vm153, %v4142, 0.0
  %4236 = vadd.xlane.f32.xlu0 %v4235
  %v4237 = vpop.xlane.xlu0 %4236
  %v4238 = vsel %vm153, %v4143, 0.0
  %4239 = vadd.xlane.f32.xlu0 %v4238
  %v4240 = vpop.xlane.xlu0 %4239
  %v4241 = vsel %vm153, %v4144, 0.0
  %4242 = vadd.xlane.f32.xlu0 %v4241
  %v4243 = vpop.xlane.xlu0 %4242
  %v4244 = vsel %vm4168, %v4145, 0.0
  %4245 = vadd.xlane.f32.xlu0 %v4244
  %v4246 = vpop.xlane.xlu0 %4245
  %v4247 = vsel %vm153, %v4146, 0.0
  %4248 = vadd.xlane.f32.xlu0 %v4247
  %v4249 = vpop.xlane.xlu0 %4248
  %v4250 = vsel %vm153, %v4147, 0.0
  %4251 = vadd.xlane.f32.xlu0 %v4250
  %v4252 = vpop.xlane.xlu0 %4251
  %v4253 = vsel %vm153, %v4148, 0.0
  %4254 = vadd.xlane.f32.xlu0 %v4253
  %v4255 = vpop.xlane.xlu0 %4254
  %v4256 = vsel %vm153, %v4149, 0.0
  %4257 = vadd.xlane.f32.xlu0 %v4256
  %v4258 = vpop.xlane.xlu0 %4257
  %v4259 = vsel %vm4168, %v4150, 0.0
  %4260 = vadd.xlane.f32.xlu0 %v4259
  %v4261 = vpop.xlane.xlu0 %4260
  %v4262 = vsel %vm153, %v4151, 0.0
  %4263 = vadd.xlane.f32.xlu0 %v4262
  %v4264 = vpop.xlane.xlu0 %4263
  %v4265 = vsel %vm153, %v4152, 0.0
  %4266 = vadd.xlane.f32.xlu0 %v4265
  %v4267 = vpop.xlane.xlu0 %4266
  %v4268 = vsel %vm153, %v4153, 0.0
  %4269 = vadd.xlane.f32.xlu0 %v4268
  %v4270 = vpop.xlane.xlu0 %4269
  %v4271 = vsel %vm153, %v4154, 0.0
  %4272 = vadd.xlane.f32.xlu0 %v4271
  %v4273 = vpop.xlane.xlu0 %4272
  %v4274 = vsel %vm4168, %v4155, 0.0
  %4275 = vadd.xlane.f32.xlu0 %v4274
  %v4276 = vpop.xlane.xlu0 %4275
  %v4277 = vmax.f32 %v4158, 1e-24
  %v4278 = vmax.f32 %v4161, 1e-24
  %v4279 = vmax.f32 %v4164, 1e-24
  %v4280 = vmax.f32 %v4167, 1e-24
  %v4281 = vmax.f32 %v4171, 1e-24
  %v4282 = vmax.f32 %v4174, 1e-24
  %v4283 = vmax.f32 %v4177, 1e-24
  %v4284 = vmax.f32 %v4180, 1e-24
  %v4285 = vmax.f32 %v4183, 1e-24
  %v4286 = vmax.f32 %v4186, 1e-24
  %v4287 = vmax.f32 %v4189, 1e-24
  %v4288 = vmax.f32 %v4192, 1e-24
  %v4289 = vmax.f32 %v4195, 1e-24
  %v4290 = vmax.f32 %v4198, 1e-24
  %v4291 = vmax.f32 %v4201, 1e-24
  %v4292 = vmax.f32 %v4204, 1e-24
  %v4293 = vmax.f32 %v4207, 1e-24
  %v4294 = vmax.f32 %v4210, 1e-24
  %v4295 = vmax.f32 %v4213, 1e-24
  %v4296 = vmax.f32 %v4216, 1e-24
  %v4297 = vmax.f32 %v4219, 1e-24
  %v4298 = vmax.f32 %v4222, 1e-24
  %v4299 = vmax.f32 %v4225, 1e-24
  %v4300 = vmax.f32 %v4228, 1e-24
  %v4301 = vmax.f32 %v4231, 1e-24
  %v4302 = vmax.f32 %v4234, 1e-24
  %v4303 = vmax.f32 %v4237, 1e-24
  %v4304 = vmax.f32 %v4240, 1e-24
  %v4305 = vmax.f32 %v4243, 1e-24
  %v4306 = vmax.f32 %v4246, 1e-24
  %v4307 = vmax.f32 %v4249, 1e-24
  %v4308 = vmax.f32 %v4252, 1e-24
  %v4309 = vmax.f32 %v4255, 1e-24
  %v4310 = vmax.f32 %v4258, 1e-24
  %v4311 = vmax.f32 %v4261, 1e-24
  %v4312 = vmax.f32 %v4264, 1e-24
  %v4313 = vmax.f32 %v4267, 1e-24
  %v4314 = vmax.f32 %v4270, 1e-24
  %v4315 = vmax.f32 %v4273, 1e-24
  %v4316 = vmax.f32 %v4276, 1e-24
  %v4317 = vrsqrt.pop %v4277
  %v4318 = vrsqrt.pop %v4278
  %v4319 = vrsqrt.pop %v4279
  %v4320 = vrsqrt.pop %v4280
  %v4321 = vrsqrt.pop %v4281
  %v4322 = vrsqrt.pop %v4282
  %v4323 = vrsqrt.pop %v4283
  %v4324 = vrsqrt.pop %v4284
  %v4325 = vrsqrt.pop %v4285
  %v4326 = vrsqrt.pop %v4286
  %v4327 = vrsqrt.pop %v4287
  %v4328 = vrsqrt.pop %v4288
  %v4329 = vrsqrt.pop %v4289
  %v4330 = vrsqrt.pop %v4290
  %v4331 = vrsqrt.pop %v4291
  %v4332 = vrsqrt.pop %v4292
  %v4333 = vrsqrt.pop %v4293
  %v4334 = vrsqrt.pop %v4294
  %v4335 = vrsqrt.pop %v4295
  %v4336 = vrsqrt.pop %v4296
  %v4337 = vrsqrt.pop %v4297
  %v4338 = vrsqrt.pop %v4298
  %v4339 = vrsqrt.pop %v4299
  %v4340 = vrsqrt.pop %v4300
  %v4341 = vrsqrt.pop %v4301
  %v4342 = vrsqrt.pop %v4302
  %v4343 = vrsqrt.pop %v4303
  %v4344 = vrsqrt.pop %v4304
  %v4345 = vrsqrt.pop %v4305
  %v4346 = vrsqrt.pop %v4306
  %v4347 = vrsqrt.pop %v4307
  %v4348 = vrsqrt.pop %v4308
  %v4349 = vrsqrt.pop %v4309
  %v4350 = vrsqrt.pop %v4310
  %v4351 = vrsqrt.pop %v4311
  %v4352 = vrsqrt.pop %v4312
  %v4353 = vrsqrt.pop %v4313
  %v4354 = vrsqrt.pop %v4314
  %v4355 = vrsqrt.pop %v4315
  %v4356 = vrsqrt.pop %v4316
  %v4357 = vpack.c.bf16 %v3769, %v3633
  %v4358 = vpack.c.bf16 %v4041, %v3905
  %v4359 = vpack.c.bf16 %v4088, %v4088
  %v4360 = vpack.c.bf16 %v3770, %v3634
  %v4361 = vpack.c.bf16 %v4042, %v3906
  %v4362 = vpack.c.bf16 %v4112, %v4112
  %v4363 = vpack.c.bf16 %v3771, %v3635
  %v4364 = vpack.c.bf16 %v4043, %v3907
  %v4365 = vpack.c.bf16 %v4095, %v4095
  %v4366 = vpack.c.bf16 %v3772, %v3636
  %v4367 = vpack.c.bf16 %v4044, %v3908
  %v4368 = vpack.c.bf16 %v4113, %v4113
  %v4369 = vpack.c.bf16 %v3773, %v3637
  %v4370 = vpack.c.bf16 %v4045, %v3909
  %v4371 = vpack.c.bf16 %v4104, %v4104
  %v4372 = vpack.c.bf16 %v3774, %v3638
  %v4373 = vpack.c.bf16 %v4046, %v3910
  %v4374 = vpack.c.bf16 %v4114, %v4114
  %v4375 = vpack.c.bf16 %v3775, %v3639
  %v4376 = vpack.c.bf16 %v4047, %v3911
  %v4377 = vpack.c.bf16 %v4111, %v4111
  %v4378 = vpack.c.bf16 %v3776, %v3640
  %v4379 = vpack.c.bf16 %v4048, %v3912
  %v4380 = vpack.c.bf16 %v4115, %v4115
  %v4381 = vld [vmem:[%s5] sm:$0x7]
  %vm4382 = vcmask 285696
  %v4384 = vsel %vm4382, %v4381, 0
  %vm4386 = vcmask 1041408
  %v4387 = vsel %vm1049, 4294967295, 65535
  %v4388 = vsel %vm4386, %v4387, 0
  %v4390 = vand.u32 %v4359, %v4388
  %4392 = vmatprep.subr.bf16.mxu0 0
  %4393 = vmatpush1.bf16.msra.mxu0 %v4357
  %4394 = vmatprep.subr.bf16.mxu0 0
  %4395 = vmatpush1.bf16.msra.mxu0 %v4358
  %4396 = vmatprep.subr.bf16.mxu0 0
  %4397 = vmatpush1.bf16.msra.mxu0 %v4390
  %4398 = vmatprep.subr.bf16.mxu0 0
  %4399 = vmatpush1.bf16.msra.mxu0 0
  %4400 = vmatprep.subr.bf16.mxu0 0
  %4401 = vmatpush1.bf16.msra.mxu0 0
  %4402 = vmatprep.subr.bf16.mxu0 0
  %4403 = vmatpush1.bf16.msra.mxu0 0
  %4404 = vmatprep.subr.bf16.mxu0 0
  %4405 = vmatpush1.bf16.msra.mxu0 0
  %4406 = vmatprep.subr.bf16.mxu0 0
  %4407 = vmatpush1.bf16.msra.mxu0 0
  %4408 = vmatprep.subr.bf16.mxu0 0
  %4409 = vmatpush1.bf16.msra.mxu0 0
  %4410 = vmatprep.subr.bf16.mxu0 0
  %4411 = vmatpush1.bf16.msra.mxu0 0
  %4412 = vmatprep.subr.bf16.mxu0 0
  %4413 = vmatpush1.bf16.msra.mxu0 0
  %4414 = vmatprep.subr.bf16.mxu0 0
  %4415 = vmatpush1.bf16.msra.mxu0 0
  %4416 = vmatprep.subr.bf16.mxu0 0
  %4417 = vmatpush1.bf16.msra.mxu0 0
  %4418 = vmatprep.subr.bf16.mxu0 0
  %4419 = vmatpush1.bf16.msra.mxu0 0
  %4420 = vmatprep.subr.bf16.mxu0 0
  %4421 = vmatpush1.bf16.msra.mxu0 0
  %4422 = vmatprep.subr.bf16.mxu0 0
  %4423 = vmatpush1.bf16.msra.mxu0 0
  %4424 = vmatprep.mubr.bf16.mxu0 0
  %4425 = vmatmul.mubr.bf16.gmra.mrb[0].mxu0 %v4384
  %v4426 = vpop.f32.mrb[0].mxu0
  %v4427 = vadd.f32 0.0, %v4426
  %v4428 = vpop.f32.mrb[0].mxu0
  %v4429 = vpop.f32.mrb[0].mxu0
  %v4430 = vpop.f32.mrb[0].mxu0
  %4431 = vdwg.mxu0
  %v4433 = vand.u32 %v4362, %v4388
  %4435 = vmatprep.subr.bf16.mxu0 0
  %4436 = vmatpush1.bf16.msra.mxu0 %v4360
  %4437 = vmatprep.subr.bf16.mxu0 0
  %4438 = vmatpush1.bf16.msra.mxu0 %v4361
  %4439 = vmatprep.subr.bf16.mxu0 0
  %4440 = vmatpush1.bf16.msra.mxu0 %v4433
  %4441 = vmatprep.subr.bf16.mxu0 0
  %4442 = vmatpush1.bf16.msra.mxu0 0
  %4443 = vmatprep.subr.bf16.mxu0 0
  %4444 = vmatpush1.bf16.msra.mxu0 0
  %4445 = vmatprep.subr.bf16.mxu0 0
  %4446 = vmatpush1.bf16.msra.mxu0 0
  %4447 = vmatprep.subr.bf16.mxu0 0
  %4448 = vmatpush1.bf16.msra.mxu0 0
  %4449 = vmatprep.subr.bf16.mxu0 0
  %4450 = vmatpush1.bf16.msra.mxu0 0
  %4451 = vmatprep.subr.bf16.mxu0 0
  %4452 = vmatpush1.bf16.msra.mxu0 0
  %4453 = vmatprep.subr.bf16.mxu0 0
  %4454 = vmatpush1.bf16.msra.mxu0 0
  %4455 = vmatprep.subr.bf16.mxu0 0
  %4456 = vmatpush1.bf16.msra.mxu0 0
  %4457 = vmatprep.subr.bf16.mxu0 0
  %4458 = vmatpush1.bf16.msra.mxu0 0
  %4459 = vmatprep.subr.bf16.mxu0 0
  %4460 = vmatpush1.bf16.msra.mxu0 0
  %4461 = vmatprep.subr.bf16.mxu0 0
  %4462 = vmatpush1.bf16.msra.mxu0 0
  %4463 = vmatprep.subr.bf16.mxu0 0
  %4464 = vmatpush1.bf16.msra.mxu0 0
  %4465 = vmatprep.subr.bf16.mxu0 0
  %4466 = vmatpush1.bf16.msra.mxu0 0
  %4467 = vmatprep.mubr.bf16.mxu0 0
  %4468 = vmatmul.mubr.bf16.gmra.mrb[0].mxu0 %v4384
  %v4469 = vpop.f32.mrb[0].mxu0
  %v4470 = vadd.f32 0.0, %v4469
  %v4471 = vpop.f32.mrb[0].mxu0
  %v4472 = vpop.f32.mrb[0].mxu0
  %v4473 = vpop.f32.mrb[0].mxu0
  %4474 = vdwg.mxu0
  %v4476 = vand.u32 %v4365, %v4388
  %4478 = vmatprep.subr.bf16.mxu0 0
  %4479 = vmatpush1.bf16.msra.mxu0 %v4363
  %4480 = vmatprep.subr.bf16.mxu0 0
  %4481 = vmatpush1.bf16.msra.mxu0 %v4364
  %4482 = vmatprep.subr.bf16.mxu0 0
  %4483 = vmatpush1.bf16.msra.mxu0 %v4476
  %4484 = vmatprep.subr.bf16.mxu0 0
  %4485 = vmatpush1.bf16.msra.mxu0 0
  %4486 = vmatprep.subr.bf16.mxu0 0
  %4487 = vmatpush1.bf16.msra.mxu0 0
  %4488 = vmatprep.subr.bf16.mxu0 0
  %4489 = vmatpush1.bf16.msra.mxu0 0
  %4490 = vmatprep.subr.bf16.mxu0 0
  %4491 = vmatpush1.bf16.msra.mxu0 0
  %4492 = vmatprep.subr.bf16.mxu0 0
  %4493 = vmatpush1.bf16.msra.mxu0 0
  %4494 = vmatprep.subr.bf16.mxu0 0
  %4495 = vmatpush1.bf16.msra.mxu0 0
  %4496 = vmatprep.subr.bf16.mxu0 0
  %4497 = vmatpush1.bf16.msra.mxu0 0
  %4498 = vmatprep.subr.bf16.mxu0 0
  %4499 = vmatpush1.bf16.msra.mxu0 0
  %4500 = vmatprep.subr.bf16.mxu0 0
  %4501 = vmatpush1.bf16.msra.mxu0 0
  %4502 = vmatprep.subr.bf16.mxu0 0
  %4503 = vmatpush1.bf16.msra.mxu0 0
  %4504 = vmatprep.subr.bf16.mxu0 0
  %4505 = vmatpush1.bf16.msra.mxu0 0
  %4506 = vmatprep.subr.bf16.mxu0 0
  %4507 = vmatpush1.bf16.msra.mxu0 0
  %4508 = vmatprep.subr.bf16.mxu0 0
  %4509 = vmatpush1.bf16.msra.mxu0 0
  %4510 = vmatprep.mubr.bf16.mxu0 0
  %4511 = vmatmul.mubr.bf16.gmra.mrb[0].mxu0 %v4384
  %v4512 = vpop.f32.mrb[0].mxu0
  %v4513 = vadd.f32 0.0, %v4512
  %v4514 = vpop.f32.mrb[0].mxu0
  %v4515 = vpop.f32.mrb[0].mxu0
  %v4516 = vpop.f32.mrb[0].mxu0
  %4517 = vdwg.mxu0
  %v4519 = vand.u32 %v4368, %v4388
  %4521 = vmatprep.subr.bf16.mxu0 0
  %4522 = vmatpush1.bf16.msra.mxu0 %v4366
  %4523 = vmatprep.subr.bf16.mxu0 0
  %4524 = vmatpush1.bf16.msra.mxu0 %v4367
  %4525 = vmatprep.subr.bf16.mxu0 0
  %4526 = vmatpush1.bf16.msra.mxu0 %v4519
  %4527 = vmatprep.subr.bf16.mxu0 0
  %4528 = vmatpush1.bf16.msra.mxu0 0
  %4529 = vmatprep.subr.bf16.mxu0 0
  %4530 = vmatpush1.bf16.msra.mxu0 0
  %4531 = vmatprep.subr.bf16.mxu0 0
  %4532 = vmatpush1.bf16.msra.mxu0 0
  %4533 = vmatprep.subr.bf16.mxu0 0
  %4534 = vmatpush1.bf16.msra.mxu0 0
  %4535 = vmatprep.subr.bf16.mxu0 0
  %4536 = vmatpush1.bf16.msra.mxu0 0
  %4537 = vmatprep.subr.bf16.mxu0 0
  %4538 = vmatpush1.bf16.msra.mxu0 0
  %4539 = vmatprep.subr.bf16.mxu0 0
  %4540 = vmatpush1.bf16.msra.mxu0 0
  %4541 = vmatprep.subr.bf16.mxu0 0
  %4542 = vmatpush1.bf16.msra.mxu0 0
  %4543 = vmatprep.subr.bf16.mxu0 0
  %4544 = vmatpush1.bf16.msra.mxu0 0
  %4545 = vmatprep.subr.bf16.mxu0 0
  %4546 = vmatpush1.bf16.msra.mxu0 0
  %4547 = vmatprep.subr.bf16.mxu0 0
  %4548 = vmatpush1.bf16.msra.mxu0 0
  %4549 = vmatprep.subr.bf16.mxu0 0
  %4550 = vmatpush1.bf16.msra.mxu0 0
  %4551 = vmatprep.subr.bf16.mxu0 0
  %4552 = vmatpush1.bf16.msra.mxu0 0
  %4553 = vmatprep.mubr.bf16.mxu0 0
  %4554 = vmatmul.mubr.bf16.gmra.mrb[0].mxu0 %v4384
  %v4555 = vpop.f32.mrb[0].mxu0
  %v4556 = vadd.f32 0.0, %v4555
  %v4557 = vpop.f32.mrb[0].mxu0
  %v4558 = vpop.f32.mrb[0].mxu0
  %v4559 = vpop.f32.mrb[0].mxu0
  %4560 = vdwg.mxu0
  %v4562 = vand.u32 %v4371, %v4388
  %4564 = vmatprep.subr.bf16.mxu0 0
  %4565 = vmatpush1.bf16.msra.mxu0 %v4369
  %4566 = vmatprep.subr.bf16.mxu0 0
  %4567 = vmatpush1.bf16.msra.mxu0 %v4370
  %4568 = vmatprep.subr.bf16.mxu0 0
  %4569 = vmatpush1.bf16.msra.mxu0 %v4562
  %4570 = vmatprep.subr.bf16.mxu0 0
  %4571 = vmatpush1.bf16.msra.mxu0 0
  %4572 = vmatprep.subr.bf16.mxu0 0
  %4573 = vmatpush1.bf16.msra.mxu0 0
  %4574 = vmatprep.subr.bf16.mxu0 0
  %4575 = vmatpush1.bf16.msra.mxu0 0
  %4576 = vmatprep.subr.bf16.mxu0 0
  %4577 = vmatpush1.bf16.msra.mxu0 0
  %4578 = vmatprep.subr.bf16.mxu0 0
  %4579 = vmatpush1.bf16.msra.mxu0 0
  %4580 = vmatprep.subr.bf16.mxu0 0
  %4581 = vmatpush1.bf16.msra.mxu0 0
  %4582 = vmatprep.subr.bf16.mxu0 0
  %4583 = vmatpush1.bf16.msra.mxu0 0
  %4584 = vmatprep.subr.bf16.mxu0 0
  %4585 = vmatpush1.bf16.msra.mxu0 0
  %4586 = vmatprep.subr.bf16.mxu0 0
  %4587 = vmatpush1.bf16.msra.mxu0 0
  %4588 = vmatprep.subr.bf16.mxu0 0
  %4589 = vmatpush1.bf16.msra.mxu0 0
  %4590 = vmatprep.subr.bf16.mxu0 0
  %4591 = vmatpush1.bf16.msra.mxu0 0
  %4592 = vmatprep.subr.bf16.mxu0 0
  %4593 = vmatpush1.bf16.msra.mxu0 0
  %4594 = vmatprep.subr.bf16.mxu0 0
  %4595 = vmatpush1.bf16.msra.mxu0 0
  %4596 = vmatprep.mubr.bf16.mxu0 0
  %4597 = vmatmul.mubr.bf16.gmra.mrb[0].mxu0 %v4384
  %v4598 = vpop.f32.mrb[0].mxu0
  %v4599 = vadd.f32 0.0, %v4598
  %v4600 = vpop.f32.mrb[0].mxu0
  %v4601 = vpop.f32.mrb[0].mxu0
  %v4602 = vpop.f32.mrb[0].mxu0
  %4603 = vdwg.mxu0
  %v4605 = vand.u32 %v4374, %v4388
  %4607 = vmatprep.subr.bf16.mxu0 0
  %4608 = vmatpush1.bf16.msra.mxu0 %v4372
  %4609 = vmatprep.subr.bf16.mxu0 0
  %4610 = vmatpush1.bf16.msra.mxu0 %v4373
  %4611 = vmatprep.subr.bf16.mxu0 0
  %4612 = vmatpush1.bf16.msra.mxu0 %v4605
  %4613 = vmatprep.subr.bf16.mxu0 0
  %4614 = vmatpush1.bf16.msra.mxu0 0
  %4615 = vmatprep.subr.bf16.mxu0 0
  %4616 = vmatpush1.bf16.msra.mxu0 0
  %4617 = vmatprep.subr.bf16.mxu0 0
  %4618 = vmatpush1.bf16.msra.mxu0 0
  %4619 = vmatprep.subr.bf16.mxu0 0
  %4620 = vmatpush1.bf16.msra.mxu0 0
  %4621 = vmatprep.subr.bf16.mxu0 0
  %4622 = vmatpush1.bf16.msra.mxu0 0
  %4623 = vmatprep.subr.bf16.mxu0 0
  %4624 = vmatpush1.bf16.msra.mxu0 0
  %4625 = vmatprep.subr.bf16.mxu0 0
  %4626 = vmatpush1.bf16.msra.mxu0 0
  %4627 = vmatprep.subr.bf16.mxu0 0
  %4628 = vmatpush1.bf16.msra.mxu0 0
  %4629 = vmatprep.subr.bf16.mxu0 0
  %4630 = vmatpush1.bf16.msra.mxu0 0
  %4631 = vmatprep.subr.bf16.mxu0 0
  %4632 = vmatpush1.bf16.msra.mxu0 0
  %4633 = vmatprep.subr.bf16.mxu0 0
  %4634 = vmatpush1.bf16.msra.mxu0 0
  %4635 = vmatprep.subr.bf16.mxu0 0
  %4636 = vmatpush1.bf16.msra.mxu0 0
  %4637 = vmatprep.subr.bf16.mxu0 0
  %4638 = vmatpush1.bf16.msra.mxu0 0
  %4639 = vmatprep.mubr.bf16.mxu0 0
  %4640 = vmatmul.mubr.bf16.gmra.mrb[0].mxu0 %v4384
  %v4641 = vpop.f32.mrb[0].mxu0
  %v4642 = vadd.f32 0.0, %v4641
  %v4643 = vpop.f32.mrb[0].mxu0
  %v4644 = vpop.f32.mrb[0].mxu0
  %v4645 = vpop.f32.mrb[0].mxu0
  %4646 = vdwg.mxu0
  %v4648 = vand.u32 %v4377, %v4388
  %4650 = vmatprep.subr.bf16.mxu0 0
  %4651 = vmatpush1.bf16.msra.mxu0 %v4375
  %4652 = vmatprep.subr.bf16.mxu0 0
  %4653 = vmatpush1.bf16.msra.mxu0 %v4376
  %4654 = vmatprep.subr.bf16.mxu0 0
  %4655 = vmatpush1.bf16.msra.mxu0 %v4648
  %4656 = vmatprep.subr.bf16.mxu0 0
  %4657 = vmatpush1.bf16.msra.mxu0 0
  %4658 = vmatprep.subr.bf16.mxu0 0
  %4659 = vmatpush1.bf16.msra.mxu0 0
  %4660 = vmatprep.subr.bf16.mxu0 0
  %4661 = vmatpush1.bf16.msra.mxu0 0
  %4662 = vmatprep.subr.bf16.mxu0 0
  %4663 = vmatpush1.bf16.msra.mxu0 0
  %4664 = vmatprep.subr.bf16.mxu0 0
  %4665 = vmatpush1.bf16.msra.mxu0 0
  %4666 = vmatprep.subr.bf16.mxu0 0
  %4667 = vmatpush1.bf16.msra.mxu0 0
  %4668 = vmatprep.subr.bf16.mxu0 0
  %4669 = vmatpush1.bf16.msra.mxu0 0
  %4670 = vmatprep.subr.bf16.mxu0 0
  %4671 = vmatpush1.bf16.msra.mxu0 0
  %4672 = vmatprep.subr.bf16.mxu0 0
  %4673 = vmatpush1.bf16.msra.mxu0 0
  %4674 = vmatprep.subr.bf16.mxu0 0
  %4675 = vmatpush1.bf16.msra.mxu0 0
  %4676 = vmatprep.subr.bf16.mxu0 0
  %4677 = vmatpush1.bf16.msra.mxu0 0
  %4678 = vmatprep.subr.bf16.mxu0 0
  %4679 = vmatpush1.bf16.msra.mxu0 0
  %4680 = vmatprep.subr.bf16.mxu0 0
  %4681 = vmatpush1.bf16.msra.mxu0 0
  %4682 = vmatprep.mubr.bf16.mxu0 0
  %4683 = vmatmul.mubr.bf16.gmra.mrb[0].mxu0 %v4384
  %v4684 = vpop.f32.mrb[0].mxu0
  %v4685 = vadd.f32 0.0, %v4684
  %v4686 = vpop.f32.mrb[0].mxu0
  %v4687 = vpop.f32.mrb[0].mxu0
  %v4688 = vpop.f32.mrb[0].mxu0
  %4689 = vdwg.mxu0
  %v4691 = vand.u32 %v4380, %v4388
  %4693 = vmatprep.subr.bf16.mxu0 0
  %4694 = vmatpush1.bf16.msra.mxu0 %v4378
  %4695 = vmatprep.subr.bf16.mxu0 0
  %4696 = vmatpush1.bf16.msra.mxu0 %v4379
  %4697 = vmatprep.subr.bf16.mxu0 0
  %4698 = vmatpush1.bf16.msra.mxu0 %v4691
  %4699 = vmatprep.subr.bf16.mxu0 0
  %4700 = vmatpush1.bf16.msra.mxu0 0
  %4701 = vmatprep.subr.bf16.mxu0 0
  %4702 = vmatpush1.bf16.msra.mxu0 0
  %4703 = vmatprep.subr.bf16.mxu0 0
  %4704 = vmatpush1.bf16.msra.mxu0 0
  %4705 = vmatprep.subr.bf16.mxu0 0
  %4706 = vmatpush1.bf16.msra.mxu0 0
  %4707 = vmatprep.subr.bf16.mxu0 0
  %4708 = vmatpush1.bf16.msra.mxu0 0
  %4709 = vmatprep.subr.bf16.mxu0 0
  %4710 = vmatpush1.bf16.msra.mxu0 0
  %4711 = vmatprep.subr.bf16.mxu0 0
  %4712 = vmatpush1.bf16.msra.mxu0 0
  %4713 = vmatprep.subr.bf16.mxu0 0
  %4714 = vmatpush1.bf16.msra.mxu0 0
  %4715 = vmatprep.subr.bf16.mxu0 0
  %4716 = vmatpush1.bf16.msra.mxu0 0
  %4717 = vmatprep.subr.bf16.mxu0 0
  %4718 = vmatpush1.bf16.msra.mxu0 0
  %4719 = vmatprep.subr.bf16.mxu0 0
  %4720 = vmatpush1.bf16.msra.mxu0 0
  %4721 = vmatprep.subr.bf16.mxu0 0
  %4722 = vmatpush1.bf16.msra.mxu0 0
  %4723 = vmatprep.subr.bf16.mxu0 0
  %4724 = vmatpush1.bf16.msra.mxu0 0
  %4725 = vmatprep.mubr.bf16.mxu0 0
  %4726 = vmatmul.mubr.bf16.gmra.mrb[0].mxu0 %v4384
  %v4727 = vpop.f32.mrb[0].mxu0
  %v4728 = vadd.f32 0.0, %v4727
  %v4729 = vpop.f32.mrb[0].mxu0
  %v4730 = vpop.f32.mrb[0].mxu0
  %v4731 = vpop.f32.mrb[0].mxu0
  %4732 = vdwg.mxu0
  %v4733 = vmul.f32 %v4427, %v4427
  %v4734 = vmul.f32 %v4470, %v4470
  %v4735 = vmul.f32 %v4513, %v4513
  %v4736 = vmul.f32 %v4556, %v4556
  %v4737 = vmul.f32 %v4599, %v4599
  %v4738 = vmul.f32 %v4642, %v4642
  %v4739 = vmul.f32 %v4685, %v4685
  %v4740 = vmul.f32 %v4728, %v4728
  %vm4741 = vcmask 520192
  %v4742 = vsel %vm4741, %v4733, 0.0
  %4743 = vadd.xlane.f32.xlu0 %v4742
  %v4744 = vpop.xlane.xlu0 %4743
  %v4745 = vsel %vm4741, %v4734, 0.0
  %4746 = vadd.xlane.f32.xlu0 %v4745
  %v4747 = vpop.xlane.xlu0 %4746
  %v4748 = vsel %vm4741, %v4735, 0.0
  %4749 = vadd.xlane.f32.xlu0 %v4748
  %v4750 = vpop.xlane.xlu0 %4749
  %v4751 = vsel %vm4741, %v4736, 0.0
  %4752 = vadd.xlane.f32.xlu0 %v4751
  %v4753 = vpop.xlane.xlu0 %4752
  %v4754 = vsel %vm4741, %v4737, 0.0
  %4755 = vadd.xlane.f32.xlu0 %v4754
  %v4756 = vpop.xlane.xlu0 %4755
  %v4757 = vsel %vm4741, %v4738, 0.0
  %4758 = vadd.xlane.f32.xlu0 %v4757
  %v4759 = vpop.xlane.xlu0 %4758
  %v4760 = vsel %vm4741, %v4739, 0.0
  %4761 = vadd.xlane.f32.xlu0 %v4760
  %v4762 = vpop.xlane.xlu0 %4761
  %v4763 = vsel %vm4741, %v4740, 0.0
  %4764 = vadd.xlane.f32.xlu0 %v4763
  %v4765 = vpop.xlane.xlu0 %4764
  %v4766 = vmax.f32 %v4744, 1e-24
  %v4767 = vmax.f32 %v4747, 1e-24
  %v4768 = vmax.f32 %v4750, 1e-24
  %v4769 = vmax.f32 %v4753, 1e-24
  %v4770 = vmax.f32 %v4756, 1e-24
  %v4771 = vmax.f32 %v4759, 1e-24
  %v4772 = vmax.f32 %v4762, 1e-24
  %v4773 = vmax.f32 %v4765, 1e-24
  %v4774 = vrsqrt.pop %v4766
  %v4775 = vrsqrt.pop %v4767
  %v4776 = vrsqrt.pop %v4768
  %v4777 = vrsqrt.pop %v4769
  %v4778 = vrsqrt.pop %v4770
  %v4779 = vrsqrt.pop %v4771
  %v4780 = vrsqrt.pop %v4772
  %v4781 = vrsqrt.pop %v4773
  %v4782 = vpack.c.bf16 %v4427, %v4427
  %v4783 = vpack.c.bf16 %v4470, %v4470
  %v4784 = vpack.c.bf16 %v4513, %v4513
  %v4785 = vpack.c.bf16 %v4556, %v4556
  %v4786 = vpack.c.bf16 %v4599, %v4599
  %v4787 = vpack.c.bf16 %v4642, %v4642
  %v4788 = vpack.c.bf16 %v4685, %v4685
  %v4789 = vpack.c.bf16 %v4728, %v4728
  %v4791 = vsel %vm153, %v4782, 0
  %v4794 = vsel %vm153, %v4357, 0
  %v4797 = vsel %vm153, %v4358, 0
  %v4799 = vsel %vm153, %v4359, 0
  %4801 = vmatprep.subr.bf16.mxu0 0
  %4802 = vmatpush1.bf16.xpose.msra.mxu0 %v4794
  %4803 = vmatprep.subr.bf16.mxu0 0
  %4804 = vmatpush1.bf16.xpose.msra.mxu0 %v4797
  %4805 = vmatprep.subr.bf16.mxu0 0
  %4806 = vmatpush1.bf16.xpose.msra.mxu0 %v4799
  %4807 = vmatprep.subr.bf16.mxu0 0
  %4808 = vmatpush1.bf16.xpose.msra.mxu0 0
  %4809 = vmatprep.subr.bf16.mxu0 0
  %4810 = vmatpush1.bf16.xpose.msra.mxu0 0
  %4811 = vmatprep.subr.bf16.mxu0 0
  %4812 = vmatpush1.bf16.xpose.msra.mxu0 0
  %4813 = vmatprep.subr.bf16.mxu0 0
  %4814 = vmatpush1.bf16.xpose.msra.mxu0 0
  %4815 = vmatprep.subr.bf16.mxu0 0
  %4816 = vmatpush1.bf16.xpose.msra.mxu0 0
  %4817 = vmatprep.subr.bf16.mxu0 0
  %4818 = vmatpush1.bf16.xpose.msra.mxu0 0
  %4819 = vmatprep.subr.bf16.mxu0 0
  %4820 = vmatpush1.bf16.xpose.msra.mxu0 0
  %4821 = vmatprep.subr.bf16.mxu0 0
  %4822 = vmatpush1.bf16.xpose.msra.mxu0 0
  %4823 = vmatprep.subr.bf16.mxu0 0
  %4824 = vmatpush1.bf16.xpose.msra.mxu0 0
  %4825 = vmatprep.subr.bf16.mxu0 0
  %4826 = vmatpush1.bf16.xpose.msra.mxu0 0
  %4827 = vmatprep.subr.bf16.mxu0 0
  %4828 = vmatpush1.bf16.xpose.msra.mxu0 0
  %4829 = vmatprep.subr.bf16.mxu0 0
  %4830 = vmatpush1.bf16.xpose.msra.mxu0 0
  %4831 = vmatprep.subr.bf16.mxu0 0
  %4832 = vmatpush1.bf16.xpose.msra.mxu0 0
  %4833 = vmatprep.mubr.bf16.mxu0 0
  %4834 = vmatmul.mubr.bf16.gmra.mrb[0].mxu0 %v4791
  %v4835 = vpop.f32.mrb[0].mxu0
  %v4836 = vadd.f32 0.0, %v4835
  %v4837 = vpop.f32.mrb[0].mxu0
  %v4838 = vpop.f32.mrb[0].mxu0
  %v4839 = vpop.f32.mrb[0].mxu0
  %4840 = vdwg.mxu0
  %v4842 = vsel %vm153, %v4783, 0
  %v4845 = vsel %vm153, %v4360, 0
  %v4848 = vsel %vm153, %v4361, 0
  %v4850 = vsel %vm153, %v4362, 0
  %4852 = vmatprep.subr.bf16.mxu0 0
  %4853 = vmatpush1.bf16.xpose.msra.mxu0 %v4845
  %4854 = vmatprep.subr.bf16.mxu0 0
  %4855 = vmatpush1.bf16.xpose.msra.mxu0 %v4848
  %4856 = vmatprep.subr.bf16.mxu0 0
  %4857 = vmatpush1.bf16.xpose.msra.mxu0 %v4850
  %4858 = vmatprep.subr.bf16.mxu0 0
  %4859 = vmatpush1.bf16.xpose.msra.mxu0 0
  %4860 = vmatprep.subr.bf16.mxu0 0
  %4861 = vmatpush1.bf16.xpose.msra.mxu0 0
  %4862 = vmatprep.subr.bf16.mxu0 0
  %4863 = vmatpush1.bf16.xpose.msra.mxu0 0
  %4864 = vmatprep.subr.bf16.mxu0 0
  %4865 = vmatpush1.bf16.xpose.msra.mxu0 0
  %4866 = vmatprep.subr.bf16.mxu0 0
  %4867 = vmatpush1.bf16.xpose.msra.mxu0 0
  %4868 = vmatprep.subr.bf16.mxu0 0
  %4869 = vmatpush1.bf16.xpose.msra.mxu0 0
  %4870 = vmatprep.subr.bf16.mxu0 0
  %4871 = vmatpush1.bf16.xpose.msra.mxu0 0
  %4872 = vmatprep.subr.bf16.mxu0 0
  %4873 = vmatpush1.bf16.xpose.msra.mxu0 0
  %4874 = vmatprep.subr.bf16.mxu0 0
  %4875 = vmatpush1.bf16.xpose.msra.mxu0 0
  %4876 = vmatprep.subr.bf16.mxu0 0
  %4877 = vmatpush1.bf16.xpose.msra.mxu0 0
  %4878 = vmatprep.subr.bf16.mxu0 0
  %4879 = vmatpush1.bf16.xpose.msra.mxu0 0
  %4880 = vmatprep.subr.bf16.mxu0 0
  %4881 = vmatpush1.bf16.xpose.msra.mxu0 0
  %4882 = vmatprep.subr.bf16.mxu0 0
  %4883 = vmatpush1.bf16.xpose.msra.mxu0 0
  %4884 = vmatprep.mubr.bf16.mxu0 0
  %4885 = vmatmul.mubr.bf16.gmra.mrb[0].mxu0 %v4842
  %v4886 = vpop.f32.mrb[0].mxu0
  %v4887 = vadd.f32 0.0, %v4886
  %v4888 = vpop.f32.mrb[0].mxu0
  %v4889 = vpop.f32.mrb[0].mxu0
  %v4890 = vpop.f32.mrb[0].mxu0
  %4891 = vdwg.mxu0
  %v4893 = vsel %vm153, %v4784, 0
  %v4896 = vsel %vm153, %v4363, 0
  %v4899 = vsel %vm153, %v4364, 0
  %v4901 = vsel %vm153, %v4365, 0
  %4903 = vmatprep.subr.bf16.mxu0 0
  %4904 = vmatpush1.bf16.xpose.msra.mxu0 %v4896
  %4905 = vmatprep.subr.bf16.mxu0 0
  %4906 = vmatpush1.bf16.xpose.msra.mxu0 %v4899
  %4907 = vmatprep.subr.bf16.mxu0 0
  %4908 = vmatpush1.bf16.xpose.msra.mxu0 %v4901
  %4909 = vmatprep.subr.bf16.mxu0 0
  %4910 = vmatpush1.bf16.xpose.msra.mxu0 0
  %4911 = vmatprep.subr.bf16.mxu0 0
  %4912 = vmatpush1.bf16.xpose.msra.mxu0 0
  %4913 = vmatprep.subr.bf16.mxu0 0
  %4914 = vmatpush1.bf16.xpose.msra.mxu0 0
  %4915 = vmatprep.subr.bf16.mxu0 0
  %4916 = vmatpush1.bf16.xpose.msra.mxu0 0
  %4917 = vmatprep.subr.bf16.mxu0 0
  %4918 = vmatpush1.bf16.xpose.msra.mxu0 0
  %4919 = vmatprep.subr.bf16.mxu0 0
  %4920 = vmatpush1.bf16.xpose.msra.mxu0 0
  %4921 = vmatprep.subr.bf16.mxu0 0
  %4922 = vmatpush1.bf16.xpose.msra.mxu0 0
  %4923 = vmatprep.subr.bf16.mxu0 0
  %4924 = vmatpush1.bf16.xpose.msra.mxu0 0
  %4925 = vmatprep.subr.bf16.mxu0 0
  %4926 = vmatpush1.bf16.xpose.msra.mxu0 0
  %4927 = vmatprep.subr.bf16.mxu0 0
  %4928 = vmatpush1.bf16.xpose.msra.mxu0 0
  %4929 = vmatprep.subr.bf16.mxu0 0
  %4930 = vmatpush1.bf16.xpose.msra.mxu0 0
  %4931 = vmatprep.subr.bf16.mxu0 0
  %4932 = vmatpush1.bf16.xpose.msra.mxu0 0
  %4933 = vmatprep.subr.bf16.mxu0 0
  %4934 = vmatpush1.bf16.xpose.msra.mxu0 0
  %4935 = vmatprep.mubr.bf16.mxu0 0
  %4936 = vmatmul.mubr.bf16.gmra.mrb[0].mxu0 %v4893
  %v4937 = vpop.f32.mrb[0].mxu0
  %v4938 = vadd.f32 0.0, %v4937
  %v4939 = vpop.f32.mrb[0].mxu0
  %v4940 = vpop.f32.mrb[0].mxu0
  %v4941 = vpop.f32.mrb[0].mxu0
  %4942 = vdwg.mxu0
  %v4944 = vsel %vm153, %v4785, 0
  %v4947 = vsel %vm153, %v4366, 0
  %v4950 = vsel %vm153, %v4367, 0
  %v4952 = vsel %vm153, %v4368, 0
  %4954 = vmatprep.subr.bf16.mxu0 0
  %4955 = vmatpush1.bf16.xpose.msra.mxu0 %v4947
  %4956 = vmatprep.subr.bf16.mxu0 0
  %4957 = vmatpush1.bf16.xpose.msra.mxu0 %v4950
  %4958 = vmatprep.subr.bf16.mxu0 0
  %4959 = vmatpush1.bf16.xpose.msra.mxu0 %v4952
  %4960 = vmatprep.subr.bf16.mxu0 0
  %4961 = vmatpush1.bf16.xpose.msra.mxu0 0
  %4962 = vmatprep.subr.bf16.mxu0 0
  %4963 = vmatpush1.bf16.xpose.msra.mxu0 0
  %4964 = vmatprep.subr.bf16.mxu0 0
  %4965 = vmatpush1.bf16.xpose.msra.mxu0 0
  %4966 = vmatprep.subr.bf16.mxu0 0
  %4967 = vmatpush1.bf16.xpose.msra.mxu0 0
  %4968 = vmatprep.subr.bf16.mxu0 0
  %4969 = vmatpush1.bf16.xpose.msra.mxu0 0
  %4970 = vmatprep.subr.bf16.mxu0 0
  %4971 = vmatpush1.bf16.xpose.msra.mxu0 0
  %4972 = vmatprep.subr.bf16.mxu0 0
  %4973 = vmatpush1.bf16.xpose.msra.mxu0 0
  %4974 = vmatprep.subr.bf16.mxu0 0
  %4975 = vmatpush1.bf16.xpose.msra.mxu0 0
  %4976 = vmatprep.subr.bf16.mxu0 0
  %4977 = vmatpush1.bf16.xpose.msra.mxu0 0
  %4978 = vmatprep.subr.bf16.mxu0 0
  %4979 = vmatpush1.bf16.xpose.msra.mxu0 0
  %4980 = vmatprep.subr.bf16.mxu0 0
  %4981 = vmatpush1.bf16.xpose.msra.mxu0 0
  %4982 = vmatprep.subr.bf16.mxu0 0
  %4983 = vmatpush1.bf16.xpose.msra.mxu0 0
  %4984 = vmatprep.subr.bf16.mxu0 0
  %4985 = vmatpush1.bf16.xpose.msra.mxu0 0
  %4986 = vmatprep.mubr.bf16.mxu0 0
  %4987 = vmatmul.mubr.bf16.gmra.mrb[0].mxu0 %v4944
  %v4988 = vpop.f32.mrb[0].mxu0
  %v4989 = vadd.f32 0.0, %v4988
  %v4990 = vpop.f32.mrb[0].mxu0
  %v4991 = vpop.f32.mrb[0].mxu0
  %v4992 = vpop.f32.mrb[0].mxu0
  %4993 = vdwg.mxu0
  %v4995 = vsel %vm153, %v4786, 0
  %v4998 = vsel %vm153, %v4369, 0
  %v5001 = vsel %vm153, %v4370, 0
  %v5003 = vsel %vm153, %v4371, 0
  %5005 = vmatprep.subr.bf16.mxu0 0
  %5006 = vmatpush1.bf16.xpose.msra.mxu0 %v4998
  %5007 = vmatprep.subr.bf16.mxu0 0
  %5008 = vmatpush1.bf16.xpose.msra.mxu0 %v5001
  %5009 = vmatprep.subr.bf16.mxu0 0
  %5010 = vmatpush1.bf16.xpose.msra.mxu0 %v5003
  %5011 = vmatprep.subr.bf16.mxu0 0
  %5012 = vmatpush1.bf16.xpose.msra.mxu0 0
  %5013 = vmatprep.subr.bf16.mxu0 0
  %5014 = vmatpush1.bf16.xpose.msra.mxu0 0
  %5015 = vmatprep.subr.bf16.mxu0 0
  %5016 = vmatpush1.bf16.xpose.msra.mxu0 0
  %5017 = vmatprep.subr.bf16.mxu0 0
  %5018 = vmatpush1.bf16.xpose.msra.mxu0 0
  %5019 = vmatprep.subr.bf16.mxu0 0
  %5020 = vmatpush1.bf16.xpose.msra.mxu0 0
  %5021 = vmatprep.subr.bf16.mxu0 0
  %5022 = vmatpush1.bf16.xpose.msra.mxu0 0
  %5023 = vmatprep.subr.bf16.mxu0 0
  %5024 = vmatpush1.bf16.xpose.msra.mxu0 0
  %5025 = vmatprep.subr.bf16.mxu0 0
  %5026 = vmatpush1.bf16.xpose.msra.mxu0 0
  %5027 = vmatprep.subr.bf16.mxu0 0
  %5028 = vmatpush1.bf16.xpose.msra.mxu0 0
  %5029 = vmatprep.subr.bf16.mxu0 0
  %5030 = vmatpush1.bf16.xpose.msra.mxu0 0
  %5031 = vmatprep.subr.bf16.mxu0 0
  %5032 = vmatpush1.bf16.xpose.msra.mxu0 0
  %5033 = vmatprep.subr.bf16.mxu0 0
  %5034 = vmatpush1.bf16.xpose.msra.mxu0 0
  %5035 = vmatprep.subr.bf16.mxu0 0
  %5036 = vmatpush1.bf16.xpose.msra.mxu0 0
  %5037 = vmatprep.mubr.bf16.mxu0 0
  %5038 = vmatmul.mubr.bf16.gmra.mrb[0].mxu0 %v4995
  %v5039 = vpop.f32.mrb[0].mxu0
  %v5040 = vadd.f32 0.0, %v5039
  %v5041 = vpop.f32.mrb[0].mxu0
  %v5042 = vpop.f32.mrb[0].mxu0
  %v5043 = vpop.f32.mrb[0].mxu0
  %5044 = vdwg.mxu0
  %v5046 = vsel %vm153, %v4787, 0
  %v5049 = vsel %vm153, %v4372, 0
  %v5052 = vsel %vm153, %v4373, 0
  %v5054 = vsel %vm153, %v4374, 0
  %5056 = vmatprep.subr.bf16.mxu0 0
  %5057 = vmatpush1.bf16.xpose.msra.mxu0 %v5049
  %5058 = vmatprep.subr.bf16.mxu0 0
  %5059 = vmatpush1.bf16.xpose.msra.mxu0 %v5052
  %5060 = vmatprep.subr.bf16.mxu0 0
  %5061 = vmatpush1.bf16.xpose.msra.mxu0 %v5054
  %5062 = vmatprep.subr.bf16.mxu0 0
  %5063 = vmatpush1.bf16.xpose.msra.mxu0 0
  %5064 = vmatprep.subr.bf16.mxu0 0
  %5065 = vmatpush1.bf16.xpose.msra.mxu0 0
  %5066 = vmatprep.subr.bf16.mxu0 0
  %5067 = vmatpush1.bf16.xpose.msra.mxu0 0
  %5068 = vmatprep.subr.bf16.mxu0 0
  %5069 = vmatpush1.bf16.xpose.msra.mxu0 0
  %5070 = vmatprep.subr.bf16.mxu0 0
  %5071 = vmatpush1.bf16.xpose.msra.mxu0 0
  %5072 = vmatprep.subr.bf16.mxu0 0
  %5073 = vmatpush1.bf16.xpose.msra.mxu0 0
  %5074 = vmatprep.subr.bf16.mxu0 0
  %5075 = vmatpush1.bf16.xpose.msra.mxu0 0
  %5076 = vmatprep.subr.bf16.mxu0 0
  %5077 = vmatpush1.bf16.xpose.msra.mxu0 0
  %5078 = vmatprep.subr.bf16.mxu0 0
  %5079 = vmatpush1.bf16.xpose.msra.mxu0 0
  %5080 = vmatprep.subr.bf16.mxu0 0
  %5081 = vmatpush1.bf16.xpose.msra.mxu0 0
  %5082 = vmatprep.subr.bf16.mxu0 0
  %5083 = vmatpush1.bf16.xpose.msra.mxu0 0
  %5084 = vmatprep.subr.bf16.mxu0 0
  %5085 = vmatpush1.bf16.xpose.msra.mxu0 0
  %5086 = vmatprep.subr.bf16.mxu0 0
  %5087 = vmatpush1.bf16.xpose.msra.mxu0 0
  %5088 = vmatprep.mubr.bf16.mxu0 0
  %5089 = vmatmul.mubr.bf16.gmra.mrb[0].mxu0 %v5046
  %v5090 = vpop.f32.mrb[0].mxu0
  %v5091 = vadd.f32 0.0, %v5090
  %v5092 = vpop.f32.mrb[0].mxu0
  %v5093 = vpop.f32.mrb[0].mxu0
  %v5094 = vpop.f32.mrb[0].mxu0
  %5095 = vdwg.mxu0
  %v5097 = vsel %vm153, %v4788, 0
  %v5100 = vsel %vm153, %v4375, 0
  %v5103 = vsel %vm153, %v4376, 0
  %v5105 = vsel %vm153, %v4377, 0
  %5107 = vmatprep.subr.bf16.mxu0 0
  %5108 = vmatpush1.bf16.xpose.msra.mxu0 %v5100
  %5109 = vmatprep.subr.bf16.mxu0 0
  %5110 = vmatpush1.bf16.xpose.msra.mxu0 %v5103
  %5111 = vmatprep.subr.bf16.mxu0 0
  %5112 = vmatpush1.bf16.xpose.msra.mxu0 %v5105
  %5113 = vmatprep.subr.bf16.mxu0 0
  %5114 = vmatpush1.bf16.xpose.msra.mxu0 0
  %5115 = vmatprep.subr.bf16.mxu0 0
  %5116 = vmatpush1.bf16.xpose.msra.mxu0 0
  %5117 = vmatprep.subr.bf16.mxu0 0
  %5118 = vmatpush1.bf16.xpose.msra.mxu0 0
  %5119 = vmatprep.subr.bf16.mxu0 0
  %5120 = vmatpush1.bf16.xpose.msra.mxu0 0
  %5121 = vmatprep.subr.bf16.mxu0 0
  %5122 = vmatpush1.bf16.xpose.msra.mxu0 0
  %5123 = vmatprep.subr.bf16.mxu0 0
  %5124 = vmatpush1.bf16.xpose.msra.mxu0 0
  %5125 = vmatprep.subr.bf16.mxu0 0
  %5126 = vmatpush1.bf16.xpose.msra.mxu0 0
  %5127 = vmatprep.subr.bf16.mxu0 0
  %5128 = vmatpush1.bf16.xpose.msra.mxu0 0
  %5129 = vmatprep.subr.bf16.mxu0 0
  %5130 = vmatpush1.bf16.xpose.msra.mxu0 0
  %5131 = vmatprep.subr.bf16.mxu0 0
  %5132 = vmatpush1.bf16.xpose.msra.mxu0 0
  %5133 = vmatprep.subr.bf16.mxu0 0
  %5134 = vmatpush1.bf16.xpose.msra.mxu0 0
  %5135 = vmatprep.subr.bf16.mxu0 0
  %5136 = vmatpush1.bf16.xpose.msra.mxu0 0
  %5137 = vmatprep.subr.bf16.mxu0 0
  %5138 = vmatpush1.bf16.xpose.msra.mxu0 0
  %5139 = vmatprep.mubr.bf16.mxu0 0
  %5140 = vmatmul.mubr.bf16.gmra.mrb[0].mxu0 %v5097
  %v5141 = vpop.f32.mrb[0].mxu0
  %v5142 = vadd.f32 0.0, %v5141
  %v5143 = vpop.f32.mrb[0].mxu0
  %v5144 = vpop.f32.mrb[0].mxu0
  %v5145 = vpop.f32.mrb[0].mxu0
  %5146 = vdwg.mxu0
  %v5148 = vsel %vm153, %v4789, 0
  %v5151 = vsel %vm153, %v4378, 0
  %v5154 = vsel %vm153, %v4379, 0
  %v5156 = vsel %vm153, %v4380, 0
  %5158 = vmatprep.subr.bf16.mxu0 0
  %5159 = vmatpush1.bf16.xpose.msra.mxu0 %v5151
  %5160 = vmatprep.subr.bf16.mxu0 0
  %5161 = vmatpush1.bf16.xpose.msra.mxu0 %v5154
  %5162 = vmatprep.subr.bf16.mxu0 0
  %5163 = vmatpush1.bf16.xpose.msra.mxu0 %v5156
  %5164 = vmatprep.subr.bf16.mxu0 0
  %5165 = vmatpush1.bf16.xpose.msra.mxu0 0
  %5166 = vmatprep.subr.bf16.mxu0 0
  %5167 = vmatpush1.bf16.xpose.msra.mxu0 0
  %5168 = vmatprep.subr.bf16.mxu0 0
  %5169 = vmatpush1.bf16.xpose.msra.mxu0 0
  %5170 = vmatprep.subr.bf16.mxu0 0
  %5171 = vmatpush1.bf16.xpose.msra.mxu0 0
  %5172 = vmatprep.subr.bf16.mxu0 0
  %5173 = vmatpush1.bf16.xpose.msra.mxu0 0
  %5174 = vmatprep.subr.bf16.mxu0 0
  %5175 = vmatpush1.bf16.xpose.msra.mxu0 0
  %5176 = vmatprep.subr.bf16.mxu0 0
  %5177 = vmatpush1.bf16.xpose.msra.mxu0 0
  %5178 = vmatprep.subr.bf16.mxu0 0
  %5179 = vmatpush1.bf16.xpose.msra.mxu0 0
  %5180 = vmatprep.subr.bf16.mxu0 0
  %5181 = vmatpush1.bf16.xpose.msra.mxu0 0
  %5182 = vmatprep.subr.bf16.mxu0 0
  %5183 = vmatpush1.bf16.xpose.msra.mxu0 0
  %5184 = vmatprep.subr.bf16.mxu0 0
  %5185 = vmatpush1.bf16.xpose.msra.mxu0 0
  %5186 = vmatprep.subr.bf16.mxu0 0
  %5187 = vmatpush1.bf16.xpose.msra.mxu0 0
  %5188 = vmatprep.subr.bf16.mxu0 0
  %5189 = vmatpush1.bf16.xpose.msra.mxu0 0
  %5190 = vmatprep.mubr.bf16.mxu0 0
  %5191 = vmatmul.mubr.bf16.gmra.mrb[0].mxu0 %v5148
  %v5192 = vpop.f32.mrb[0].mxu0
  %v5193 = vadd.f32 0.0, %v5192
  %v5194 = vpop.f32.mrb[0].mxu0
  %v5195 = vpop.f32.mrb[0].mxu0
  %v5196 = vpop.f32.mrb[0].mxu0
  %5197 = vdwg.mxu0
  %v5198 = vmul.f32 %v4836, %v4774
  %v5199 = vmul.f32 %v4887, %v4775
  %v5200 = vmul.f32 %v4938, %v4776
  %v5201 = vmul.f32 %v4989, %v4777
  %v5202 = vmul.f32 %v5040, %v4778
  %v5203 = vmul.f32 %v5091, %v4779
  %v5204 = vmul.f32 %v5142, %v4780
  %v5205 = vmul.f32 %v5193, %v4781
  %v5246 = vlaneseq
  %v5247 = vand.u32 %v5246, 127
  %v5248 = vlaneseq
  %v5249 = vshrl.u32 %v5248, 7
  %v5250 = vsub.s32 %v5247, %v5249
  %v5251 = vrot.slane %v4317, %v5250
  %v5252 = vadd.s32 %v5247, 4294967288
  %v5253 = vlaneseq
  %v5254 = vshrl.u32 %v5253, 7
  %v5255 = vsub.s32 %v5252, %v5254
  %v5256 = vrot.slane %v4318, %v5255
  %vm5257 = vcmask 130112
  %v5258 = vsel %vm5257, %v5256, %v5251
  %v5259 = vadd.s32 %v5247, 4294967280
  %v5260 = vlaneseq
  %v5261 = vshrl.u32 %v5260, 7
  %v5262 = vsub.s32 %v5259, %v5261
  %v5263 = vrot.slane %v4319, %v5262
  %vm5264 = vcmask 195712
  %v5265 = vsel %vm5264, %v5263, %v5258
  %v5266 = vadd.s32 %v5247, 4294967272
  %v5267 = vlaneseq
  %v5268 = vshrl.u32 %v5267, 7
  %v5269 = vsub.s32 %v5266, %v5268
  %v5270 = vrot.slane %v4320, %v5269
  %vm5271 = vcmask 261312
  %v5272 = vsel %vm5271, %v5270, %v5265
  %v5273 = vadd.s32 %v5247, 4294967264
  %v5274 = vlaneseq
  %v5275 = vshrl.u32 %v5274, 7
  %v5276 = vsub.s32 %v5273, %v5275
  %v5277 = vrot.slane %v4321, %v5276
  %vm5278 = vcmask 326912
  %v5279 = vsel %vm5278, %v5277, %v5272
  %v5280 = vlaneseq
  %v5281 = vshrl.u32 %v5280, 7
  %v5282 = vsub.s32 %v5247, %v5281
  %v5283 = vrot.slane %v4322, %v5282
  %v5284 = vlaneseq
  %v5285 = vshrl.u32 %v5284, 7
  %v5286 = vsub.s32 %v5252, %v5285
  %v5287 = vrot.slane %v4323, %v5286
  %v5288 = vsel %vm5257, %v5287, %v5283
  %v5289 = vlaneseq
  %v5290 = vshrl.u32 %v5289, 7
  %v5291 = vsub.s32 %v5259, %v5290
  %v5292 = vrot.slane %v4324, %v5291
  %v5293 = vsel %vm5264, %v5292, %v5288
  %v5294 = vlaneseq
  %v5295 = vshrl.u32 %v5294, 7
  %v5296 = vsub.s32 %v5266, %v5295
  %v5297 = vrot.slane %v4325, %v5296
  %v5298 = vsel %vm5271, %v5297, %v5293
  %v5299 = vlaneseq
  %v5300 = vshrl.u32 %v5299, 7
  %v5301 = vsub.s32 %v5273, %v5300
  %v5302 = vrot.slane %v4326, %v5301
  %v5303 = vsel %vm5278, %v5302, %v5298
  %v5304 = vlaneseq
  %v5305 = vshrl.u32 %v5304, 7
  %v5306 = vsub.s32 %v5247, %v5305
  %v5307 = vrot.slane %v4327, %v5306
  %v5308 = vlaneseq
  %v5309 = vshrl.u32 %v5308, 7
  %v5310 = vsub.s32 %v5252, %v5309
  %v5311 = vrot.slane %v4328, %v5310
  %v5312 = vsel %vm5257, %v5311, %v5307
  %v5313 = vlaneseq
  %v5314 = vshrl.u32 %v5313, 7
  %v5315 = vsub.s32 %v5259, %v5314
  %v5316 = vrot.slane %v4329, %v5315
  %v5317 = vsel %vm5264, %v5316, %v5312
  %v5318 = vlaneseq
  %v5319 = vshrl.u32 %v5318, 7
  %v5320 = vsub.s32 %v5266, %v5319
  %v5321 = vrot.slane %v4330, %v5320
  %v5322 = vsel %vm5271, %v5321, %v5317
  %v5323 = vlaneseq
  %v5324 = vshrl.u32 %v5323, 7
  %v5325 = vsub.s32 %v5273, %v5324
  %v5326 = vrot.slane %v4331, %v5325
  %v5327 = vsel %vm5278, %v5326, %v5322
  %v5328 = vlaneseq
  %v5329 = vshrl.u32 %v5328, 7
  %v5330 = vsub.s32 %v5247, %v5329
  %v5331 = vrot.slane %v4332, %v5330
  %v5332 = vlaneseq
  %v5333 = vshrl.u32 %v5332, 7
  %v5334 = vsub.s32 %v5252, %v5333
  %v5335 = vrot.slane %v4333, %v5334
  %v5336 = vsel %vm5257, %v5335, %v5331
  %v5337 = vlaneseq
  %v5338 = vshrl.u32 %v5337, 7
  %v5339 = vsub.s32 %v5259, %v5338
  %v5340 = vrot.slane %v4334, %v5339
  %v5341 = vsel %vm5264, %v5340, %v5336
  %v5342 = vlaneseq
  %v5343 = vshrl.u32 %v5342, 7
  %v5344 = vsub.s32 %v5266, %v5343
  %v5345 = vrot.slane %v4335, %v5344
  %v5346 = vsel %vm5271, %v5345, %v5341
  %v5347 = vlaneseq
  %v5348 = vshrl.u32 %v5347, 7
  %v5349 = vsub.s32 %v5273, %v5348
  %v5350 = vrot.slane %v4336, %v5349
  %v5351 = vsel %vm5278, %v5350, %v5346
  %v5352 = vlaneseq
  %v5353 = vshrl.u32 %v5352, 7
  %v5354 = vsub.s32 %v5247, %v5353
  %v5355 = vrot.slane %v4337, %v5354
  %v5356 = vlaneseq
  %v5357 = vshrl.u32 %v5356, 7
  %v5358 = vsub.s32 %v5252, %v5357
  %v5359 = vrot.slane %v4338, %v5358
  %v5360 = vsel %vm5257, %v5359, %v5355
  %v5361 = vlaneseq
  %v5362 = vshrl.u32 %v5361, 7
  %v5363 = vsub.s32 %v5259, %v5362
  %v5364 = vrot.slane %v4339, %v5363
  %v5365 = vsel %vm5264, %v5364, %v5360
  %v5366 = vlaneseq
  %v5367 = vshrl.u32 %v5366, 7
  %v5368 = vsub.s32 %v5266, %v5367
  %v5369 = vrot.slane %v4340, %v5368
  %v5370 = vsel %vm5271, %v5369, %v5365
  %v5371 = vlaneseq
  %v5372 = vshrl.u32 %v5371, 7
  %v5373 = vsub.s32 %v5273, %v5372
  %v5374 = vrot.slane %v4341, %v5373
  %v5375 = vsel %vm5278, %v5374, %v5370
  %v5376 = vlaneseq
  %v5377 = vshrl.u32 %v5376, 7
  %v5378 = vsub.s32 %v5247, %v5377
  %v5379 = vrot.slane %v4342, %v5378
  %v5380 = vlaneseq
  %v5381 = vshrl.u32 %v5380, 7
  %v5382 = vsub.s32 %v5252, %v5381
  %v5383 = vrot.slane %v4343, %v5382
  %v5384 = vsel %vm5257, %v5383, %v5379
  %v5385 = vlaneseq
  %v5386 = vshrl.u32 %v5385, 7
  %v5387 = vsub.s32 %v5259, %v5386
  %v5388 = vrot.slane %v4344, %v5387
  %v5389 = vsel %vm5264, %v5388, %v5384
  %v5390 = vlaneseq
  %v5391 = vshrl.u32 %v5390, 7
  %v5392 = vsub.s32 %v5266, %v5391
  %v5393 = vrot.slane %v4345, %v5392
  %v5394 = vsel %vm5271, %v5393, %v5389
  %v5395 = vlaneseq
  %v5396 = vshrl.u32 %v5395, 7
  %v5397 = vsub.s32 %v5273, %v5396
  %v5398 = vrot.slane %v4346, %v5397
  %v5399 = vsel %vm5278, %v5398, %v5394
  %v5400 = vlaneseq
  %v5401 = vshrl.u32 %v5400, 7
  %v5402 = vsub.s32 %v5247, %v5401
  %v5403 = vrot.slane %v4347, %v5402
  %v5404 = vlaneseq
  %v5405 = vshrl.u32 %v5404, 7
  %v5406 = vsub.s32 %v5252, %v5405
  %v5407 = vrot.slane %v4348, %v5406
  %v5408 = vsel %vm5257, %v5407, %v5403
  %v5409 = vlaneseq
  %v5410 = vshrl.u32 %v5409, 7
  %v5411 = vsub.s32 %v5259, %v5410
  %v5412 = vrot.slane %v4349, %v5411
  %v5413 = vsel %vm5264, %v5412, %v5408
  %v5414 = vlaneseq
  %v5415 = vshrl.u32 %v5414, 7
  %v5416 = vsub.s32 %v5266, %v5415
  %v5417 = vrot.slane %v4350, %v5416
  %v5418 = vsel %vm5271, %v5417, %v5413
  %v5419 = vlaneseq
  %v5420 = vshrl.u32 %v5419, 7
  %v5421 = vsub.s32 %v5273, %v5420
  %v5422 = vrot.slane %v4351, %v5421
  %v5423 = vsel %vm5278, %v5422, %v5418
  %v5424 = vlaneseq
  %v5425 = vshrl.u32 %v5424, 7
  %v5426 = vsub.s32 %v5247, %v5425
  %v5427 = vrot.slane %v4352, %v5426
  %v5428 = vlaneseq
  %v5429 = vshrl.u32 %v5428, 7
  %v5430 = vsub.s32 %v5252, %v5429
  %v5431 = vrot.slane %v4353, %v5430
  %v5432 = vsel %vm5257, %v5431, %v5427
  %v5433 = vlaneseq
  %v5434 = vshrl.u32 %v5433, 7
  %v5435 = vsub.s32 %v5259, %v5434
  %v5436 = vrot.slane %v4354, %v5435
  %v5437 = vsel %vm5264, %v5436, %v5432
  %v5438 = vlaneseq
  %v5439 = vshrl.u32 %v5438, 7
  %v5440 = vsub.s32 %v5266, %v5439
  %v5441 = vrot.slane %v4355, %v5440
  %v5442 = vsel %vm5271, %v5441, %v5437
  %v5443 = vlaneseq
  %v5444 = vshrl.u32 %v5443, 7
  %v5445 = vsub.s32 %v5273, %v5444
  %v5446 = vrot.slane %v4356, %v5445
  %v5447 = vsel %vm5278, %v5446, %v5442
  %vm5448 = vcmask 1042434
  %v5449 = vsel %vm5448, %v5279, %v5279
  %vm5450 = vcmask 1043459
  %v5451 = vsel %vm5450, %v5279, %v5449
  %vm5452 = vcmask 1044484
  %v5453 = vsel %vm5452, %v5279, %v5451
  %v5454 = vsel %vm5448, %v5303, %v5303
  %v5455 = vsel %vm5450, %v5303, %v5454
  %v5456 = vsel %vm5452, %v5303, %v5455
  %v5457 = vsel %vm5448, %v5327, %v5327
  %v5458 = vsel %vm5450, %v5327, %v5457
  %v5459 = vsel %vm5452, %v5327, %v5458
  %v5460 = vsel %vm5448, %v5351, %v5351
  %v5461 = vsel %vm5450, %v5351, %v5460
  %v5462 = vsel %vm5452, %v5351, %v5461
  %v5463 = vsel %vm5448, %v5375, %v5375
  %v5464 = vsel %vm5450, %v5375, %v5463
  %v5465 = vsel %vm5452, %v5375, %v5464
  %v5466 = vsel %vm5448, %v5399, %v5399
  %v5467 = vsel %vm5450, %v5399, %v5466
  %v5468 = vsel %vm5452, %v5399, %v5467
  %v5469 = vsel %vm5448, %v5423, %v5423
  %v5470 = vsel %vm5450, %v5423, %v5469
  %v5471 = vsel %vm5452, %v5423, %v5470
  %v5472 = vsel %vm5448, %v5447, %v5447
  %v5473 = vsel %vm5450, %v5447, %v5472
  %v5474 = vsel %vm5452, %v5447, %v5473
  %v5483 = vmul.f32 %v5198, %v5453
  %v5484 = vmul.f32 %v5199, %v5456
  %v5485 = vmul.f32 %v5200, %v5459
  %v5486 = vmul.f32 %v5201, %v5462
  %v5487 = vmul.f32 %v5202, %v5465
  %v5488 = vmul.f32 %v5203, %v5468
  %v5489 = vmul.f32 %v5204, %v5471
  %v5490 = vmul.f32 %v5205, %v5474
  %vm5491 = vcmask 282624
  %5492 = vst.msk [vmem:[%s6] sm:$0x1f] %vm5491, %v5483
  %5493 = vst.msk [vmem:[%s6 + $0x8] sm:$0x1f] %vm5491, %v5484
  %5494 = vst.msk [vmem:[%s6 + $0x10] sm:$0x1f] %vm5491, %v5485
  %5495 = vst.msk [vmem:[%s6 + $0x18] sm:$0x1f] %vm5491, %v5486
  %5496 = vst.msk [vmem:[%s6 + $0x20] sm:$0x1f] %vm5491, %v5487
  %5497 = vst.msk [vmem:[%s6 + $0x28] sm:$0x1f] %vm5491, %v5488
  %5498 = vst.msk [vmem:[%s6 + $0x30] sm:$0x1f] %vm5491, %v5489
  %5499 = vst.msk [vmem:[%s6 + $0x38] sm:$0x1f] %vm5491, %v5490
  // Predicated region
  $region26: #{_setfsl_loss_and_dist.1} parent=0 // pred_check
    _
  $region27: #{_setfsl_loss_and_dist.1} parent=0 // pred_check_branch
    %5501 = sbr.rel (0) target = $region29
  $region28: #{_setfsl_loss_and_dist.1} parent=0 // pred_region
    _
  $region29: #{_setfsl_loss_and_dist.1} parent=0 // pred_fallthru
    _
  // Predicated region
  $region30: #{_setfsl_loss_and_dist.1} parent=0 // pred_check
    _
  $region31: #{_setfsl_loss_and_dist.1} parent=0 // pred_check_branch
    %5503 = sbr.rel (0) target = $region33
  $region32: #{_setfsl_loss_and_dist.1} parent=0 // pred_region
    _
  $region33: #{_setfsl_loss_and_dist.1} parent=0 // pred_fallthru
    _

</llo_original>
